<compile_context>
chip_gen: v6e
topology: v6e:2x2x1
jax: 0.10.0
libtpu: 0.0.40
codegen_flags: <defaults>
</compile_context>

<pallas_src>
import functools

import jax
import jax.numpy as jnp
from jax.experimental import pallas as pl
from jax.experimental.pallas import tpu as pltpu

NEG_INF = -1e30
CLASS_PAD = 128                 # lane-dense padding of the class dimension
APPROX_RECIPROCAL = True        # False -> exact divide (validation vs PyTorch)


def _tpu_info():
    try:
        return pltpu.get_tpu_info()
    except Exception:
        return None


def _vmem_limit_bytes():
    info = _tpu_info()
    cap = getattr(info, "vmem_capacity_bytes", None) if info is not None else None
    if cap:
        return int(cap) * 3 // 4        # ~96 MiB on v5e/v6e, ~48 MiB on v7x
    return 48 * 1024 * 1024             # safe fallback (below v7x 64 MiB phys)


def _row_tile():
    # v5e MXU is 128x128 (M=128 already fills it); v6e/v7x MXUs are 256-wide,
    # so a 256-row tile fills the MXU and halves per-grid-step overhead.
    info = _tpu_info()
    if info is None:
        return 128
    tags = []
    for attr in ("chip_version", "version", "chip_name", "name", "device_kind"):
        v = getattr(info, attr, None)
        if v is not None:
            tags.append(str(v).lower())
    tag = " ".join(tags)
    if ("v5" in tag) or ("5e" in tag) or ("5p" in tag) or ("5lite" in tag):
        return 128
    return 256


_VMEM_LIMIT = _vmem_limit_bytes()
ROW_TILE = _row_tile()


def _compiler_params():
    return pltpu.CompilerParams(
        dimension_semantics=("parallel",),
        vmem_limit_bytes=_VMEM_LIMIT,
    )


def _resident_spec(block_shape, index_map, buffered):
    """BlockSpec for a grid-invariant operand (constant index_map).

    Double-buffering buys nothing when the block never changes, so request a
    single buffer to free VMEM (largest win on v7x).  Fall back to a plain
    BlockSpec on jax builds without pipeline_mode / Buffered support.
    """
    if buffered and hasattr(pl, "Buffered"):
        try:
            return pl.BlockSpec(block_shape, index_map, pipeline_mode=pl.Buffered(1))
        except TypeError:
            pass
    return pl.BlockSpec(block_shape, index_map)


# ----------------------------------------------------------------------------
# Stage 1 (per layer): node-feature transform, all on the MXU.
#   h     = x @ W                                  [T, H*F]  bf16
#   a_all = x @ W_att                              [T, 128]  f32
#           (cols 0:H = a_dst, H:2H = a_src, rest zero -> lane-dense store)
# ----------------------------------------------------------------------------
def gat_transform_kernel(x_ref, w_ref, watt_ref, h_ref, aall_ref):
    x = x_ref[...].astype(jnp.bfloat16)                               # [T, F_in]
    h = jnp.dot(x, w_ref[...], preferred_element_type=jnp.float32)    # [T, H*F]
    h_ref[...] = h.astype(h_ref.dtype)
    aall_ref[...] = jnp.dot(x, watt_ref[...],
                            preferred_element_type=jnp.float32)       # [T, 128]


# ----------------------------------------------------------------------------
# Stage 2 (per layer): attention + aggregation, tiled over destination rows.
#
# Factorized, unnormalized softmax weights (per head, negative_slope = 0.2):
#   e_ij = d_i + s_j,  f_ij = LeakyReLU(e_ij)
#   with D = max_i d_i, S = max_j s_j, M = D + S, gamma = exp(-0.8 * relu(M)):
#     e_ij > 0 :  exp(d_i - D) * exp(s_j - S)                  = exp(f_ij - C)
#     e_ij <= 0:  gamma * exp(0.2(d_i - D)) * exp(0.2(s_j - S)) = exp(f_ij - C)
#   with a single per-row constant C (= M if M >= 0 else 0.2*M; in the latter
#   case the positive branch is never selected).  C cancels in the softmax, so
#     alpha_ij = p_ij / sum_j p_ij   exactly,  with p built from 1-D exps,
#   two broadcast muls and one select -- no per-element exp, no per-row max.
#   All exp arguments are <= 0, so nothing overflows.
#
#   out_i = (p_i @ h) * 1/sum_j p_ij   (normalize AFTER aggregation, EUP recip)
#   Heads are processed in 128-lane groups -> one lane-dense [T,128] store.
# ----------------------------------------------------------------------------
def gat_attention_kernel(adj_ref, aall_ref, asrct_ref, h_ref, b_ref, out_ref,
                         *, heads, out_feats, concat, apply_relu):
    mask = adj_ref[...] > 0                              # [T, N] (bf16 compare)
    a_dst = aall_ref[:, 0:heads]                         # [T, H] f32
    a_src_t = asrct_ref[...]                             # [H, N] f32
    bias = b_ref[...]                                    # [1, out_dim]

    dmax = jnp.max(a_dst, axis=0, keepdims=True)         # [1, H]
    smax = jnp.max(a_src_t, axis=1, keepdims=True)       # [H, 1]
    pe_d = jnp.exp(a_dst - dmax)                         # [T, H]
    ne_d = jnp.exp(0.2 * (a_dst - dmax))                 # [T, H]
    pe_s = jnp.exp(a_src_t - smax)                       # [H, N]
    ne_s = jnp.exp(0.2 * (a_src_t - smax))               # [H, N]

    group = 1
    if (concat and out_feats < 128 and 128 % out_feats == 0
            and heads % (128 // out_feats) == 0):
        group = 128 // out_feats                         # 2 for F=64, 4 for F=32

    acc = None
    for g0 in range(0, heads, group):
        aggs = []
        for k in range(group):
            hh = g0 + k
            d = a_dst[:, hh:hh + 1]                                      # [T,1]
            s = a_src_t[hh:hh + 1, :]                                    # [1,N]
            m = dmax[:, hh:hh + 1] + smax[hh:hh + 1, :]                  # [1,1]
            gamma = jnp.exp(-0.8 * jnp.maximum(m, 0.0))                  # [1,1]
            pos = pe_d[:, hh:hh + 1] * pe_s[hh:hh + 1, :]                # [T,N]
            neg = (gamma * ne_d[:, hh:hh + 1]) * ne_s[hh:hh + 1, :]      # [T,N]
            p = jnp.where((d + s) > 0.0, pos, neg)
            p = jnp.where(mask, p, 0.0)                  # non-edges -> exactly 0
            denom = jnp.maximum(jnp.sum(p, axis=-1, keepdims=True), 1e-30)
            h_h = h_ref[:, hh * out_feats:(hh + 1) * out_feats]          # [N,F]
            agg = jnp.dot(p.astype(jnp.bfloat16), h_h,
                          preferred_element_type=jnp.float32)            # [T,F]
            agg = agg * pl.reciprocal(denom, approx=APPROX_RECIPROCAL)
            aggs.append(agg)
        if concat:
            lo = g0 * out_feats
            hi = (g0 + group) * out_feats
            o = aggs[0] if group == 1 else jnp.concatenate(aggs, axis=-1)
            o = o + bias[:, lo:hi]
            if apply_relu:
                o = jnp.maximum(o, 0.0)
            out_ref[:, lo:hi] = o.astype(out_ref.dtype)  # lane-dense [T,128]
        else:
            for agg in aggs:
                acc = agg if acc is None else acc + agg
    if not concat:
        o = acc * (1.0 / heads) + bias
        if apply_relu:
            o = jnp.maximum(o, 0.0)
        out_ref[...] = o.astype(out_ref.dtype)


# ----------------------------------------------------------------------------
# Skip connection (Linear) + residual add + log_softmax, fused, row-tiled.
# Class dim padded to 128 (padded columns carry a -1e30 bias -> exp == 0).
# ----------------------------------------------------------------------------
def skip_logsoftmax_kernel(x_ref, x4_ref, wskip_ref, bskip_ref, out_ref):
    z = (x4_ref[...]
         + jnp.dot(x_ref[...], wskip_ref[...],
                   preferred_element_type=jnp.float32)
         + bskip_ref[...])
    m = jnp.max(z, axis=-1, keepdims=True)
    zs = z - m
    lse = jnp.log(jnp.sum(jnp.exp(zs), axis=-1, keepdims=True))
    out_ref[...] = (zs - lse).astype(out_ref.dtype)


# ----------------------------------------------------------------------------
# Wrappers
# ----------------------------------------------------------------------------
def gat_layer(x, adj, layer, *, concat, apply_relu, out_dtype,
              resident_buffering=True):
    n_pad, f_in = x.shape
    heads = layer["heads"]
    out_feats = layer["out_feats"]
    hf = heads * out_feats
    att_pad = layer["w_att"].shape[1]
    tile = ROW_TILE
    assert n_pad % tile == 0
    grid = (n_pad // tile,)
    cparams = _compiler_params()
    res = lambda bs, im: _resident_spec(bs, im, resident_buffering)

    # Stage 1: projections (row-tiled, weights resident in VMEM).
    h, a_all = pl.pallas_call(
        gat_transform_kernel,
        grid=grid,
        in_specs=[
            pl.BlockSpec((tile, f_in), lambda i: (i, 0)),
            res((f_in, hf), lambda i: (0, 0)),
            res((f_in, att_pad), lambda i: (0, 0)),
        ],
        out_specs=[
            pl.BlockSpec((tile, hf), lambda i: (i, 0)),
            pl.BlockSpec((tile, att_pad), lambda i: (i, 0)),
        ],
        out_shape=[
            jax.ShapeDtypeStruct((n_pad, hf), jnp.bfloat16),
            jax.ShapeDtypeStruct((n_pad, att_pad), jnp.float32),
        ],
        compiler_params=cparams,
    )(x, layer["w"], layer["w_att"])

    # Tiny [n_pad, H] -> [H, n_pad] transpose kept in XLA: the per-head source
    # exps want lane-contiguous rows, and an in-kernel transpose of a 16-lane
    # slab is more restrictive in Mosaic than this H*n_pad*4-byte HLO.
    a_src_t = a_all[:, heads:2 * heads].T

    out_dim = hf if concat else out_feats
    kernel = functools.partial(gat_attention_kernel, heads=heads,
                               out_feats=out_feats, concat=concat,
                               apply_relu=apply_relu)
    return pl.pallas_call(
        kernel,
        grid=grid,
        in_specs=[
            pl.BlockSpec((tile, n_pad), lambda i: (i, 0)),    # adj row tile
            pl.BlockSpec((tile, att_pad), lambda i: (i, 0)),  # a_all row tile
            res((heads, n_pad), lambda i: (0, 0)),            # a_src_t resident
            res((n_pad, hf), lambda i: (0, 0)),               # h resident
            res((1, out_dim), lambda i: (0, 0)),              # bias resident
        ],
        out_specs=pl.BlockSpec((tile, out_dim), lambda i: (i, 0)),
        out_shape=jax.ShapeDtypeStruct((n_pad, out_dim), out_dtype),
        compiler_params=cparams,
    )(adj, a_all, a_src_t, h, layer["bias"])


def skip_logsoftmax(x, x4, w_skip_t, b_skip, resident_buffering=True):
    n_pad, f_in = x.shape
    c_pad = x4.shape[1]
    tile = ROW_TILE
    assert n_pad % tile == 0
    grid = (n_pad // tile,)
    res = lambda bs, im: _resident_spec(bs, im, resident_buffering)
    return pl.pallas_call(
        skip_logsoftmax_kernel,
        grid=grid,
        in_specs=[
            pl.BlockSpec((tile, f_in), lambda i: (i, 0)),
            pl.BlockSpec((tile, c_pad), lambda i: (i, 0)),
            res((f_in, c_pad), lambda i: (0, 0)),
            res((1, c_pad), lambda i: (0, 0)),
        ],
        out_specs=pl.BlockSpec((tile, c_pad), lambda i: (i, 0)),
        out_shape=jax.ShapeDtypeStruct((n_pad, c_pad), jnp.float32),
        compiler_params=_compiler_params(),
    )(x, x4, w_skip_t, b_skip)


def improved_gat_forward(x_pad, adj_pad, params, n_nodes, num_classes,
                         resident_buffering=True):
    x1 = gat_layer(x_pad, adj_pad, params["conv1"], concat=True, apply_relu=True,
                   out_dtype=jnp.bfloat16, resident_buffering=resident_buffering)
    x2 = gat_layer(x1, adj_pad, params["conv2"], concat=True, apply_relu=True,
                   out_dtype=jnp.bfloat16, resident_buffering=resident_buffering)
    x3 = gat_layer(x2, adj_pad, params["conv3"], concat=True, apply_relu=True,
                   out_dtype=jnp.bfloat16, resident_buffering=resident_buffering)
    x4 = gat_layer(x3, adj_pad, params["conv4"], concat=False, apply_relu=False,
                   out_dtype=jnp.float32, resident_buffering=resident_buffering)
    logp = skip_logsoftmax(x_pad, x4, params["skip_w_t"], params["skip_b"],
                           resident_buffering=resident_buffering)
    return logp[:n_nodes, :num_classes]


# ----------------------------------------------------------------------------
# Host-side parameter preparation: fold att vectors into a single [f_in, 128]
# projection (cols 0:H = a_dst, H:2H = a_src), cast weights to bf16, optionally
# pad the class axis of the last layer to CLASS_PAD.
# ----------------------------------------------------------------------------
def prepare_gat_layer(w, att_src, att_dst, bias, *, heads, out_feats,
                      pad_out_feats=None):
    f_in = w.shape[0]
    w3 = w.reshape(f_in, heads, out_feats).astype(jnp.float32)
    w_asrc = jnp.einsum('khf,hf->kh', w3, att_src.astype(jnp.float32))
    w_adst = jnp.einsum('khf,hf->kh', w3, att_dst.astype(jnp.float32))
    eff_out = out_feats
    if pad_out_feats is not None and pad_out_feats > out_feats:
        assert heads == 1, "feature padding only used for the single-head layer"
        pad = pad_out_feats - out_feats
        w3 = jnp.pad(w3, ((0, 0), (0, 0), (0, pad)))
        bias = jnp.pad(bias, ((0, 0), (0, pad)))
        eff_out = pad_out_feats
    att_pad = max(128, ((2 * heads + 127) // 128) * 128)
    w_att = jnp.zeros((f_in, att_pad), jnp.float32)
    w_att = w_att.at[:, :heads].set(w_adst)
    w_att = w_att.at[:, heads:2 * heads].set(w_asrc)
    return {
        "w": w3.reshape(f_in, heads * eff_out).astype(jnp.bfloat16),
        "w_att": w_att.astype(jnp.bfloat16),
        "bias": bias.astype(jnp.float32),
        "heads": heads,
        "out_feats": eff_out,
    }


# ----------------------------------------------------------------------------
# Pure-JAX reference (mirrors the kernel's bf16 rounding of matmul operands).
# ----------------------------------------------------------------------------
def reference_forward(x_pad, adj_pad, params, n_nodes, num_classes):
    mask = adj_pad > 0

    def layer_ref(x, layer, concat, relu):
        xb = x.astype(jnp.bfloat16).astype(jnp.float32)
        h = xb @ layer["w"].astype(jnp.float32)
        hb = h.astype(jnp.bfloat16).astype(jnp.float32)
        a_all = xb @ layer["w_att"].astype(jnp.float32)
        heads, feats = layer["heads"], layer["out_feats"]
        a_dst, a_src = a_all[:, :heads], a_all[:, heads:2 * heads]
        outs = []
        for hh in range(heads):
            e = a_dst[:, hh:hh + 1] + a_src[:, hh][None, :]
            e = jnp.where(e > 0, e, 0.2 * e)
            e = jnp.where(mask, e, -jnp.inf)
            p = jax.nn.softmax(e, axis=-1)
            pb = p.astype(jnp.bfloat16).astype(jnp.float32)
            outs.append(pb @ hb[:, hh * feats:(hh + 1) * feats])
        if concat:
            o = jnp.concatenate(outs, axis=-1) + layer["bias"]
        else:
            o = sum(outs) / heads + layer["bias"]
        if relu:
            o = jnp.maximum(o, 0.0)
        return o

    x1 = layer_ref(x_pad, params["conv1"], True, True)
    x2 = layer_ref(x1, params["conv2"], True, True)
    x3 = layer_ref(x2, params["conv3"], True, True)
    x4 = layer_ref(x3, params["conv4"], False, False)
    z = x4 + x_pad @ params["skip_w_t"] + params["skip_b"]
    return jax.nn.log_softmax(z, axis=-1)[:n_nodes, :num_classes]


if __name__ == "__main__":
    key = jax.random.PRNGKey(0)
    N, F_IN, NUM_CLASSES = 16, 8, 5

    kx, k1, k2, k3, k4, k5, k6 = jax.random.split(key, 7)
    x = jax.random.normal(kx, (N, F_IN), jnp.float32)

    # edge_index [2, E]: ring + a few long-range edges (row 0 = src, row 1 = dst)
    src = [i for i in range(N)] + [i for i in range(0, N, 2)]
    dst = [(i + 1) % N for i in range(N)] + [(i + 5) % N for i in range(0, N, 2)]
    edge_index = jnp.array([src, dst], dtype=jnp.int32)              # [2, 24]

    # dense adjacency: adj[i, j] = 1 iff edge j -> i (self loops added below)
    adj = jnp.zeros((N, N), jnp.float32)
    adj = adj.at[edge_index[1], edge_index[0]].set(1.0)

    # deterministic raw parameters (shapes from ImprovedGAT.__init__)
    def raw_gat(k, f_in, f_out, heads, concat=True, scale=0.1):
        ka, kb, kc, kd = jax.random.split(k, 4)
        w = scale * jax.random.normal(ka, (f_in, heads * f_out), jnp.float32)
        a_s = scale * jax.random.normal(kb, (heads, f_out), jnp.float32)
        a_d = scale * jax.random.normal(kc, (heads, f_out), jnp.float32)
        bias_dim = heads * f_out if concat else f_out
        b = scale * jax.random.normal(kd, (1, bias_dim), jnp.float32)
        return w, a_s, a_d, b

    c1 = raw_gat(k1, F_IN, 128, heads=16)
    c2 = raw_gat(k2, 128 * 16, 64, heads=16)
    c3 = raw_gat(k3, 64 * 16, 32, heads=16)
    c4 = raw_gat(k4, 32 * 16, NUM_CLASSES, heads=1, concat=False)

    params = {
        "conv1": prepare_gat_layer(*c1, heads=16, out_feats=128),
        "conv2": prepare_gat_layer(*c2, heads=16, out_feats=64),
        "conv3": prepare_gat_layer(*c3, heads=16, out_feats=32),
        "conv4": prepare_gat_layer(*c4, heads=1, out_feats=NUM_CLASSES,
                                   pad_out_feats=CLASS_PAD),
    }

    # skip connection: torch Linear weight is [C, F_IN]; pass transposed and
    # pad the class axis (padded logit columns get a -1e30 bias -> exp == 0).
    w_skip = 0.1 * jax.random.normal(k5, (NUM_CLASSES, F_IN), jnp.float32)
    b_skip = 0.1 * jax.random.normal(k6, (1, NUM_CLASSES), jnp.float32)
    params["skip_w_t"] = jnp.pad(w_skip.T, ((0, 0), (0, CLASS_PAD - NUM_CLASSES)))
    params["skip_b"] = jnp.pad(b_skip, ((0, 0), (0, CLASS_PAD - NUM_CLASSES)),
                               constant_values=NEG_INF)

    # pad nodes up to a multiple of the row tile; give EVERY node (including
    # padded ones) a self loop so padded rows stay finite and never produce
    # NaN/Inf that could leak into the per-head source-side max.
    n_pad = ((N + ROW_TILE - 1) // ROW_TILE) * ROW_TILE
    x_pad = jnp.pad(x, ((0, n_pad - N), (0, 0)))
    adj_pad = jnp.zeros((n_pad, n_pad), jnp.float32)
    adj_pad = adj_pad.at[:N, :N].set(adj)
    adj_pad = adj_pad.at[jnp.arange(n_pad), jnp.arange(n_pad)].set(1.0)
    adj_pad = adj_pad.astype(jnp.bfloat16)

    def run(buffered):
        return improved_gat_forward(x_pad, adj_pad, params, N, NUM_CLASSES,
                                    resident_buffering=buffered)

    try:
        out = jax.block_until_ready(run(True))
    except Exception:
        # Older jax without single-buffer pipeline_mode support: plain specs.
        out = jax.block_until_ready(run(False))

    ref = jax.block_until_ready(
        reference_forward(x_pad, adj_pad, params, N, NUM_CLASSES))

    assert out.shape == (N, NUM_CLASSES)
    # rows of log_softmax must sum (in prob space) to 1
    assert bool(jnp.all(jnp.abs(jnp.sum(jnp.exp(out), axis=1) - 1.0) < 1e-3))
    # kernel must match the pure-JAX reference (bf16 + approx-recip tolerance)
    assert bool(jnp.max(jnp.abs(out - ref)) < 5e-2), float(jnp.max(jnp.abs(out - ref)))
    print("KERNEL_OK")
</pallas_src>

<mosaic_0001>
module attributes {stable_mosaic.version = 11 : i64} {
  func.func @gat_transform_kernel(%arg0: i32, %arg1: memref<128x8xf32, #tpu.memory_space<vmem>>, %arg2: memref<8x2048xbf16, #tpu.memory_space<vmem>>, %arg3: memref<8x128xbf16, #tpu.memory_space<vmem>>, %arg4: memref<128x2048xbf16, #tpu.memory_space<vmem>>, %arg5: memref<128x128xf32, #tpu.memory_space<vmem>>) attributes {dimension_semantics = [#tpu.dimension_semantics<parallel>], iteration_bounds = array<i64: 1>, scalar_prefetch = 0 : i64, scratch_operands = 0 : i64, tpu.core_type = #tpu.core_type<tc>, window_params = [{transform_indices = @transform_0, window_bounds = array<i64: 128, 8>}, {pipeline_mode = #tpu.pipeline_mode<synchronous>, transform_indices = @transform_1, window_bounds = array<i64: 8, 2048>}, {pipeline_mode = #tpu.pipeline_mode<synchronous>, transform_indices = @transform_2, window_bounds = array<i64: 8, 128>}, {transform_indices = @transform_3, window_bounds = array<i64: 128, 2048>}, {transform_indices = @transform_4, window_bounds = array<i64: 128, 128>}]} {
    %c0 = arith.constant 0 : index
    %c0_0 = arith.constant 0 : index
    %0 = vector.load %arg1[%c0, %c0_0] : memref<128x8xf32, #tpu.memory_space<vmem>>, vector<128x8xf32>
    %1 = arith.truncf %0 : vector<128x8xf32> to vector<128x8xbf16>
    %c0_1 = arith.constant 0 : index
    %c0_2 = arith.constant 0 : index
    %2 = vector.load %arg2[%c0_1, %c0_2] : memref<8x2048xbf16, #tpu.memory_space<vmem>>, vector<8x2048xbf16>
    %cst = arith.constant dense<0.000000e+00> : vector<128x2048xf32>
    %3 = tpu.matmul %1, %2, %cst {dimension_numbers = #tpu.dot_dimension_numbers<[1], [0], [0], [1], [0, 0, 1, 1], [], []>} : vector<128x8xbf16>, vector<8x2048xbf16>, vector<128x2048xf32> -> vector<128x2048xf32>
    %4 = arith.truncf %3 : vector<128x2048xf32> to vector<128x2048xbf16>
    %c0_3 = arith.constant 0 : index
    %c0_4 = arith.constant 0 : index
    %5 = vector.load %arg4[%c0_3, %c0_4] : memref<128x2048xbf16, #tpu.memory_space<vmem>>, vector<128x2048xbf16>
    tpu.vector_store %arg4[%c0_3, %c0_4], %4 {strides = array<i32>} : memref<128x2048xbf16, #tpu.memory_space<vmem>>, vector<128x2048xbf16>,
    %c0_5 = arith.constant 0 : index
    %c0_6 = arith.constant 0 : index
    %6 = vector.load %arg3[%c0_5, %c0_6] : memref<8x128xbf16, #tpu.memory_space<vmem>>, vector<8x128xbf16>
    %cst_7 = arith.constant dense<0.000000e+00> : vector<128x128xf32>
    %7 = tpu.matmul %1, %6, %cst_7 {dimension_numbers = #tpu.dot_dimension_numbers<[1], [0], [0], [1], [0, 0, 1, 1], [], []>} : vector<128x8xbf16>, vector<8x128xbf16>, vector<128x128xf32> -> vector<128x128xf32>
    %c0_8 = arith.constant 0 : index
    %c0_9 = arith.constant 0 : index
    %8 = vector.load %arg5[%c0_8, %c0_9] : memref<128x128xf32, #tpu.memory_space<vmem>>, vector<128x128xf32>
    tpu.vector_store %arg5[%c0_8, %c0_9], %7 {strides = array<i32>} : memref<128x128xf32, #tpu.memory_space<vmem>>, vector<128x128xf32>,
    return
  }
  func.func @transform_0(%arg0: i32) -> (i32, i32) {
    %c0_i32 = arith.constant 0 : i32
    %c0_i32_0 = arith.constant 0 : i32
    return %arg0, %c0_i32 : i32, i32
  }
  func.func @transform_1(%arg0: i32) -> (i32, i32) {
    %c0_i32 = arith.constant 0 : i32
    %c0_i32_0 = arith.constant 0 : i32
    %c0_i32_1 = arith.constant 0 : i32
    return %c0_i32, %c0_i32_0 : i32, i32
  }
  func.func @transform_2(%arg0: i32) -> (i32, i32) {
    %c0_i32 = arith.constant 0 : i32
    %c0_i32_0 = arith.constant 0 : i32
    %c0_i32_1 = arith.constant 0 : i32
    return %c0_i32, %c0_i32_0 : i32, i32
  }
  func.func @transform_3(%arg0: i32) -> (i32, i32) {
    %c0_i32 = arith.constant 0 : i32
    %c0_i32_0 = arith.constant 0 : i32
    return %arg0, %c0_i32 : i32, i32
  }
  func.func @transform_4(%arg0: i32) -> (i32, i32) {
    %c0_i32 = arith.constant 0 : i32
    %c0_i32_0 = arith.constant 0 : i32
    return %arg0, %c0_i32 : i32, i32
  }
}

module attributes {stable_mosaic.version = 11 : i64} {
  func.func @gat_transform_kernel(%arg0: i32, %arg1: memref<128x8xf32, #tpu.memory_space<vmem>>, %arg2: memref<8x2048xbf16, #tpu.memory_space<vmem>>, %arg3: memref<8x128xbf16, #tpu.memory_space<vmem>>, %arg4: memref<128x2048xbf16, #tpu.memory_space<vmem>>, %arg5: memref<128x128xf32, #tpu.memory_space<vmem>>) attributes {dimension_semantics = [#tpu.dimension_semantics<parallel>], iteration_bounds = array<i64: 1>, scalar_prefetch = 0 : i64, scratch_operands = 0 : i64, tpu.core_type = #tpu.core_type<tc>, window_params = [{transform_indices = @transform_0, window_bounds = array<i64: 128, 8>}, {pipeline_mode = #tpu.pipeline_mode<synchronous>, transform_indices = @transform_1, window_bounds = array<i64: 8, 2048>}, {pipeline_mode = #tpu.pipeline_mode<synchronous>, transform_indices = @transform_2, window_bounds = array<i64: 8, 128>}, {transform_indices = @transform_3, window_bounds = array<i64: 128, 2048>}, {transform_indices = @transform_4, window_bounds = array<i64: 128, 128>}]} {
    %c0 = arith.constant 0 : index
    %c0_0 = arith.constant 0 : index
    %0 = vector.load %arg1[%c0, %c0_0] : memref<128x8xf32, #tpu.memory_space<vmem>>, vector<128x8xf32>
    %1 = arith.truncf %0 : vector<128x8xf32> to vector<128x8xbf16>
    %c0_1 = arith.constant 0 : index
    %c0_2 = arith.constant 0 : index
    %2 = vector.load %arg2[%c0_1, %c0_2] : memref<8x2048xbf16, #tpu.memory_space<vmem>>, vector<8x2048xbf16>
    %cst = arith.constant dense<0.000000e+00> : vector<128x2048xf32>
    %3 = tpu.matmul %1, %2, %cst {dimension_numbers = #tpu.dot_dimension_numbers<[1], [0], [0], [1], [0, 0, 1, 1], [], []>} : vector<128x8xbf16>, vector<8x2048xbf16>, vector<128x2048xf32> -> vector<128x2048xf32>
    %4 = arith.truncf %3 : vector<128x2048xf32> to vector<128x2048xbf16>
    %c0_3 = arith.constant 0 : index
    %c0_4 = arith.constant 0 : index
    %5 = vector.load %arg4[%c0_3, %c0_4] : memref<128x2048xbf16, #tpu.memory_space<vmem>>, vector<128x2048xbf16>
    tpu.vector_store %arg4[%c0_3, %c0_4], %4 {strides = array<i32>} : memref<128x2048xbf16, #tpu.memory_space<vmem>>, vector<128x2048xbf16>,
    %c0_5 = arith.constant 0 : index
    %c0_6 = arith.constant 0 : index
    %6 = vector.load %arg3[%c0_5, %c0_6] : memref<8x128xbf16, #tpu.memory_space<vmem>>, vector<8x128xbf16>
    %cst_7 = arith.constant dense<0.000000e+00> : vector<128x128xf32>
    %7 = tpu.matmul %1, %6, %cst_7 {dimension_numbers = #tpu.dot_dimension_numbers<[1], [0], [0], [1], [0, 0, 1, 1], [], []>} : vector<128x8xbf16>, vector<8x128xbf16>, vector<128x128xf32> -> vector<128x128xf32>
    %c0_8 = arith.constant 0 : index
    %c0_9 = arith.constant 0 : index
    %8 = vector.load %arg5[%c0_8, %c0_9] : memref<128x128xf32, #tpu.memory_space<vmem>>, vector<128x128xf32>
    tpu.vector_store %arg5[%c0_8, %c0_9], %7 {strides = array<i32>} : memref<128x128xf32, #tpu.memory_space<vmem>>, vector<128x128xf32>,
    return
  }
  func.func @transform_0(%arg0: i32) -> (i32, i32) {
    %c0_i32 = arith.constant 0 : i32
    %c0_i32_0 = arith.constant 0 : i32
    return %arg0, %c0_i32 : i32, i32
  }
  func.func @transform_1(%arg0: i32) -> (i32, i32) {
    %c0_i32 = arith.constant 0 : i32
    %c0_i32_0 = arith.constant 0 : i32
    %c0_i32_1 = arith.constant 0 : i32
    return %c0_i32, %c0_i32_0 : i32, i32
  }
  func.func @transform_2(%arg0: i32) -> (i32, i32) {
    %c0_i32 = arith.constant 0 : i32
    %c0_i32_0 = arith.constant 0 : i32
    %c0_i32_1 = arith.constant 0 : i32
    return %c0_i32, %c0_i32_0 : i32, i32
  }
  func.func @transform_3(%arg0: i32) -> (i32, i32) {
    %c0_i32 = arith.constant 0 : i32
    %c0_i32_0 = arith.constant 0 : i32
    return %arg0, %c0_i32 : i32, i32
  }
  func.func @transform_4(%arg0: i32) -> (i32, i32) {
    %c0_i32 = arith.constant 0 : i32
    %c0_i32_0 = arith.constant 0 : i32
    return %arg0, %c0_i32 : i32, i32
  }
}

</mosaic_0001>

<llo_original>
// kernel: tpu_custom_call.1
$region0: #{tpu_custom_call.1}
  #allocation0 [shape = 'u32[]', space=smem, size = 0x4, offset = 0x4, fixed_abs, tag = 'smem constant byte address 0x4 - core index']
  #allocation1 [shape = 'u32[144,128]{1,0:T(1,128)}', space=vmem, size = 0x12000, scoped, tag = 'internal scratch']
  %s0 = inlined_call_operand.vmem [shape: f32[128,8], index: 0, kind: input, shape index: {}]
  %s1 = inlined_call_operand.vmem [shape: bf16[8,2048], index: 1, kind: input, shape index: {}]
  %s2 = inlined_call_operand.vmem [shape: bf16[8,128], index: 2, kind: input, shape index: {}]
  %s3 = inlined_call_operand.hbm [shape: bf16[128,2048], index: 3, kind: output, shape index: {0}]
  %s4 = inlined_call_operand.hbm [shape: f32[128,128], index: 4, kind: output, shape index: {1}]
  %5 = xla_tuple %s3, %s4
  %s6 = sld [smem:[#allocation0]]
  $region30: #{tpu_custom_call.1} parent=0
    _
  %s8 = ssub.s32 1, %s6
  %s9 = scalar_select 0, %s8, %s6
  $region1: #{tpu_custom_call.1} parent=0
    #allocation2 [shape = 'u8[524288]{0}', space=vmem, size = 0x80000, scoped, tag = 'output window, operand 0, single buffered']
    #allocation3 [shape = 's32[1]{0}', space=sflag, size = 0x4, scoped, tag = 'scoped memory for tpu_custom_call.1']
    #allocation4 [shape = 'u8[65536]{0}', space=vmem, size = 0x10000, scoped, tag = 'output window, operand 1, single buffered']
    #allocation5 [shape = 's32[1]{0}', space=sflag, size = 0x4, scoped, tag = 'scoped memory for tpu_custom_call.1']
    %10 = vsyncpa [#allocation3], 0
    %11 = vsyncpa [#allocation5], 0
    // Predicated region
    $region2: #{tpu_custom_call.1} parent=1 // pred_check
      _
    $region3: #{tpu_custom_call.1} parent=1 // pred_check_branch
      %13 = sbr.rel (0) target = $region5
    $region4: #{tpu_custom_call.1} parent=1 // pred_region
      _
    $region5: #{tpu_custom_call.1} parent=1 // pred_fallthru
      _
    // Predicated region
    $region6: #{tpu_custom_call.1} parent=1 // pred_check
      _
    $region7: #{tpu_custom_call.1} parent=1 // pred_check_branch
      %15 = sbr.rel (0) target = $region9
    $region8: #{tpu_custom_call.1} parent=1 // pred_region
      _
    $region9: #{tpu_custom_call.1} parent=1 // pred_fallthru
      _
    // Predicated region
    $region10: #{tpu_custom_call.1} parent=1 // pred_check
      _
    $region11: #{tpu_custom_call.1} parent=1 // pred_check_branch
      %17 = sbr.rel (0) target = $region13
    $region12: #{tpu_custom_call.1} parent=1 // pred_region
      _
    $region13: #{tpu_custom_call.1} parent=1 // pred_fallthru
      _
    %v19 = vld [vmem:[%s0] sm:$0xff]
    %v20 = vld [vmem:[%s0 + $0x8] sm:$0xff]
    %v21 = vld [vmem:[%s0 + $0x10] sm:$0xff]
    %v22 = vld [vmem:[%s0 + $0x18] sm:$0xff]
    %v23 = vld [vmem:[%s0 + $0x20] sm:$0xff]
    %v24 = vld [vmem:[%s0 + $0x28] sm:$0xff]
    %v25 = vld [vmem:[%s0 + $0x30] sm:$0xff]
    %v26 = vld [vmem:[%s0 + $0x38] sm:$0xff]
    %v27 = vld [vmem:[%s0 + $0x40] sm:$0xff]
    %v28 = vld [vmem:[%s0 + $0x48] sm:$0xff]
    %v29 = vld [vmem:[%s0 + $0x50] sm:$0xff]
    %v30 = vld [vmem:[%s0 + $0x58] sm:$0xff]
    %v31 = vld [vmem:[%s0 + $0x60] sm:$0xff]
    %v32 = vld [vmem:[%s0 + $0x68] sm:$0xff]
    %v33 = vld [vmem:[%s0 + $0x70] sm:$0xff]
    %v34 = vld [vmem:[%s0 + $0x78] sm:$0xff]
    %v35 = vpack.c.bf16 %v20, %v19
    %v36 = vpack.c.bf16 %v22, %v21
    %v37 = vpack.c.bf16 %v24, %v23
    %v38 = vpack.c.bf16 %v26, %v25
    %v39 = vpack.c.bf16 %v28, %v27
    %v40 = vpack.c.bf16 %v30, %v29
    %v41 = vpack.c.bf16 %v32, %v31
    %v42 = vpack.c.bf16 %v34, %v33
    %v43 = vld [vmem:[%s1] sm:$0xff]
    %v44 = vld [vmem:[%s1 + $0x8] sm:$0xff]
    %v45 = vld [vmem:[%s1 + $0x10] sm:$0xff]
    %v46 = vld [vmem:[%s1 + $0x18] sm:$0xff]
    %v47 = vld [vmem:[%s1 + $0x20] sm:$0xff]
    %v48 = vld [vmem:[%s1 + $0x28] sm:$0xff]
    %v49 = vld [vmem:[%s1 + $0x30] sm:$0xff]
    %v50 = vld [vmem:[%s1 + $0x38] sm:$0xff]
    %v59 = vunpack.c.l.b16 %v43
    %v60 = vunpack.c.h.b16 %v43
    %v61 = vunpack.c.l.b16 %v44
    %v62 = vunpack.c.h.b16 %v44
    %v63 = vunpack.c.l.b16 %v45
    %v64 = vunpack.c.h.b16 %v45
    %v65 = vunpack.c.l.b16 %v46
    %v66 = vunpack.c.h.b16 %v46
    %v67 = vunpack.c.l.b16 %v47
    %v68 = vunpack.c.h.b16 %v47
    %v69 = vunpack.c.l.b16 %v48
    %v70 = vunpack.c.h.b16 %v48
    %v71 = vunpack.c.l.b16 %v49
    %v72 = vunpack.c.h.b16 %v49
    %v73 = vunpack.c.l.b16 %v50
    %v74 = vunpack.c.h.b16 %v50
    %v75 = vpack.c.b16 %v59, %v59
    %v76 = vpack.c.b16 %v60, %v60
    %v77 = vpack.c.b16 %v61, %v61
    %v78 = vpack.c.b16 %v62, %v62
    %v79 = vpack.c.b16 %v63, %v63
    %v80 = vpack.c.b16 %v64, %v64
    %v81 = vpack.c.b16 %v65, %v65
    %v82 = vpack.c.b16 %v66, %v66
    %v83 = vpack.c.b16 %v67, %v67
    %v84 = vpack.c.b16 %v68, %v68
    %v85 = vpack.c.b16 %v69, %v69
    %v86 = vpack.c.b16 %v70, %v70
    %v87 = vpack.c.b16 %v71, %v71
    %v88 = vpack.c.b16 %v72, %v72
    %v89 = vpack.c.b16 %v73, %v73
    %v90 = vpack.c.b16 %v74, %v74
    %vm91 = vcmask 64512
    %v93 = vsel %vm91, %v35, 0
    %v96 = vsel %vm91, %v36, 0
    %v99 = vsel %vm91, %v37, 0
    %v102 = vsel %vm91, %v38, 0
    %v105 = vsel %vm91, %v39, 0
    %v108 = vsel %vm91, %v40, 0
    %v111 = vsel %vm91, %v41, 0
    %v114 = vsel %vm91, %v42, 0
    %vm116 = vcmask 1043456
    %v118 = vsel %vm116, %v75, 0
    %v121 = vsel %vm116, %v76, 0
    %v124 = vsel %vm116, %v77, 0
    %v127 = vsel %vm116, %v78, 0
    %v130 = vsel %vm116, %v79, 0
    %v133 = vsel %vm116, %v80, 0
    %v136 = vsel %vm116, %v81, 0
    %v139 = vsel %vm116, %v82, 0
    %v142 = vsel %vm116, %v83, 0
    %v145 = vsel %vm116, %v84, 0
    %v148 = vsel %vm116, %v85, 0
    %v151 = vsel %vm116, %v86, 0
    %v154 = vsel %vm116, %v87, 0
    %v157 = vsel %vm116, %v88, 0
    %v160 = vsel %vm116, %v89, 0
    %v163 = vsel %vm116, %v90, 0
    %165 = vmatprep.subr.bf16.mxu0 0
    %166 = vmatpush1.bf16.msra.mxu0 0
    %167 = vmatprep.subr.bf16.mxu0 0
    %168 = vmatpush1.bf16.msra.mxu0 0
    %169 = vmatprep.subr.bf16.mxu0 0
    %170 = vmatpush1.bf16.msra.mxu0 0
    %171 = vmatprep.subr.bf16.mxu0 0
    %172 = vmatpush1.bf16.msra.mxu0 0
    %173 = vmatprep.subr.bf16.mxu0 0
    %174 = vmatpush1.bf16.msra.mxu0 0
    %175 = vmatprep.subr.bf16.mxu0 0
    %176 = vmatpush1.bf16.msra.mxu0 0
    %177 = vmatprep.subr.bf16.mxu0 0
    %178 = vmatpush1.bf16.msra.mxu0 0
    %179 = vmatprep.subr.bf16.mxu0 %v121
    %180 = vmatpush1.bf16.msra.mxu0 %v118
    %181 = vmatprep.subr.bf16.mxu0 0
    %182 = vmatpush2.bf16.msra.mxu0 0
    %183 = vmatprep.subr.bf16.mxu0 0
    %184 = vmatpush2.bf16.msra.mxu0 0
    %185 = vmatprep.subr.bf16.mxu0 0
    %186 = vmatpush2.bf16.msra.mxu0 0
    %187 = vmatprep.subr.bf16.mxu0 0
    %188 = vmatpush2.bf16.msra.mxu0 0
    %189 = vmatprep.subr.bf16.mxu0 0
    %190 = vmatpush2.bf16.msra.mxu0 0
    %191 = vmatprep.subr.bf16.mxu0 0
    %192 = vmatpush2.bf16.msra.mxu0 0
    %193 = vmatprep.subr.bf16.mxu0 0
    %194 = vmatpush2.bf16.msra.mxu0 0
    %195 = vmatprep.subr.bf16.mxu0 0
    %196 = vmatpush2.bf16.msra.mxu0 0
    %197 = vmatprep.mubr.bf16.mxu0 0
    %198 = vmatmul.mubr.bf16.gmra.mxu0 %v93
    %v199 = vpop.f32.mrf.mxu0
    %v200 = vadd.f32 0.0, %v199
    %v201 = vpop.f32.mrf.mxu0
    %v202 = vadd.f32 0.0, %v201
    %v203 = vpop.f32.mrf.mxu0
    %v204 = vadd.f32 0.0, %v203
    %v205 = vpop.f32.mrf.mxu0
    %v206 = vadd.f32 0.0, %v205
    %207 = vmatprep.mubr.bf16.mxu0 0
    %208 = vmatmul.mubr.bf16.gmra.mxu0 %v96
    %v209 = vpop.f32.mrf.mxu0
    %v210 = vadd.f32 0.0, %v209
    %v211 = vpop.f32.mrf.mxu0
    %v212 = vadd.f32 0.0, %v211
    %v213 = vpop.f32.mrf.mxu0
    %v214 = vadd.f32 0.0, %v213
    %v215 = vpop.f32.mrf.mxu0
    %v216 = vadd.f32 0.0, %v215
    %217 = vmatprep.mubr.bf16.mxu0 0
    %218 = vmatmul.mubr.bf16.gmra.mxu0 %v99
    %v219 = vpop.f32.mrf.mxu0
    %v220 = vadd.f32 0.0, %v219
    %v221 = vpop.f32.mrf.mxu0
    %v222 = vadd.f32 0.0, %v221
    %v223 = vpop.f32.mrf.mxu0
    %v224 = vadd.f32 0.0, %v223
    %v225 = vpop.f32.mrf.mxu0
    %v226 = vadd.f32 0.0, %v225
    %227 = vmatprep.mubr.bf16.mxu0 0
    %228 = vmatmul.mubr.bf16.gmra.mxu0 %v102
    %v229 = vpop.f32.mrf.mxu0
    %v230 = vadd.f32 0.0, %v229
    %v231 = vpop.f32.mrf.mxu0
    %v232 = vadd.f32 0.0, %v231
    %v233 = vpop.f32.mrf.mxu0
    %v234 = vadd.f32 0.0, %v233
    %v235 = vpop.f32.mrf.mxu0
    %v236 = vadd.f32 0.0, %v235
    %237 = vmatprep.mubr.bf16.mxu0 0
    %238 = vmatmul.mubr.bf16.gmra.mxu0 %v105
    %v239 = vpop.f32.mrf.mxu0
    %v240 = vadd.f32 0.0, %v239
    %v241 = vpop.f32.mrf.mxu0
    %v242 = vadd.f32 0.0, %v241
    %v243 = vpop.f32.mrf.mxu0
    %v244 = vadd.f32 0.0, %v243
    %v245 = vpop.f32.mrf.mxu0
    %v246 = vadd.f32 0.0, %v245
    %247 = vmatprep.mubr.bf16.mxu0 0
    %248 = vmatmul.mubr.bf16.gmra.mxu0 %v108
    %v249 = vpop.f32.mrf.mxu0
    %v250 = vadd.f32 0.0, %v249
    %v251 = vpop.f32.mrf.mxu0
    %v252 = vadd.f32 0.0, %v251
    %v253 = vpop.f32.mrf.mxu0
    %v254 = vadd.f32 0.0, %v253
    %v255 = vpop.f32.mrf.mxu0
    %v256 = vadd.f32 0.0, %v255
    %257 = vmatprep.mubr.bf16.mxu0 0
    %258 = vmatmul.mubr.bf16.gmra.mxu0 %v111
    %v259 = vpop.f32.mrf.mxu0
    %v260 = vadd.f32 0.0, %v259
    %v261 = vpop.f32.mrf.mxu0
    %v262 = vadd.f32 0.0, %v261
    %v263 = vpop.f32.mrf.mxu0
    %v264 = vadd.f32 0.0, %v263
    %v265 = vpop.f32.mrf.mxu0
    %v266 = vadd.f32 0.0, %v265
    %267 = vmatprep.mubr.bf16.mxu0 0
    %268 = vmatmul.mubr.bf16.gmra.mxu0 %v114
    %v269 = vpop.f32.mrf.mxu0
    %v270 = vadd.f32 0.0, %v269
    %v271 = vpop.f32.mrf.mxu0
    %v272 = vadd.f32 0.0, %v271
    %v273 = vpop.f32.mrf.mxu0
    %v274 = vadd.f32 0.0, %v273
    %v275 = vpop.f32.mrf.mxu0
    %v276 = vadd.f32 0.0, %v275
    %277 = vdwg.mxu0
    %278 = vmatprep.subr.bf16.mxu0 0
    %279 = vmatpush1.bf16.msra.mxu0 0
    %280 = vmatprep.subr.bf16.mxu0 0
    %281 = vmatpush1.bf16.msra.mxu0 0
    %282 = vmatprep.subr.bf16.mxu0 0
    %283 = vmatpush1.bf16.msra.mxu0 0
    %284 = vmatprep.subr.bf16.mxu0 0
    %285 = vmatpush1.bf16.msra.mxu0 0
    %286 = vmatprep.subr.bf16.mxu0 0
    %287 = vmatpush1.bf16.msra.mxu0 0
    %288 = vmatprep.subr.bf16.mxu0 0
    %289 = vmatpush1.bf16.msra.mxu0 0
    %290 = vmatprep.subr.bf16.mxu0 0
    %291 = vmatpush1.bf16.msra.mxu0 0
    %292 = vmatprep.subr.bf16.mxu0 %v127
    %293 = vmatpush1.bf16.msra.mxu0 %v124
    %294 = vmatprep.subr.bf16.mxu0 0
    %295 = vmatpush2.bf16.msra.mxu0 0
    %296 = vmatprep.subr.bf16.mxu0 0
    %297 = vmatpush2.bf16.msra.mxu0 0
    %298 = vmatprep.subr.bf16.mxu0 0
    %299 = vmatpush2.bf16.msra.mxu0 0
    %300 = vmatprep.subr.bf16.mxu0 0
    %301 = vmatpush2.bf16.msra.mxu0 0
    %302 = vmatprep.subr.bf16.mxu0 0
    %303 = vmatpush2.bf16.msra.mxu0 0
    %304 = vmatprep.subr.bf16.mxu0 0
    %305 = vmatpush2.bf16.msra.mxu0 0
    %306 = vmatprep.subr.bf16.mxu0 0
    %307 = vmatpush2.bf16.msra.mxu0 0
    %308 = vmatprep.subr.bf16.mxu0 0
    %309 = vmatpush2.bf16.msra.mxu0 0
    %310 = vmatprep.mubr.bf16.mxu0 0
    %311 = vmatmul.mubr.bf16.gmra.mxu0 %v93
    %v312 = vpop.f32.mrf.mxu0
    %v313 = vadd.f32 0.0, %v312
    %v314 = vpop.f32.mrf.mxu0
    %v315 = vadd.f32 0.0, %v314
    %v316 = vpop.f32.mrf.mxu0
    %v317 = vadd.f32 0.0, %v316
    %v318 = vpop.f32.mrf.mxu0
    %v319 = vadd.f32 0.0, %v318
    %320 = vmatprep.mubr.bf16.mxu0 0
    %321 = vmatmul.mubr.bf16.gmra.mxu0 %v96
    %v322 = vpop.f32.mrf.mxu0
    %v323 = vadd.f32 0.0, %v322
    %v324 = vpop.f32.mrf.mxu0
    %v325 = vadd.f32 0.0, %v324
    %v326 = vpop.f32.mrf.mxu0
    %v327 = vadd.f32 0.0, %v326
    %v328 = vpop.f32.mrf.mxu0
    %v329 = vadd.f32 0.0, %v328
    %330 = vmatprep.mubr.bf16.mxu0 0
    %331 = vmatmul.mubr.bf16.gmra.mxu0 %v99
    %v332 = vpop.f32.mrf.mxu0
    %v333 = vadd.f32 0.0, %v332
    %v334 = vpop.f32.mrf.mxu0
    %v335 = vadd.f32 0.0, %v334
    %v336 = vpop.f32.mrf.mxu0
    %v337 = vadd.f32 0.0, %v336
    %v338 = vpop.f32.mrf.mxu0
    %v339 = vadd.f32 0.0, %v338
    %340 = vmatprep.mubr.bf16.mxu0 0
    %341 = vmatmul.mubr.bf16.gmra.mxu0 %v102
    %v342 = vpop.f32.mrf.mxu0
    %v343 = vadd.f32 0.0, %v342
    %v344 = vpop.f32.mrf.mxu0
    %v345 = vadd.f32 0.0, %v344
    %v346 = vpop.f32.mrf.mxu0
    %v347 = vadd.f32 0.0, %v346
    %v348 = vpop.f32.mrf.mxu0
    %v349 = vadd.f32 0.0, %v348
    %350 = vmatprep.mubr.bf16.mxu0 0
    %351 = vmatmul.mubr.bf16.gmra.mxu0 %v105
    %v352 = vpop.f32.mrf.mxu0
    %v353 = vadd.f32 0.0, %v352
    %v354 = vpop.f32.mrf.mxu0
    %v355 = vadd.f32 0.0, %v354
    %v356 = vpop.f32.mrf.mxu0
    %v357 = vadd.f32 0.0, %v356
    %v358 = vpop.f32.mrf.mxu0
    %v359 = vadd.f32 0.0, %v358
    %360 = vmatprep.mubr.bf16.mxu0 0
    %361 = vmatmul.mubr.bf16.gmra.mxu0 %v108
    %v362 = vpop.f32.mrf.mxu0
    %v363 = vadd.f32 0.0, %v362
    %v364 = vpop.f32.mrf.mxu0
    %v365 = vadd.f32 0.0, %v364
    %v366 = vpop.f32.mrf.mxu0
    %v367 = vadd.f32 0.0, %v366
    %v368 = vpop.f32.mrf.mxu0
    %v369 = vadd.f32 0.0, %v368
    %370 = vmatprep.mubr.bf16.mxu0 0
    %371 = vmatmul.mubr.bf16.gmra.mxu0 %v111
    %v372 = vpop.f32.mrf.mxu0
    %v373 = vadd.f32 0.0, %v372
    %v374 = vpop.f32.mrf.mxu0
    %v375 = vadd.f32 0.0, %v374
    %v376 = vpop.f32.mrf.mxu0
    %v377 = vadd.f32 0.0, %v376
    %v378 = vpop.f32.mrf.mxu0
    %v379 = vadd.f32 0.0, %v378
    %380 = vmatprep.mubr.bf16.mxu0 0
    %381 = vmatmul.mubr.bf16.gmra.mxu0 %v114
    %v382 = vpop.f32.mrf.mxu0
    %v383 = vadd.f32 0.0, %v382
    %v384 = vpop.f32.mrf.mxu0
    %v385 = vadd.f32 0.0, %v384
    %v386 = vpop.f32.mrf.mxu0
    %v387 = vadd.f32 0.0, %v386
    %v388 = vpop.f32.mrf.mxu0
    %v389 = vadd.f32 0.0, %v388
    %390 = vdwg.mxu0
    %391 = vmatprep.subr.bf16.mxu0 0
    %392 = vmatpush1.bf16.msra.mxu0 0
    %393 = vmatprep.subr.bf16.mxu0 0
    %394 = vmatpush1.bf16.msra.mxu0 0
    %395 = vmatprep.subr.bf16.mxu0 0
    %396 = vmatpush1.bf16.msra.mxu0 0
    %397 = vmatprep.subr.bf16.mxu0 0
    %398 = vmatpush1.bf16.msra.mxu0 0
    %399 = vmatprep.subr.bf16.mxu0 0
    %400 = vmatpush1.bf16.msra.mxu0 0
    %401 = vmatprep.subr.bf16.mxu0 0
    %402 = vmatpush1.bf16.msra.mxu0 0
    %403 = vmatprep.subr.bf16.mxu0 0
    %404 = vmatpush1.bf16.msra.mxu0 0
    %405 = vmatprep.subr.bf16.mxu0 %v133
    %406 = vmatpush1.bf16.msra.mxu0 %v130
    %407 = vmatprep.subr.bf16.mxu0 0
    %408 = vmatpush2.bf16.msra.mxu0 0
    %409 = vmatprep.subr.bf16.mxu0 0
    %410 = vmatpush2.bf16.msra.mxu0 0
    %411 = vmatprep.subr.bf16.mxu0 0
    %412 = vmatpush2.bf16.msra.mxu0 0
    %413 = vmatprep.subr.bf16.mxu0 0
    %414 = vmatpush2.bf16.msra.mxu0 0
    %415 = vmatprep.subr.bf16.mxu0 0
    %416 = vmatpush2.bf16.msra.mxu0 0
    %417 = vmatprep.subr.bf16.mxu0 0
    %418 = vmatpush2.bf16.msra.mxu0 0
    %419 = vmatprep.subr.bf16.mxu0 0
    %420 = vmatpush2.bf16.msra.mxu0 0
    %421 = vmatprep.subr.bf16.mxu0 0
    %422 = vmatpush2.bf16.msra.mxu0 0
    %423 = vmatprep.mubr.bf16.mxu0 0
    %424 = vmatmul.mubr.bf16.gmra.mxu0 %v93
    %v425 = vpop.f32.mrf.mxu0
    %v426 = vadd.f32 0.0, %v425
    %v427 = vpop.f32.mrf.mxu0
    %v428 = vadd.f32 0.0, %v427
    %v429 = vpop.f32.mrf.mxu0
    %v430 = vadd.f32 0.0, %v429
    %v431 = vpop.f32.mrf.mxu0
    %v432 = vadd.f32 0.0, %v431
    %433 = vmatprep.mubr.bf16.mxu0 0
    %434 = vmatmul.mubr.bf16.gmra.mxu0 %v96
    %v435 = vpop.f32.mrf.mxu0
    %v436 = vadd.f32 0.0, %v435
    %v437 = vpop.f32.mrf.mxu0
    %v438 = vadd.f32 0.0, %v437
    %v439 = vpop.f32.mrf.mxu0
    %v440 = vadd.f32 0.0, %v439
    %v441 = vpop.f32.mrf.mxu0
    %v442 = vadd.f32 0.0, %v441
    %443 = vmatprep.mubr.bf16.mxu0 0
    %444 = vmatmul.mubr.bf16.gmra.mxu0 %v99
    %v445 = vpop.f32.mrf.mxu0
    %v446 = vadd.f32 0.0, %v445
    %v447 = vpop.f32.mrf.mxu0
    %v448 = vadd.f32 0.0, %v447
    %v449 = vpop.f32.mrf.mxu0
    %v450 = vadd.f32 0.0, %v449
    %v451 = vpop.f32.mrf.mxu0
    %v452 = vadd.f32 0.0, %v451
    %453 = vmatprep.mubr.bf16.mxu0 0
    %454 = vmatmul.mubr.bf16.gmra.mxu0 %v102
    %v455 = vpop.f32.mrf.mxu0
    %v456 = vadd.f32 0.0, %v455
    %v457 = vpop.f32.mrf.mxu0
    %v458 = vadd.f32 0.0, %v457
    %v459 = vpop.f32.mrf.mxu0
    %v460 = vadd.f32 0.0, %v459
    %v461 = vpop.f32.mrf.mxu0
    %v462 = vadd.f32 0.0, %v461
    %463 = vmatprep.mubr.bf16.mxu0 0
    %464 = vmatmul.mubr.bf16.gmra.mxu0 %v105
    %v465 = vpop.f32.mrf.mxu0
    %v466 = vadd.f32 0.0, %v465
    %v467 = vpop.f32.mrf.mxu0
    %v468 = vadd.f32 0.0, %v467
    %v469 = vpop.f32.mrf.mxu0
    %v470 = vadd.f32 0.0, %v469
    %v471 = vpop.f32.mrf.mxu0
    %v472 = vadd.f32 0.0, %v471
    %473 = vmatprep.mubr.bf16.mxu0 0
    %474 = vmatmul.mubr.bf16.gmra.mxu0 %v108
    %v475 = vpop.f32.mrf.mxu0
    %v476 = vadd.f32 0.0, %v475
    %v477 = vpop.f32.mrf.mxu0
    %v478 = vadd.f32 0.0, %v477
    %v479 = vpop.f32.mrf.mxu0
    %v480 = vadd.f32 0.0, %v479
    %v481 = vpop.f32.mrf.mxu0
    %v482 = vadd.f32 0.0, %v481
    %483 = vmatprep.mubr.bf16.mxu0 0
    %484 = vmatmul.mubr.bf16.gmra.mxu0 %v111
    %v485 = vpop.f32.mrf.mxu0
    %v486 = vadd.f32 0.0, %v485
    %v487 = vpop.f32.mrf.mxu0
    %v488 = vadd.f32 0.0, %v487
    %v489 = vpop.f32.mrf.mxu0
    %v490 = vadd.f32 0.0, %v489
    %v491 = vpop.f32.mrf.mxu0
    %v492 = vadd.f32 0.0, %v491
    %493 = vmatprep.mubr.bf16.mxu0 0
    %494 = vmatmul.mubr.bf16.gmra.mxu0 %v114
    %v495 = vpop.f32.mrf.mxu0
    %v496 = vadd.f32 0.0, %v495
    %v497 = vpop.f32.mrf.mxu0
    %v498 = vadd.f32 0.0, %v497
    %v499 = vpop.f32.mrf.mxu0
    %v500 = vadd.f32 0.0, %v499
    %v501 = vpop.f32.mrf.mxu0
    %v502 = vadd.f32 0.0, %v501
    %503 = vdwg.mxu0
    %504 = vmatprep.subr.bf16.mxu0 0
    %505 = vmatpush1.bf16.msra.mxu0 0
    %506 = vmatprep.subr.bf16.mxu0 0
    %507 = vmatpush1.bf16.msra.mxu0 0
    %508 = vmatprep.subr.bf16.mxu0 0
    %509 = vmatpush1.bf16.msra.mxu0 0
    %510 = vmatprep.subr.bf16.mxu0 0
    %511 = vmatpush1.bf16.msra.mxu0 0
    %512 = vmatprep.subr.bf16.mxu0 0
    %513 = vmatpush1.bf16.msra.mxu0 0
    %514 = vmatprep.subr.bf16.mxu0 0
    %515 = vmatpush1.bf16.msra.mxu0 0
    %516 = vmatprep.subr.bf16.mxu0 0
    %517 = vmatpush1.bf16.msra.mxu0 0
    %518 = vmatprep.subr.bf16.mxu0 %v139
    %519 = vmatpush1.bf16.msra.mxu0 %v136
    %520 = vmatprep.subr.bf16.mxu0 0
    %521 = vmatpush2.bf16.msra.mxu0 0
    %522 = vmatprep.subr.bf16.mxu0 0
    %523 = vmatpush2.bf16.msra.mxu0 0
    %524 = vmatprep.subr.bf16.mxu0 0
    %525 = vmatpush2.bf16.msra.mxu0 0
    %526 = vmatprep.subr.bf16.mxu0 0
    %527 = vmatpush2.bf16.msra.mxu0 0
    %528 = vmatprep.subr.bf16.mxu0 0
    %529 = vmatpush2.bf16.msra.mxu0 0
    %530 = vmatprep.subr.bf16.mxu0 0
    %531 = vmatpush2.bf16.msra.mxu0 0
    %532 = vmatprep.subr.bf16.mxu0 0
    %533 = vmatpush2.bf16.msra.mxu0 0
    %534 = vmatprep.subr.bf16.mxu0 0
    %535 = vmatpush2.bf16.msra.mxu0 0
    %536 = vmatprep.mubr.bf16.mxu0 0
    %537 = vmatmul.mubr.bf16.gmra.mxu0 %v93
    %v538 = vpop.f32.mrf.mxu0
    %v539 = vadd.f32 0.0, %v538
    %v540 = vpop.f32.mrf.mxu0
    %v541 = vadd.f32 0.0, %v540
    %v542 = vpop.f32.mrf.mxu0
    %v543 = vadd.f32 0.0, %v542
    %v544 = vpop.f32.mrf.mxu0
    %v545 = vadd.f32 0.0, %v544
    %546 = vmatprep.mubr.bf16.mxu0 0
    %547 = vmatmul.mubr.bf16.gmra.mxu0 %v96
    %v548 = vpop.f32.mrf.mxu0
    %v549 = vadd.f32 0.0, %v548
    %v550 = vpop.f32.mrf.mxu0
    %v551 = vadd.f32 0.0, %v550
    %v552 = vpop.f32.mrf.mxu0
    %v553 = vadd.f32 0.0, %v552
    %v554 = vpop.f32.mrf.mxu0
    %v555 = vadd.f32 0.0, %v554
    %556 = vmatprep.mubr.bf16.mxu0 0
    %557 = vmatmul.mubr.bf16.gmra.mxu0 %v99
    %v558 = vpop.f32.mrf.mxu0
    %v559 = vadd.f32 0.0, %v558
    %v560 = vpop.f32.mrf.mxu0
    %v561 = vadd.f32 0.0, %v560
    %v562 = vpop.f32.mrf.mxu0
    %v563 = vadd.f32 0.0, %v562
    %v564 = vpop.f32.mrf.mxu0
    %v565 = vadd.f32 0.0, %v564
    %566 = vmatprep.mubr.bf16.mxu0 0
    %567 = vmatmul.mubr.bf16.gmra.mxu0 %v102
    %v568 = vpop.f32.mrf.mxu0
    %v569 = vadd.f32 0.0, %v568
    %v570 = vpop.f32.mrf.mxu0
    %v571 = vadd.f32 0.0, %v570
    %v572 = vpop.f32.mrf.mxu0
    %v573 = vadd.f32 0.0, %v572
    %v574 = vpop.f32.mrf.mxu0
    %v575 = vadd.f32 0.0, %v574
    %576 = vmatprep.mubr.bf16.mxu0 0
    %577 = vmatmul.mubr.bf16.gmra.mxu0 %v105
    %v578 = vpop.f32.mrf.mxu0
    %v579 = vadd.f32 0.0, %v578
    %v580 = vpop.f32.mrf.mxu0
    %v581 = vadd.f32 0.0, %v580
    %v582 = vpop.f32.mrf.mxu0
    %v583 = vadd.f32 0.0, %v582
    %v584 = vpop.f32.mrf.mxu0
    %v585 = vadd.f32 0.0, %v584
    %586 = vmatprep.mubr.bf16.mxu0 0
    %587 = vmatmul.mubr.bf16.gmra.mxu0 %v108
    %v588 = vpop.f32.mrf.mxu0
    %v589 = vadd.f32 0.0, %v588
    %v590 = vpop.f32.mrf.mxu0
    %v591 = vadd.f32 0.0, %v590
    %v592 = vpop.f32.mrf.mxu0
    %v593 = vadd.f32 0.0, %v592
    %v594 = vpop.f32.mrf.mxu0
    %v595 = vadd.f32 0.0, %v594
    %596 = vmatprep.mubr.bf16.mxu0 0
    %597 = vmatmul.mubr.bf16.gmra.mxu0 %v111
    %v598 = vpop.f32.mrf.mxu0
    %v599 = vadd.f32 0.0, %v598
    %v600 = vpop.f32.mrf.mxu0
    %v601 = vadd.f32 0.0, %v600
    %v602 = vpop.f32.mrf.mxu0
    %v603 = vadd.f32 0.0, %v602
    %v604 = vpop.f32.mrf.mxu0
    %v605 = vadd.f32 0.0, %v604
    %606 = vmatprep.mubr.bf16.mxu0 0
    %607 = vmatmul.mubr.bf16.gmra.mxu0 %v114
    %v608 = vpop.f32.mrf.mxu0
    %v609 = vadd.f32 0.0, %v608
    %v610 = vpop.f32.mrf.mxu0
    %v611 = vadd.f32 0.0, %v610
    %v612 = vpop.f32.mrf.mxu0
    %v613 = vadd.f32 0.0, %v612
    %v614 = vpop.f32.mrf.mxu0
    %v615 = vadd.f32 0.0, %v614
    %616 = vdwg.mxu0
    %617 = vmatprep.subr.bf16.mxu0 0
    %618 = vmatpush1.bf16.msra.mxu0 0
    %619 = vmatprep.subr.bf16.mxu0 0
    %620 = vmatpush1.bf16.msra.mxu0 0
    %621 = vmatprep.subr.bf16.mxu0 0
    %622 = vmatpush1.bf16.msra.mxu0 0
    %623 = vmatprep.subr.bf16.mxu0 0
    %624 = vmatpush1.bf16.msra.mxu0 0
    %625 = vmatprep.subr.bf16.mxu0 0
    %626 = vmatpush1.bf16.msra.mxu0 0
    %627 = vmatprep.subr.bf16.mxu0 0
    %628 = vmatpush1.bf16.msra.mxu0 0
    %629 = vmatprep.subr.bf16.mxu0 0
    %630 = vmatpush1.bf16.msra.mxu0 0
    %631 = vmatprep.subr.bf16.mxu0 %v145
    %632 = vmatpush1.bf16.msra.mxu0 %v142
    %633 = vmatprep.subr.bf16.mxu0 0
    %634 = vmatpush2.bf16.msra.mxu0 0
    %635 = vmatprep.subr.bf16.mxu0 0
    %636 = vmatpush2.bf16.msra.mxu0 0
    %637 = vmatprep.subr.bf16.mxu0 0
    %638 = vmatpush2.bf16.msra.mxu0 0
    %639 = vmatprep.subr.bf16.mxu0 0
    %640 = vmatpush2.bf16.msra.mxu0 0
    %641 = vmatprep.subr.bf16.mxu0 0
    %642 = vmatpush2.bf16.msra.mxu0 0
    %643 = vmatprep.subr.bf16.mxu0 0
    %644 = vmatpush2.bf16.msra.mxu0 0
    %645 = vmatprep.subr.bf16.mxu0 0
    %646 = vmatpush2.bf16.msra.mxu0 0
    %647 = vmatprep.subr.bf16.mxu0 0
    %648 = vmatpush2.bf16.msra.mxu0 0
    %649 = vmatprep.mubr.bf16.mxu0 0
    %650 = vmatmul.mubr.bf16.gmra.mxu0 %v93
    %v651 = vpop.f32.mrf.mxu0
    %v652 = vadd.f32 0.0, %v651
    %v653 = vpop.f32.mrf.mxu0
    %v654 = vadd.f32 0.0, %v653
    %v655 = vpop.f32.mrf.mxu0
    %v656 = vadd.f32 0.0, %v655
    %v657 = vpop.f32.mrf.mxu0
    %v658 = vadd.f32 0.0, %v657
    %659 = vmatprep.mubr.bf16.mxu0 0
    %660 = vmatmul.mubr.bf16.gmra.mxu0 %v96
    %v661 = vpop.f32.mrf.mxu0
    %v662 = vadd.f32 0.0, %v661
    %v663 = vpop.f32.mrf.mxu0
    %v664 = vadd.f32 0.0, %v663
    %v665 = vpop.f32.mrf.mxu0
    %v666 = vadd.f32 0.0, %v665
    %v667 = vpop.f32.mrf.mxu0
    %v668 = vadd.f32 0.0, %v667
    %669 = vmatprep.mubr.bf16.mxu0 0
    %670 = vmatmul.mubr.bf16.gmra.mxu0 %v99
    %v671 = vpop.f32.mrf.mxu0
    %v672 = vadd.f32 0.0, %v671
    %v673 = vpop.f32.mrf.mxu0
    %v674 = vadd.f32 0.0, %v673
    %v675 = vpop.f32.mrf.mxu0
    %v676 = vadd.f32 0.0, %v675
    %v677 = vpop.f32.mrf.mxu0
    %v678 = vadd.f32 0.0, %v677
    %679 = vmatprep.mubr.bf16.mxu0 0
    %680 = vmatmul.mubr.bf16.gmra.mxu0 %v102
    %v681 = vpop.f32.mrf.mxu0
    %v682 = vadd.f32 0.0, %v681
    %v683 = vpop.f32.mrf.mxu0
    %v684 = vadd.f32 0.0, %v683
    %v685 = vpop.f32.mrf.mxu0
    %v686 = vadd.f32 0.0, %v685
    %v687 = vpop.f32.mrf.mxu0
    %v688 = vadd.f32 0.0, %v687
    %689 = vmatprep.mubr.bf16.mxu0 0
    %690 = vmatmul.mubr.bf16.gmra.mxu0 %v105
    %v691 = vpop.f32.mrf.mxu0
    %v692 = vadd.f32 0.0, %v691
    %v693 = vpop.f32.mrf.mxu0
    %v694 = vadd.f32 0.0, %v693
    %v695 = vpop.f32.mrf.mxu0
    %v696 = vadd.f32 0.0, %v695
    %v697 = vpop.f32.mrf.mxu0
    %v698 = vadd.f32 0.0, %v697
    %699 = vmatprep.mubr.bf16.mxu0 0
    %700 = vmatmul.mubr.bf16.gmra.mxu0 %v108
    %v701 = vpop.f32.mrf.mxu0
    %v702 = vadd.f32 0.0, %v701
    %v703 = vpop.f32.mrf.mxu0
    %v704 = vadd.f32 0.0, %v703
    %v705 = vpop.f32.mrf.mxu0
    %v706 = vadd.f32 0.0, %v705
    %v707 = vpop.f32.mrf.mxu0
    %v708 = vadd.f32 0.0, %v707
    %709 = vmatprep.mubr.bf16.mxu0 0
    %710 = vmatmul.mubr.bf16.gmra.mxu0 %v111
    %v711 = vpop.f32.mrf.mxu0
    %v712 = vadd.f32 0.0, %v711
    %v713 = vpop.f32.mrf.mxu0
    %v714 = vadd.f32 0.0, %v713
    %v715 = vpop.f32.mrf.mxu0
    %v716 = vadd.f32 0.0, %v715
    %v717 = vpop.f32.mrf.mxu0
    %v718 = vadd.f32 0.0, %v717
    %719 = vmatprep.mubr.bf16.mxu0 0
    %720 = vmatmul.mubr.bf16.gmra.mxu0 %v114
    %v721 = vpop.f32.mrf.mxu0
    %v722 = vadd.f32 0.0, %v721
    %v723 = vpop.f32.mrf.mxu0
    %v724 = vadd.f32 0.0, %v723
    %v725 = vpop.f32.mrf.mxu0
    %v726 = vadd.f32 0.0, %v725
    %v727 = vpop.f32.mrf.mxu0
    %v728 = vadd.f32 0.0, %v727
    %729 = vdwg.mxu0
    %730 = vmatprep.subr.bf16.mxu0 0
    %731 = vmatpush1.bf16.msra.mxu0 0
    %732 = vmatprep.subr.bf16.mxu0 0
    %733 = vmatpush1.bf16.msra.mxu0 0
    %734 = vmatprep.subr.bf16.mxu0 0
    %735 = vmatpush1.bf16.msra.mxu0 0
    %736 = vmatprep.subr.bf16.mxu0 0
    %737 = vmatpush1.bf16.msra.mxu0 0
    %738 = vmatprep.subr.bf16.mxu0 0
    %739 = vmatpush1.bf16.msra.mxu0 0
    %740 = vmatprep.subr.bf16.mxu0 0
    %741 = vmatpush1.bf16.msra.mxu0 0
    %742 = vmatprep.subr.bf16.mxu0 0
    %743 = vmatpush1.bf16.msra.mxu0 0
    %744 = vmatprep.subr.bf16.mxu0 %v151
    %745 = vmatpush1.bf16.msra.mxu0 %v148
    %746 = vmatprep.subr.bf16.mxu0 0
    %747 = vmatpush2.bf16.msra.mxu0 0
    %748 = vmatprep.subr.bf16.mxu0 0
    %749 = vmatpush2.bf16.msra.mxu0 0
    %750 = vmatprep.subr.bf16.mxu0 0
    %751 = vmatpush2.bf16.msra.mxu0 0
    %752 = vmatprep.subr.bf16.mxu0 0
    %753 = vmatpush2.bf16.msra.mxu0 0
    %754 = vmatprep.subr.bf16.mxu0 0
    %755 = vmatpush2.bf16.msra.mxu0 0
    %756 = vmatprep.subr.bf16.mxu0 0
    %757 = vmatpush2.bf16.msra.mxu0 0
    %758 = vmatprep.subr.bf16.mxu0 0
    %759 = vmatpush2.bf16.msra.mxu0 0
    %760 = vmatprep.subr.bf16.mxu0 0
    %761 = vmatpush2.bf16.msra.mxu0 0
    %762 = vmatprep.mubr.bf16.mxu0 0
    %763 = vmatmul.mubr.bf16.gmra.mxu0 %v93
    %v764 = vpop.f32.mrf.mxu0
    %v765 = vadd.f32 0.0, %v764
    %v766 = vpop.f32.mrf.mxu0
    %v767 = vadd.f32 0.0, %v766
    %v768 = vpop.f32.mrf.mxu0
    %v769 = vadd.f32 0.0, %v768
    %v770 = vpop.f32.mrf.mxu0
    %v771 = vadd.f32 0.0, %v770
    %772 = vmatprep.mubr.bf16.mxu0 0
    %773 = vmatmul.mubr.bf16.gmra.mxu0 %v96
    %v774 = vpop.f32.mrf.mxu0
    %v775 = vadd.f32 0.0, %v774
    %v776 = vpop.f32.mrf.mxu0
    %v777 = vadd.f32 0.0, %v776
    %v778 = vpop.f32.mrf.mxu0
    %v779 = vadd.f32 0.0, %v778
    %v780 = vpop.f32.mrf.mxu0
    %v781 = vadd.f32 0.0, %v780
    %782 = vmatprep.mubr.bf16.mxu0 0
    %783 = vmatmul.mubr.bf16.gmra.mxu0 %v99
    %v784 = vpop.f32.mrf.mxu0
    %v785 = vadd.f32 0.0, %v784
    %v786 = vpop.f32.mrf.mxu0
    %v787 = vadd.f32 0.0, %v786
    %v788 = vpop.f32.mrf.mxu0
    %v789 = vadd.f32 0.0, %v788
    %v790 = vpop.f32.mrf.mxu0
    %v791 = vadd.f32 0.0, %v790
    %792 = vmatprep.mubr.bf16.mxu0 0
    %793 = vmatmul.mubr.bf16.gmra.mxu0 %v102
    %v794 = vpop.f32.mrf.mxu0
    %v795 = vadd.f32 0.0, %v794
    %v796 = vpop.f32.mrf.mxu0
    %v797 = vadd.f32 0.0, %v796
    %v798 = vpop.f32.mrf.mxu0
    %v799 = vadd.f32 0.0, %v798
    %v800 = vpop.f32.mrf.mxu0
    %v801 = vadd.f32 0.0, %v800
    %802 = vmatprep.mubr.bf16.mxu0 0
    %803 = vmatmul.mubr.bf16.gmra.mxu0 %v105
    %v804 = vpop.f32.mrf.mxu0
    %v805 = vadd.f32 0.0, %v804
    %v806 = vpop.f32.mrf.mxu0
    %v807 = vadd.f32 0.0, %v806
    %v808 = vpop.f32.mrf.mxu0
    %v809 = vadd.f32 0.0, %v808
    %v810 = vpop.f32.mrf.mxu0
    %v811 = vadd.f32 0.0, %v810
    %812 = vmatprep.mubr.bf16.mxu0 0
    %813 = vmatmul.mubr.bf16.gmra.mxu0 %v108
    %v814 = vpop.f32.mrf.mxu0
    %v815 = vadd.f32 0.0, %v814
    %v816 = vpop.f32.mrf.mxu0
    %v817 = vadd.f32 0.0, %v816
    %v818 = vpop.f32.mrf.mxu0
    %v819 = vadd.f32 0.0, %v818
    %v820 = vpop.f32.mrf.mxu0
    %v821 = vadd.f32 0.0, %v820
    %822 = vmatprep.mubr.bf16.mxu0 0
    %823 = vmatmul.mubr.bf16.gmra.mxu0 %v111
    %v824 = vpop.f32.mrf.mxu0
    %v825 = vadd.f32 0.0, %v824
    %v826 = vpop.f32.mrf.mxu0
    %v827 = vadd.f32 0.0, %v826
    %v828 = vpop.f32.mrf.mxu0
    %v829 = vadd.f32 0.0, %v828
    %v830 = vpop.f32.mrf.mxu0
    %v831 = vadd.f32 0.0, %v830
    %832 = vmatprep.mubr.bf16.mxu0 0
    %833 = vmatmul.mubr.bf16.gmra.mxu0 %v114
    %v834 = vpop.f32.mrf.mxu0
    %v835 = vadd.f32 0.0, %v834
    %v836 = vpop.f32.mrf.mxu0
    %v837 = vadd.f32 0.0, %v836
    %v838 = vpop.f32.mrf.mxu0
    %v839 = vadd.f32 0.0, %v838
    %v840 = vpop.f32.mrf.mxu0
    %v841 = vadd.f32 0.0, %v840
    %842 = vdwg.mxu0
    %843 = vmatprep.subr.bf16.mxu0 0
    %844 = vmatpush1.bf16.msra.mxu0 0
    %845 = vmatprep.subr.bf16.mxu0 0
    %846 = vmatpush1.bf16.msra.mxu0 0
    %847 = vmatprep.subr.bf16.mxu0 0
    %848 = vmatpush1.bf16.msra.mxu0 0
    %849 = vmatprep.subr.bf16.mxu0 0
    %850 = vmatpush1.bf16.msra.mxu0 0
    %851 = vmatprep.subr.bf16.mxu0 0
    %852 = vmatpush1.bf16.msra.mxu0 0
    %853 = vmatprep.subr.bf16.mxu0 0
    %854 = vmatpush1.bf16.msra.mxu0 0
    %855 = vmatprep.subr.bf16.mxu0 0
    %856 = vmatpush1.bf16.msra.mxu0 0
    %857 = vmatprep.subr.bf16.mxu0 %v157
    %858 = vmatpush1.bf16.msra.mxu0 %v154
    %859 = vmatprep.subr.bf16.mxu0 0
    %860 = vmatpush2.bf16.msra.mxu0 0
    %861 = vmatprep.subr.bf16.mxu0 0
    %862 = vmatpush2.bf16.msra.mxu0 0
    %863 = vmatprep.subr.bf16.mxu0 0
    %864 = vmatpush2.bf16.msra.mxu0 0
    %865 = vmatprep.subr.bf16.mxu0 0
    %866 = vmatpush2.bf16.msra.mxu0 0
    %867 = vmatprep.subr.bf16.mxu0 0
    %868 = vmatpush2.bf16.msra.mxu0 0
    %869 = vmatprep.subr.bf16.mxu0 0
    %870 = vmatpush2.bf16.msra.mxu0 0
    %871 = vmatprep.subr.bf16.mxu0 0
    %872 = vmatpush2.bf16.msra.mxu0 0
    %873 = vmatprep.subr.bf16.mxu0 0
    %874 = vmatpush2.bf16.msra.mxu0 0
    %875 = vmatprep.mubr.bf16.mxu0 0
    %876 = vmatmul.mubr.bf16.gmra.mxu0 %v93
    %v877 = vpop.f32.mrf.mxu0
    %v878 = vadd.f32 0.0, %v877
    %v879 = vpop.f32.mrf.mxu0
    %v880 = vadd.f32 0.0, %v879
    %v881 = vpop.f32.mrf.mxu0
    %v882 = vadd.f32 0.0, %v881
    %v883 = vpop.f32.mrf.mxu0
    %v884 = vadd.f32 0.0, %v883
    %885 = vmatprep.mubr.bf16.mxu0 0
    %886 = vmatmul.mubr.bf16.gmra.mxu0 %v96
    %v887 = vpop.f32.mrf.mxu0
    %v888 = vadd.f32 0.0, %v887
    %v889 = vpop.f32.mrf.mxu0
    %v890 = vadd.f32 0.0, %v889
    %v891 = vpop.f32.mrf.mxu0
    %v892 = vadd.f32 0.0, %v891
    %v893 = vpop.f32.mrf.mxu0
    %v894 = vadd.f32 0.0, %v893
    %895 = vmatprep.mubr.bf16.mxu0 0
    %896 = vmatmul.mubr.bf16.gmra.mxu0 %v99
    %v897 = vpop.f32.mrf.mxu0
    %v898 = vadd.f32 0.0, %v897
    %v899 = vpop.f32.mrf.mxu0
    %v900 = vadd.f32 0.0, %v899
    %v901 = vpop.f32.mrf.mxu0
    %v902 = vadd.f32 0.0, %v901
    %v903 = vpop.f32.mrf.mxu0
    %v904 = vadd.f32 0.0, %v903
    %905 = vmatprep.mubr.bf16.mxu0 0
    %906 = vmatmul.mubr.bf16.gmra.mxu0 %v102
    %v907 = vpop.f32.mrf.mxu0
    %v908 = vadd.f32 0.0, %v907
    %v909 = vpop.f32.mrf.mxu0
    %v910 = vadd.f32 0.0, %v909
    %v911 = vpop.f32.mrf.mxu0
    %v912 = vadd.f32 0.0, %v911
    %v913 = vpop.f32.mrf.mxu0
    %v914 = vadd.f32 0.0, %v913
    %915 = vmatprep.mubr.bf16.mxu0 0
    %916 = vmatmul.mubr.bf16.gmra.mxu0 %v105
    %v917 = vpop.f32.mrf.mxu0
    %v918 = vadd.f32 0.0, %v917
    %v919 = vpop.f32.mrf.mxu0
    %v920 = vadd.f32 0.0, %v919
    %v921 = vpop.f32.mrf.mxu0
    %v922 = vadd.f32 0.0, %v921
    %v923 = vpop.f32.mrf.mxu0
    %v924 = vadd.f32 0.0, %v923
    %925 = vmatprep.mubr.bf16.mxu0 0
    %926 = vmatmul.mubr.bf16.gmra.mxu0 %v108
    %v927 = vpop.f32.mrf.mxu0
    %v928 = vadd.f32 0.0, %v927
    %v929 = vpop.f32.mrf.mxu0
    %v930 = vadd.f32 0.0, %v929
    %v931 = vpop.f32.mrf.mxu0
    %v932 = vadd.f32 0.0, %v931
    %v933 = vpop.f32.mrf.mxu0
    %v934 = vadd.f32 0.0, %v933
    %935 = vmatprep.mubr.bf16.mxu0 0
    %936 = vmatmul.mubr.bf16.gmra.mxu0 %v111
    %v937 = vpop.f32.mrf.mxu0
    %v938 = vadd.f32 0.0, %v937
    %v939 = vpop.f32.mrf.mxu0
    %v940 = vadd.f32 0.0, %v939
    %v941 = vpop.f32.mrf.mxu0
    %v942 = vadd.f32 0.0, %v941
    %v943 = vpop.f32.mrf.mxu0
    %v944 = vadd.f32 0.0, %v943
    %945 = vmatprep.mubr.bf16.mxu0 0
    %946 = vmatmul.mubr.bf16.gmra.mxu0 %v114
    %v947 = vpop.f32.mrf.mxu0
    %v948 = vadd.f32 0.0, %v947
    %v949 = vpop.f32.mrf.mxu0
    %v950 = vadd.f32 0.0, %v949
    %v951 = vpop.f32.mrf.mxu0
    %v952 = vadd.f32 0.0, %v951
    %v953 = vpop.f32.mrf.mxu0
    %v954 = vadd.f32 0.0, %v953
    %955 = vdwg.mxu0
    %956 = vmatprep.subr.bf16.mxu0 0
    %957 = vmatpush1.bf16.msra.mxu0 0
    %958 = vmatprep.subr.bf16.mxu0 0
    %959 = vmatpush1.bf16.msra.mxu0 0
    %960 = vmatprep.subr.bf16.mxu0 0
    %961 = vmatpush1.bf16.msra.mxu0 0
    %962 = vmatprep.subr.bf16.mxu0 0
    %963 = vmatpush1.bf16.msra.mxu0 0
    %964 = vmatprep.subr.bf16.mxu0 0
    %965 = vmatpush1.bf16.msra.mxu0 0
    %966 = vmatprep.subr.bf16.mxu0 0
    %967 = vmatpush1.bf16.msra.mxu0 0
    %968 = vmatprep.subr.bf16.mxu0 0
    %969 = vmatpush1.bf16.msra.mxu0 0
    %970 = vmatprep.subr.bf16.mxu0 %v163
    %971 = vmatpush1.bf16.msra.mxu0 %v160
    %972 = vmatprep.subr.bf16.mxu0 0
    %973 = vmatpush2.bf16.msra.mxu0 0
    %974 = vmatprep.subr.bf16.mxu0 0
    %975 = vmatpush2.bf16.msra.mxu0 0
    %976 = vmatprep.subr.bf16.mxu0 0
    %977 = vmatpush2.bf16.msra.mxu0 0
    %978 = vmatprep.subr.bf16.mxu0 0
    %979 = vmatpush2.bf16.msra.mxu0 0
    %980 = vmatprep.subr.bf16.mxu0 0
    %981 = vmatpush2.bf16.msra.mxu0 0
    %982 = vmatprep.subr.bf16.mxu0 0
    %983 = vmatpush2.bf16.msra.mxu0 0
    %984 = vmatprep.subr.bf16.mxu0 0
    %985 = vmatpush2.bf16.msra.mxu0 0
    %986 = vmatprep.subr.bf16.mxu0 0
    %987 = vmatpush2.bf16.msra.mxu0 0
    %988 = vmatprep.mubr.bf16.mxu0 0
    %989 = vmatmul.mubr.bf16.gmra.mxu0 %v93
    %v990 = vpop.f32.mrf.mxu0
    %v991 = vadd.f32 0.0, %v990
    %v992 = vpop.f32.mrf.mxu0
    %v993 = vadd.f32 0.0, %v992
    %v994 = vpop.f32.mrf.mxu0
    %v995 = vadd.f32 0.0, %v994
    %v996 = vpop.f32.mrf.mxu0
    %v997 = vadd.f32 0.0, %v996
    %998 = vmatprep.mubr.bf16.mxu0 0
    %999 = vmatmul.mubr.bf16.gmra.mxu0 %v96
    %v1000 = vpop.f32.mrf.mxu0
    %v1001 = vadd.f32 0.0, %v1000
    %v1002 = vpop.f32.mrf.mxu0
    %v1003 = vadd.f32 0.0, %v1002
    %v1004 = vpop.f32.mrf.mxu0
    %v1005 = vadd.f32 0.0, %v1004
    %v1006 = vpop.f32.mrf.mxu0
    %v1007 = vadd.f32 0.0, %v1006
    %1008 = vmatprep.mubr.bf16.mxu0 0
    %1009 = vmatmul.mubr.bf16.gmra.mxu0 %v99
    %v1010 = vpop.f32.mrf.mxu0
    %v1011 = vadd.f32 0.0, %v1010
    %v1012 = vpop.f32.mrf.mxu0
    %v1013 = vadd.f32 0.0, %v1012
    %v1014 = vpop.f32.mrf.mxu0
    %v1015 = vadd.f32 0.0, %v1014
    %v1016 = vpop.f32.mrf.mxu0
    %v1017 = vadd.f32 0.0, %v1016
    %1018 = vmatprep.mubr.bf16.mxu0 0
    %1019 = vmatmul.mubr.bf16.gmra.mxu0 %v102
    %v1020 = vpop.f32.mrf.mxu0
    %v1021 = vadd.f32 0.0, %v1020
    %v1022 = vpop.f32.mrf.mxu0
    %v1023 = vadd.f32 0.0, %v1022
    %v1024 = vpop.f32.mrf.mxu0
    %v1025 = vadd.f32 0.0, %v1024
    %v1026 = vpop.f32.mrf.mxu0
    %v1027 = vadd.f32 0.0, %v1026
    %1028 = vmatprep.mubr.bf16.mxu0 0
    %1029 = vmatmul.mubr.bf16.gmra.mxu0 %v105
    %v1030 = vpop.f32.mrf.mxu0
    %v1031 = vadd.f32 0.0, %v1030
    %v1032 = vpop.f32.mrf.mxu0
    %v1033 = vadd.f32 0.0, %v1032
    %v1034 = vpop.f32.mrf.mxu0
    %v1035 = vadd.f32 0.0, %v1034
    %v1036 = vpop.f32.mrf.mxu0
    %v1037 = vadd.f32 0.0, %v1036
    %1038 = vmatprep.mubr.bf16.mxu0 0
    %1039 = vmatmul.mubr.bf16.gmra.mxu0 %v108
    %v1040 = vpop.f32.mrf.mxu0
    %v1041 = vadd.f32 0.0, %v1040
    %v1042 = vpop.f32.mrf.mxu0
    %v1043 = vadd.f32 0.0, %v1042
    %v1044 = vpop.f32.mrf.mxu0
    %v1045 = vadd.f32 0.0, %v1044
    %v1046 = vpop.f32.mrf.mxu0
    %v1047 = vadd.f32 0.0, %v1046
    %1048 = vmatprep.mubr.bf16.mxu0 0
    %1049 = vmatmul.mubr.bf16.gmra.mxu0 %v111
    %v1050 = vpop.f32.mrf.mxu0
    %v1051 = vadd.f32 0.0, %v1050
    %v1052 = vpop.f32.mrf.mxu0
    %v1053 = vadd.f32 0.0, %v1052
    %v1054 = vpop.f32.mrf.mxu0
    %v1055 = vadd.f32 0.0, %v1054
    %v1056 = vpop.f32.mrf.mxu0
    %v1057 = vadd.f32 0.0, %v1056
    %1058 = vmatprep.mubr.bf16.mxu0 0
    %1059 = vmatmul.mubr.bf16.gmra.mxu0 %v114
    %v1060 = vpop.f32.mrf.mxu0
    %v1061 = vadd.f32 0.0, %v1060
    %v1062 = vpop.f32.mrf.mxu0
    %v1063 = vadd.f32 0.0, %v1062
    %v1064 = vpop.f32.mrf.mxu0
    %v1065 = vadd.f32 0.0, %v1064
    %v1066 = vpop.f32.mrf.mxu0
    %v1067 = vadd.f32 0.0, %v1066
    %1068 = vdwg.mxu0
    %v1069 = vpack.c.bf16 %v204, %v200
    %v1070 = vpack.c.bf16 %v206, %v202
    %v1071 = vpack.c.bf16 %v317, %v313
    %v1072 = vpack.c.bf16 %v319, %v315
    %v1073 = vpack.c.bf16 %v430, %v426
    %v1074 = vpack.c.bf16 %v432, %v428
    %v1075 = vpack.c.bf16 %v543, %v539
    %v1076 = vpack.c.bf16 %v545, %v541
    %v1077 = vpack.c.bf16 %v656, %v652
    %v1078 = vpack.c.bf16 %v658, %v654
    %v1079 = vpack.c.bf16 %v769, %v765
    %v1080 = vpack.c.bf16 %v771, %v767
    %v1081 = vpack.c.bf16 %v882, %v878
    %v1082 = vpack.c.bf16 %v884, %v880
    %v1083 = vpack.c.bf16 %v995, %v991
    %v1084 = vpack.c.bf16 %v997, %v993
    %v1085 = vpack.c.bf16 %v214, %v210
    %v1086 = vpack.c.bf16 %v216, %v212
    %v1087 = vpack.c.bf16 %v327, %v323
    %v1088 = vpack.c.bf16 %v329, %v325
    %v1089 = vpack.c.bf16 %v440, %v436
    %v1090 = vpack.c.bf16 %v442, %v438
    %v1091 = vpack.c.bf16 %v553, %v549
    %v1092 = vpack.c.bf16 %v555, %v551
    %v1093 = vpack.c.bf16 %v666, %v662
    %v1094 = vpack.c.bf16 %v668, %v664
    %v1095 = vpack.c.bf16 %v779, %v775
    %v1096 = vpack.c.bf16 %v781, %v777
    %v1097 = vpack.c.bf16 %v892, %v888
    %v1098 = vpack.c.bf16 %v894, %v890
    %v1099 = vpack.c.bf16 %v1005, %v1001
    %v1100 = vpack.c.bf16 %v1007, %v1003
    %v1101 = vpack.c.bf16 %v224, %v220
    %v1102 = vpack.c.bf16 %v226, %v222
    %v1103 = vpack.c.bf16 %v337, %v333
    %v1104 = vpack.c.bf16 %v339, %v335
    %v1105 = vpack.c.bf16 %v450, %v446
    %v1106 = vpack.c.bf16 %v452, %v448
    %v1107 = vpack.c.bf16 %v563, %v559
    %v1108 = vpack.c.bf16 %v565, %v561
    %v1109 = vpack.c.bf16 %v676, %v672
    %v1110 = vpack.c.bf16 %v678, %v674
    %v1111 = vpack.c.bf16 %v789, %v785
    %v1112 = vpack.c.bf16 %v791, %v787
    %v1113 = vpack.c.bf16 %v902, %v898
    %v1114 = vpack.c.bf16 %v904, %v900
    %v1115 = vpack.c.bf16 %v1015, %v1011
    %v1116 = vpack.c.bf16 %v1017, %v1013
    %v1117 = vpack.c.bf16 %v234, %v230
    %v1118 = vpack.c.bf16 %v236, %v232
    %v1119 = vpack.c.bf16 %v347, %v343
    %v1120 = vpack.c.bf16 %v349, %v345
    %v1121 = vpack.c.bf16 %v460, %v456
    %v1122 = vpack.c.bf16 %v462, %v458
    %v1123 = vpack.c.bf16 %v573, %v569
    %v1124 = vpack.c.bf16 %v575, %v571
    %v1125 = vpack.c.bf16 %v686, %v682
    %v1126 = vpack.c.bf16 %v688, %v684
    %v1127 = vpack.c.bf16 %v799, %v795
    %v1128 = vpack.c.bf16 %v801, %v797
    %v1129 = vpack.c.bf16 %v912, %v908
    %v1130 = vpack.c.bf16 %v914, %v910
    %v1131 = vpack.c.bf16 %v1025, %v1021
    %v1132 = vpack.c.bf16 %v1027, %v1023
    %v1133 = vpack.c.bf16 %v244, %v240
    %v1134 = vpack.c.bf16 %v246, %v242
    %v1135 = vpack.c.bf16 %v357, %v353
    %v1136 = vpack.c.bf16 %v359, %v355
    %v1137 = vpack.c.bf16 %v470, %v466
    %v1138 = vpack.c.bf16 %v472, %v468
    %v1139 = vpack.c.bf16 %v583, %v579
    %v1140 = vpack.c.bf16 %v585, %v581
    %v1141 = vpack.c.bf16 %v696, %v692
    %v1142 = vpack.c.bf16 %v698, %v694
    %v1143 = vpack.c.bf16 %v809, %v805
    %v1144 = vpack.c.bf16 %v811, %v807
    %v1145 = vpack.c.bf16 %v922, %v918
    %v1146 = vpack.c.bf16 %v924, %v920
    %v1147 = vpack.c.bf16 %v1035, %v1031
    %v1148 = vpack.c.bf16 %v1037, %v1033
    %v1149 = vpack.c.bf16 %v254, %v250
    %v1150 = vpack.c.bf16 %v256, %v252
    %v1151 = vpack.c.bf16 %v367, %v363
    %v1152 = vpack.c.bf16 %v369, %v365
    %v1153 = vpack.c.bf16 %v480, %v476
    %v1154 = vpack.c.bf16 %v482, %v478
    %v1155 = vpack.c.bf16 %v593, %v589
    %v1156 = vpack.c.bf16 %v595, %v591
    %v1157 = vpack.c.bf16 %v706, %v702
    %v1158 = vpack.c.bf16 %v708, %v704
    %v1159 = vpack.c.bf16 %v819, %v815
    %v1160 = vpack.c.bf16 %v821, %v817
    %v1161 = vpack.c.bf16 %v932, %v928
    %v1162 = vpack.c.bf16 %v934, %v930
    %v1163 = vpack.c.bf16 %v1045, %v1041
    %v1164 = vpack.c.bf16 %v1047, %v1043
    %v1165 = vpack.c.bf16 %v264, %v260
    %v1166 = vpack.c.bf16 %v266, %v262
    %v1167 = vpack.c.bf16 %v377, %v373
    %v1168 = vpack.c.bf16 %v379, %v375
    %v1169 = vpack.c.bf16 %v490, %v486
    %v1170 = vpack.c.bf16 %v492, %v488
    %v1171 = vpack.c.bf16 %v603, %v599
    %v1172 = vpack.c.bf16 %v605, %v601
    %v1173 = vpack.c.bf16 %v716, %v712
    %v1174 = vpack.c.bf16 %v718, %v714
    %v1175 = vpack.c.bf16 %v829, %v825
    %v1176 = vpack.c.bf16 %v831, %v827
    %v1177 = vpack.c.bf16 %v942, %v938
    %v1178 = vpack.c.bf16 %v944, %v940
    %v1179 = vpack.c.bf16 %v1055, %v1051
    %v1180 = vpack.c.bf16 %v1057, %v1053
    %v1181 = vpack.c.bf16 %v274, %v270
    %v1182 = vpack.c.bf16 %v276, %v272
    %v1183 = vpack.c.bf16 %v387, %v383
    %v1184 = vpack.c.bf16 %v389, %v385
    %v1185 = vpack.c.bf16 %v500, %v496
    %v1186 = vpack.c.bf16 %v502, %v498
    %v1187 = vpack.c.bf16 %v613, %v609
    %v1188 = vpack.c.bf16 %v615, %v611
    %v1189 = vpack.c.bf16 %v726, %v722
    %v1190 = vpack.c.bf16 %v728, %v724
    %v1191 = vpack.c.bf16 %v839, %v835
    %v1192 = vpack.c.bf16 %v841, %v837
    %v1193 = vpack.c.bf16 %v952, %v948
    %v1194 = vpack.c.bf16 %v954, %v950
    %v1195 = vpack.c.bf16 %v1065, %v1061
    %v1196 = vpack.c.bf16 %v1067, %v1063
    %v1325 = vunpack.c.l.b16 %v1069
    %v1326 = vunpack.c.l.b16 %v1070
    %v1327 = vunpack.c.l.b16 %v1071
    %v1328 = vunpack.c.l.b16 %v1072
    %v1329 = vunpack.c.l.b16 %v1073
    %v1330 = vunpack.c.l.b16 %v1074
    %v1331 = vunpack.c.l.b16 %v1075
    %v1332 = vunpack.c.l.b16 %v1076
    %v1333 = vunpack.c.l.b16 %v1077
    %v1334 = vunpack.c.l.b16 %v1078
    %v1335 = vunpack.c.l.b16 %v1079
    %v1336 = vunpack.c.l.b16 %v1080
    %v1337 = vunpack.c.l.b16 %v1081
    %v1338 = vunpack.c.l.b16 %v1082
    %v1339 = vunpack.c.l.b16 %v1083
    %v1340 = vunpack.c.l.b16 %v1084
    %v1341 = vunpack.c.h.b16 %v1069
    %v1342 = vunpack.c.h.b16 %v1070
    %v1343 = vunpack.c.h.b16 %v1071
    %v1344 = vunpack.c.h.b16 %v1072
    %v1345 = vunpack.c.h.b16 %v1073
    %v1346 = vunpack.c.h.b16 %v1074
    %v1347 = vunpack.c.h.b16 %v1075
    %v1348 = vunpack.c.h.b16 %v1076
    %v1349 = vunpack.c.h.b16 %v1077
    %v1350 = vunpack.c.h.b16 %v1078
    %v1351 = vunpack.c.h.b16 %v1079
    %v1352 = vunpack.c.h.b16 %v1080
    %v1353 = vunpack.c.h.b16 %v1081
    %v1354 = vunpack.c.h.b16 %v1082
    %v1355 = vunpack.c.h.b16 %v1083
    %v1356 = vunpack.c.h.b16 %v1084
    %v1357 = vunpack.c.l.b16 %v1085
    %v1358 = vunpack.c.l.b16 %v1086
    %v1359 = vunpack.c.l.b16 %v1087
    %v1360 = vunpack.c.l.b16 %v1088
    %v1361 = vunpack.c.l.b16 %v1089
    %v1362 = vunpack.c.l.b16 %v1090
    %v1363 = vunpack.c.l.b16 %v1091
    %v1364 = vunpack.c.l.b16 %v1092
    %v1365 = vunpack.c.l.b16 %v1093
    %v1366 = vunpack.c.l.b16 %v1094
    %v1367 = vunpack.c.l.b16 %v1095
    %v1368 = vunpack.c.l.b16 %v1096
    %v1369 = vunpack.c.l.b16 %v1097
    %v1370 = vunpack.c.l.b16 %v1098
    %v1371 = vunpack.c.l.b16 %v1099
    %v1372 = vunpack.c.l.b16 %v1100
    %v1373 = vunpack.c.h.b16 %v1085
    %v1374 = vunpack.c.h.b16 %v1086
    %v1375 = vunpack.c.h.b16 %v1087
    %v1376 = vunpack.c.h.b16 %v1088
    %v1377 = vunpack.c.h.b16 %v1089
    %v1378 = vunpack.c.h.b16 %v1090
    %v1379 = vunpack.c.h.b16 %v1091
    %v1380 = vunpack.c.h.b16 %v1092
    %v1381 = vunpack.c.h.b16 %v1093
    %v1382 = vunpack.c.h.b16 %v1094
    %v1383 = vunpack.c.h.b16 %v1095
    %v1384 = vunpack.c.h.b16 %v1096
    %v1385 = vunpack.c.h.b16 %v1097
    %v1386 = vunpack.c.h.b16 %v1098
    %v1387 = vunpack.c.h.b16 %v1099
    %v1388 = vunpack.c.h.b16 %v1100
    %v1389 = vunpack.c.l.b16 %v1101
    %v1390 = vunpack.c.l.b16 %v1102
    %v1391 = vunpack.c.l.b16 %v1103
    %v1392 = vunpack.c.l.b16 %v1104
    %v1393 = vunpack.c.l.b16 %v1105
    %v1394 = vunpack.c.l.b16 %v1106
    %v1395 = vunpack.c.l.b16 %v1107
    %v1396 = vunpack.c.l.b16 %v1108
    %v1397 = vunpack.c.l.b16 %v1109
    %v1398 = vunpack.c.l.b16 %v1110
    %v1399 = vunpack.c.l.b16 %v1111
    %v1400 = vunpack.c.l.b16 %v1112
    %v1401 = vunpack.c.l.b16 %v1113
    %v1402 = vunpack.c.l.b16 %v1114
    %v1403 = vunpack.c.l.b16 %v1115
    %v1404 = vunpack.c.l.b16 %v1116
    %v1405 = vunpack.c.h.b16 %v1101
    %v1406 = vunpack.c.h.b16 %v1102
    %v1407 = vunpack.c.h.b16 %v1103
    %v1408 = vunpack.c.h.b16 %v1104
    %v1409 = vunpack.c.h.b16 %v1105
    %v1410 = vunpack.c.h.b16 %v1106
    %v1411 = vunpack.c.h.b16 %v1107
    %v1412 = vunpack.c.h.b16 %v1108
    %v1413 = vunpack.c.h.b16 %v1109
    %v1414 = vunpack.c.h.b16 %v1110
    %v1415 = vunpack.c.h.b16 %v1111
    %v1416 = vunpack.c.h.b16 %v1112
    %v1417 = vunpack.c.h.b16 %v1113
    %v1418 = vunpack.c.h.b16 %v1114
    %v1419 = vunpack.c.h.b16 %v1115
    %v1420 = vunpack.c.h.b16 %v1116
    %v1421 = vunpack.c.l.b16 %v1117
    %v1422 = vunpack.c.l.b16 %v1118
    %v1423 = vunpack.c.l.b16 %v1119
    %v1424 = vunpack.c.l.b16 %v1120
    %v1425 = vunpack.c.l.b16 %v1121
    %v1426 = vunpack.c.l.b16 %v1122
    %v1427 = vunpack.c.l.b16 %v1123
    %v1428 = vunpack.c.l.b16 %v1124
    %v1429 = vunpack.c.l.b16 %v1125
    %v1430 = vunpack.c.l.b16 %v1126
    %v1431 = vunpack.c.l.b16 %v1127
    %v1432 = vunpack.c.l.b16 %v1128
    %v1433 = vunpack.c.l.b16 %v1129
    %v1434 = vunpack.c.l.b16 %v1130
    %v1435 = vunpack.c.l.b16 %v1131
    %v1436 = vunpack.c.l.b16 %v1132
    %v1437 = vunpack.c.h.b16 %v1117
    %v1438 = vunpack.c.h.b16 %v1118
    %v1439 = vunpack.c.h.b16 %v1119
    %v1440 = vunpack.c.h.b16 %v1120
    %v1441 = vunpack.c.h.b16 %v1121
    %v1442 = vunpack.c.h.b16 %v1122
    %v1443 = vunpack.c.h.b16 %v1123
    %v1444 = vunpack.c.h.b16 %v1124
    %v1445 = vunpack.c.h.b16 %v1125
    %v1446 = vunpack.c.h.b16 %v1126
    %v1447 = vunpack.c.h.b16 %v1127
    %v1448 = vunpack.c.h.b16 %v1128
    %v1449 = vunpack.c.h.b16 %v1129
    %v1450 = vunpack.c.h.b16 %v1130
    %v1451 = vunpack.c.h.b16 %v1131
    %v1452 = vunpack.c.h.b16 %v1132
    %v1453 = vunpack.c.l.b16 %v1133
    %v1454 = vunpack.c.l.b16 %v1134
    %v1455 = vunpack.c.l.b16 %v1135
    %v1456 = vunpack.c.l.b16 %v1136
    %v1457 = vunpack.c.l.b16 %v1137
    %v1458 = vunpack.c.l.b16 %v1138
    %v1459 = vunpack.c.l.b16 %v1139
    %v1460 = vunpack.c.l.b16 %v1140
    %v1461 = vunpack.c.l.b16 %v1141
    %v1462 = vunpack.c.l.b16 %v1142
    %v1463 = vunpack.c.l.b16 %v1143
    %v1464 = vunpack.c.l.b16 %v1144
    %v1465 = vunpack.c.l.b16 %v1145
    %v1466 = vunpack.c.l.b16 %v1146
    %v1467 = vunpack.c.l.b16 %v1147
    %v1468 = vunpack.c.l.b16 %v1148
    %v1469 = vunpack.c.h.b16 %v1133
    %v1470 = vunpack.c.h.b16 %v1134
    %v1471 = vunpack.c.h.b16 %v1135
    %v1472 = vunpack.c.h.b16 %v1136
    %v1473 = vunpack.c.h.b16 %v1137
    %v1474 = vunpack.c.h.b16 %v1138
    %v1475 = vunpack.c.h.b16 %v1139
    %v1476 = vunpack.c.h.b16 %v1140
    %v1477 = vunpack.c.h.b16 %v1141
    %v1478 = vunpack.c.h.b16 %v1142
    %v1479 = vunpack.c.h.b16 %v1143
    %v1480 = vunpack.c.h.b16 %v1144
    %v1481 = vunpack.c.h.b16 %v1145
    %v1482 = vunpack.c.h.b16 %v1146
    %v1483 = vunpack.c.h.b16 %v1147
    %v1484 = vunpack.c.h.b16 %v1148
    %v1485 = vunpack.c.l.b16 %v1149
    %v1486 = vunpack.c.l.b16 %v1150
    %v1487 = vunpack.c.l.b16 %v1151
    %v1488 = vunpack.c.l.b16 %v1152
    %v1489 = vunpack.c.l.b16 %v1153
    %v1490 = vunpack.c.l.b16 %v1154
    %v1491 = vunpack.c.l.b16 %v1155
    %v1492 = vunpack.c.l.b16 %v1156
    %v1493 = vunpack.c.l.b16 %v1157
    %v1494 = vunpack.c.l.b16 %v1158
    %v1495 = vunpack.c.l.b16 %v1159
    %v1496 = vunpack.c.l.b16 %v1160
    %v1497 = vunpack.c.l.b16 %v1161
    %v1498 = vunpack.c.l.b16 %v1162
    %v1499 = vunpack.c.l.b16 %v1163
    %v1500 = vunpack.c.l.b16 %v1164
    %v1501 = vunpack.c.h.b16 %v1149
    %v1502 = vunpack.c.h.b16 %v1150
    %v1503 = vunpack.c.h.b16 %v1151
    %v1504 = vunpack.c.h.b16 %v1152
    %v1505 = vunpack.c.h.b16 %v1153
    %v1506 = vunpack.c.h.b16 %v1154
    %v1507 = vunpack.c.h.b16 %v1155
    %v1508 = vunpack.c.h.b16 %v1156
    %v1509 = vunpack.c.h.b16 %v1157
    %v1510 = vunpack.c.h.b16 %v1158
    %v1511 = vunpack.c.h.b16 %v1159
    %v1512 = vunpack.c.h.b16 %v1160
    %v1513 = vunpack.c.h.b16 %v1161
    %v1514 = vunpack.c.h.b16 %v1162
    %v1515 = vunpack.c.h.b16 %v1163
    %v1516 = vunpack.c.h.b16 %v1164
    %v1517 = vunpack.c.l.b16 %v1165
    %v1518 = vunpack.c.l.b16 %v1166
    %v1519 = vunpack.c.l.b16 %v1167
    %v1520 = vunpack.c.l.b16 %v1168
    %v1521 = vunpack.c.l.b16 %v1169
    %v1522 = vunpack.c.l.b16 %v1170
    %v1523 = vunpack.c.l.b16 %v1171
    %v1524 = vunpack.c.l.b16 %v1172
    %v1525 = vunpack.c.l.b16 %v1173
    %v1526 = vunpack.c.l.b16 %v1174
    %v1527 = vunpack.c.l.b16 %v1175
    %v1528 = vunpack.c.l.b16 %v1176
    %v1529 = vunpack.c.l.b16 %v1177
    %v1530 = vunpack.c.l.b16 %v1178
    %v1531 = vunpack.c.l.b16 %v1179
    %v1532 = vunpack.c.l.b16 %v1180
    %v1533 = vunpack.c.h.b16 %v1165
    %v1534 = vunpack.c.h.b16 %v1166
    %v1535 = vunpack.c.h.b16 %v1167
    %v1536 = vunpack.c.h.b16 %v1168
    %v1537 = vunpack.c.h.b16 %v1169
    %v1538 = vunpack.c.h.b16 %v1170
    %v1539 = vunpack.c.h.b16 %v1171
    %v1540 = vunpack.c.h.b16 %v1172
    %v1541 = vunpack.c.h.b16 %v1173
    %v1542 = vunpack.c.h.b16 %v1174
    %v1543 = vunpack.c.h.b16 %v1175
    %v1544 = vunpack.c.h.b16 %v1176
    %v1545 = vunpack.c.h.b16 %v1177
    %v1546 = vunpack.c.h.b16 %v1178
    %v1547 = vunpack.c.h.b16 %v1179
    %v1548 = vunpack.c.h.b16 %v1180
    %v1549 = vunpack.c.l.b16 %v1181
    %v1550 = vunpack.c.l.b16 %v1182
    %v1551 = vunpack.c.l.b16 %v1183
    %v1552 = vunpack.c.l.b16 %v1184
    %v1553 = vunpack.c.l.b16 %v1185
    %v1554 = vunpack.c.l.b16 %v1186
    %v1555 = vunpack.c.l.b16 %v1187
    %v1556 = vunpack.c.l.b16 %v1188
    %v1557 = vunpack.c.l.b16 %v1189
    %v1558 = vunpack.c.l.b16 %v1190
    %v1559 = vunpack.c.l.b16 %v1191
    %v1560 = vunpack.c.l.b16 %v1192
    %v1561 = vunpack.c.l.b16 %v1193
    %v1562 = vunpack.c.l.b16 %v1194
    %v1563 = vunpack.c.l.b16 %v1195
    %v1564 = vunpack.c.l.b16 %v1196
    %v1565 = vunpack.c.h.b16 %v1181
    %v1566 = vunpack.c.h.b16 %v1182
    %v1567 = vunpack.c.h.b16 %v1183
    %v1568 = vunpack.c.h.b16 %v1184
    %v1569 = vunpack.c.h.b16 %v1185
    %v1570 = vunpack.c.h.b16 %v1186
    %v1571 = vunpack.c.h.b16 %v1187
    %v1572 = vunpack.c.h.b16 %v1188
    %v1573 = vunpack.c.h.b16 %v1189
    %v1574 = vunpack.c.h.b16 %v1190
    %v1575 = vunpack.c.h.b16 %v1191
    %v1576 = vunpack.c.h.b16 %v1192
    %v1577 = vunpack.c.h.b16 %v1193
    %v1578 = vunpack.c.h.b16 %v1194
    %v1579 = vunpack.c.h.b16 %v1195
    %v1580 = vunpack.c.h.b16 %v1196
    %v1581 = vpack.c.b16 %v1326, %v1325
    %v1582 = vpack.c.b16 %v1328, %v1327
    %v1583 = vpack.c.b16 %v1330, %v1329
    %v1584 = vpack.c.b16 %v1332, %v1331
    %v1585 = vpack.c.b16 %v1334, %v1333
    %v1586 = vpack.c.b16 %v1336, %v1335
    %v1587 = vpack.c.b16 %v1338, %v1337
    %v1588 = vpack.c.b16 %v1340, %v1339
    %v1589 = vpack.c.b16 %v1342, %v1341
    %v1590 = vpack.c.b16 %v1344, %v1343
    %v1591 = vpack.c.b16 %v1346, %v1345
    %v1592 = vpack.c.b16 %v1348, %v1347
    %v1593 = vpack.c.b16 %v1350, %v1349
    %v1594 = vpack.c.b16 %v1352, %v1351
    %v1595 = vpack.c.b16 %v1354, %v1353
    %v1596 = vpack.c.b16 %v1356, %v1355
    %v1597 = vpack.c.b16 %v1358, %v1357
    %v1598 = vpack.c.b16 %v1360, %v1359
    %v1599 = vpack.c.b16 %v1362, %v1361
    %v1600 = vpack.c.b16 %v1364, %v1363
    %v1601 = vpack.c.b16 %v1366, %v1365
    %v1602 = vpack.c.b16 %v1368, %v1367
    %v1603 = vpack.c.b16 %v1370, %v1369
    %v1604 = vpack.c.b16 %v1372, %v1371
    %v1605 = vpack.c.b16 %v1374, %v1373
    %v1606 = vpack.c.b16 %v1376, %v1375
    %v1607 = vpack.c.b16 %v1378, %v1377
    %v1608 = vpack.c.b16 %v1380, %v1379
    %v1609 = vpack.c.b16 %v1382, %v1381
    %v1610 = vpack.c.b16 %v1384, %v1383
    %v1611 = vpack.c.b16 %v1386, %v1385
    %v1612 = vpack.c.b16 %v1388, %v1387
    %v1613 = vpack.c.b16 %v1390, %v1389
    %v1614 = vpack.c.b16 %v1392, %v1391
    %v1615 = vpack.c.b16 %v1394, %v1393
    %v1616 = vpack.c.b16 %v1396, %v1395
    %v1617 = vpack.c.b16 %v1398, %v1397
    %v1618 = vpack.c.b16 %v1400, %v1399
    %v1619 = vpack.c.b16 %v1402, %v1401
    %v1620 = vpack.c.b16 %v1404, %v1403
    %v1621 = vpack.c.b16 %v1406, %v1405
    %v1622 = vpack.c.b16 %v1408, %v1407
    %v1623 = vpack.c.b16 %v1410, %v1409
    %v1624 = vpack.c.b16 %v1412, %v1411
    %v1625 = vpack.c.b16 %v1414, %v1413
    %v1626 = vpack.c.b16 %v1416, %v1415
    %v1627 = vpack.c.b16 %v1418, %v1417
    %v1628 = vpack.c.b16 %v1420, %v1419
    %v1629 = vpack.c.b16 %v1422, %v1421
    %v1630 = vpack.c.b16 %v1424, %v1423
    %v1631 = vpack.c.b16 %v1426, %v1425
    %v1632 = vpack.c.b16 %v1428, %v1427
    %v1633 = vpack.c.b16 %v1430, %v1429
    %v1634 = vpack.c.b16 %v1432, %v1431
    %v1635 = vpack.c.b16 %v1434, %v1433
    %v1636 = vpack.c.b16 %v1436, %v1435
    %v1637 = vpack.c.b16 %v1438, %v1437
    %v1638 = vpack.c.b16 %v1440, %v1439
    %v1639 = vpack.c.b16 %v1442, %v1441
    %v1640 = vpack.c.b16 %v1444, %v1443
    %v1641 = vpack.c.b16 %v1446, %v1445
    %v1642 = vpack.c.b16 %v1448, %v1447
    %v1643 = vpack.c.b16 %v1450, %v1449
    %v1644 = vpack.c.b16 %v1452, %v1451
    %v1645 = vpack.c.b16 %v1454, %v1453
    %v1646 = vpack.c.b16 %v1456, %v1455
    %v1647 = vpack.c.b16 %v1458, %v1457
    %v1648 = vpack.c.b16 %v1460, %v1459
    %v1649 = vpack.c.b16 %v1462, %v1461
    %v1650 = vpack.c.b16 %v1464, %v1463
    %v1651 = vpack.c.b16 %v1466, %v1465
    %v1652 = vpack.c.b16 %v1468, %v1467
    %v1653 = vpack.c.b16 %v1470, %v1469
    %v1654 = vpack.c.b16 %v1472, %v1471
    %v1655 = vpack.c.b16 %v1474, %v1473
    %v1656 = vpack.c.b16 %v1476, %v1475
    %v1657 = vpack.c.b16 %v1478, %v1477
    %v1658 = vpack.c.b16 %v1480, %v1479
    %v1659 = vpack.c.b16 %v1482, %v1481
    %v1660 = vpack.c.b16 %v1484, %v1483
    %v1661 = vpack.c.b16 %v1486, %v1485
    %v1662 = vpack.c.b16 %v1488, %v1487
    %v1663 = vpack.c.b16 %v1490, %v1489
    %v1664 = vpack.c.b16 %v1492, %v1491
    %v1665 = vpack.c.b16 %v1494, %v1493
    %v1666 = vpack.c.b16 %v1496, %v1495
    %v1667 = vpack.c.b16 %v1498, %v1497
    %v1668 = vpack.c.b16 %v1500, %v1499
    %v1669 = vpack.c.b16 %v1502, %v1501
    %v1670 = vpack.c.b16 %v1504, %v1503
    %v1671 = vpack.c.b16 %v1506, %v1505
    %v1672 = vpack.c.b16 %v1508, %v1507
    %v1673 = vpack.c.b16 %v1510, %v1509
    %v1674 = vpack.c.b16 %v1512, %v1511
    %v1675 = vpack.c.b16 %v1514, %v1513
    %v1676 = vpack.c.b16 %v1516, %v1515
    %v1677 = vpack.c.b16 %v1518, %v1517
    %v1678 = vpack.c.b16 %v1520, %v1519
    %v1679 = vpack.c.b16 %v1522, %v1521
    %v1680 = vpack.c.b16 %v1524, %v1523
    %v1681 = vpack.c.b16 %v1526, %v1525
    %v1682 = vpack.c.b16 %v1528, %v1527
    %v1683 = vpack.c.b16 %v1530, %v1529
    %v1684 = vpack.c.b16 %v1532, %v1531
    %v1685 = vpack.c.b16 %v1534, %v1533
    %v1686 = vpack.c.b16 %v1536, %v1535
    %v1687 = vpack.c.b16 %v1538, %v1537
    %v1688 = vpack.c.b16 %v1540, %v1539
    %v1689 = vpack.c.b16 %v1542, %v1541
    %v1690 = vpack.c.b16 %v1544, %v1543
    %v1691 = vpack.c.b16 %v1546, %v1545
    %v1692 = vpack.c.b16 %v1548, %v1547
    %v1693 = vpack.c.b16 %v1550, %v1549
    %v1694 = vpack.c.b16 %v1552, %v1551
    %v1695 = vpack.c.b16 %v1554, %v1553
    %v1696 = vpack.c.b16 %v1556, %v1555
    %v1697 = vpack.c.b16 %v1558, %v1557
    %v1698 = vpack.c.b16 %v1560, %v1559
    %v1699 = vpack.c.b16 %v1562, %v1561
    %v1700 = vpack.c.b16 %v1564, %v1563
    %v1701 = vpack.c.b16 %v1566, %v1565
    %v1702 = vpack.c.b16 %v1568, %v1567
    %v1703 = vpack.c.b16 %v1570, %v1569
    %v1704 = vpack.c.b16 %v1572, %v1571
    %v1705 = vpack.c.b16 %v1574, %v1573
    %v1706 = vpack.c.b16 %v1576, %v1575
    %v1707 = vpack.c.b16 %v1578, %v1577
    %v1708 = vpack.c.b16 %v1580, %v1579
    %1837 = vst [vmem:[#allocation2] sm:$0xff] %v1581
    %1838 = vst [vmem:[#allocation2 + $0x8] sm:$0xff] %v1582
    %1839 = vst [vmem:[#allocation2 + $0x10] sm:$0xff] %v1583
    %1840 = vst [vmem:[#allocation2 + $0x18] sm:$0xff] %v1584
    %1841 = vst [vmem:[#allocation2 + $0x20] sm:$0xff] %v1585
    %1842 = vst [vmem:[#allocation2 + $0x28] sm:$0xff] %v1586
    %1843 = vst [vmem:[#allocation2 + $0x30] sm:$0xff] %v1587
    %1844 = vst [vmem:[#allocation2 + $0x38] sm:$0xff] %v1588
    %1845 = vst [vmem:[#allocation2 + $0x40] sm:$0xff] %v1589
    %1846 = vst [vmem:[#allocation2 + $0x48] sm:$0xff] %v1590
    %1847 = vst [vmem:[#allocation2 + $0x50] sm:$0xff] %v1591
    %1848 = vst [vmem:[#allocation2 + $0x58] sm:$0xff] %v1592
    %1849 = vst [vmem:[#allocation2 + $0x60] sm:$0xff] %v1593
    %1850 = vst [vmem:[#allocation2 + $0x68] sm:$0xff] %v1594
    %1851 = vst [vmem:[#allocation2 + $0x70] sm:$0xff] %v1595
    %1852 = vst [vmem:[#allocation2 + $0x78] sm:$0xff] %v1596
    %1853 = vst [vmem:[#allocation2 + $0x80] sm:$0xff] %v1597
    %1854 = vst [vmem:[#allocation2 + $0x88] sm:$0xff] %v1598
    %1855 = vst [vmem:[#allocation2 + $0x90] sm:$0xff] %v1599
    %1856 = vst [vmem:[#allocation2 + $0x98] sm:$0xff] %v1600
    %1857 = vst [vmem:[#allocation2 + $0xa0] sm:$0xff] %v1601
    %1858 = vst [vmem:[#allocation2 + $0xa8] sm:$0xff] %v1602
    %1859 = vst [vmem:[#allocation2 + $0xb0] sm:$0xff] %v1603
    %1860 = vst [vmem:[#allocation2 + $0xb8] sm:$0xff] %v1604
    %1861 = vst [vmem:[#allocation2 + $0xc0] sm:$0xff] %v1605
    %1862 = vst [vmem:[#allocation2 + $0xc8] sm:$0xff] %v1606
    %1863 = vst [vmem:[#allocation2 + $0xd0] sm:$0xff] %v1607
    %1864 = vst [vmem:[#allocation2 + $0xd8] sm:$0xff] %v1608
    %1865 = vst [vmem:[#allocation2 + $0xe0] sm:$0xff] %v1609
    %1866 = vst [vmem:[#allocation2 + $0xe8] sm:$0xff] %v1610
    %1867 = vst [vmem:[#allocation2 + $0xf0] sm:$0xff] %v1611
    %1868 = vst [vmem:[#allocation2 + $0xf8] sm:$0xff] %v1612
    %1869 = vst [vmem:[#allocation2 + $0x100] sm:$0xff] %v1613
    %1870 = vst [vmem:[#allocation2 + $0x108] sm:$0xff] %v1614
    %1871 = vst [vmem:[#allocation2 + $0x110] sm:$0xff] %v1615
    %1872 = vst [vmem:[#allocation2 + $0x118] sm:$0xff] %v1616
    %1873 = vst [vmem:[#allocation2 + $0x120] sm:$0xff] %v1617
    %1874 = vst [vmem:[#allocation2 + $0x128] sm:$0xff] %v1618
    %1875 = vst [vmem:[#allocation2 + $0x130] sm:$0xff] %v1619
    %1876 = vst [vmem:[#allocation2 + $0x138] sm:$0xff] %v1620
    %1877 = vst [vmem:[#allocation2 + $0x140] sm:$0xff] %v1621
    %1878 = vst [vmem:[#allocation2 + $0x148] sm:$0xff] %v1622
    %1879 = vst [vmem:[#allocation2 + $0x150] sm:$0xff] %v1623
    %1880 = vst [vmem:[#allocation2 + $0x158] sm:$0xff] %v1624
    %1881 = vst [vmem:[#allocation2 + $0x160] sm:$0xff] %v1625
    %1882 = vst [vmem:[#allocation2 + $0x168] sm:$0xff] %v1626
    %1883 = vst [vmem:[#allocation2 + $0x170] sm:$0xff] %v1627
    %1884 = vst [vmem:[#allocation2 + $0x178] sm:$0xff] %v1628
    %1885 = vst [vmem:[#allocation2 + $0x180] sm:$0xff] %v1629
    %1886 = vst [vmem:[#allocation2 + $0x188] sm:$0xff] %v1630
    %1887 = vst [vmem:[#allocation2 + $0x190] sm:$0xff] %v1631
    %1888 = vst [vmem:[#allocation2 + $0x198] sm:$0xff] %v1632
    %1889 = vst [vmem:[#allocation2 + $0x1a0] sm:$0xff] %v1633
    %1890 = vst [vmem:[#allocation2 + $0x1a8] sm:$0xff] %v1634
    %1891 = vst [vmem:[#allocation2 + $0x1b0] sm:$0xff] %v1635
    %1892 = vst [vmem:[#allocation2 + $0x1b8] sm:$0xff] %v1636
    %1893 = vst [vmem:[#allocation2 + $0x1c0] sm:$0xff] %v1637
    %1894 = vst [vmem:[#allocation2 + $0x1c8] sm:$0xff] %v1638
    %1895 = vst [vmem:[#allocation2 + $0x1d0] sm:$0xff] %v1639
    %1896 = vst [vmem:[#allocation2 + $0x1d8] sm:$0xff] %v1640
    %1897 = vst [vmem:[#allocation2 + $0x1e0] sm:$0xff] %v1641
    %1898 = vst [vmem:[#allocation2 + $0x1e8] sm:$0xff] %v1642
    %1899 = vst [vmem:[#allocation2 + $0x1f0] sm:$0xff] %v1643
    %1900 = vst [vmem:[#allocation2 + $0x1f8] sm:$0xff] %v1644
    %1901 = vst [vmem:[#allocation2 + $0x200] sm:$0xff] %v1645
    %1902 = vst [vmem:[#allocation2 + $0x208] sm:$0xff] %v1646
    %1903 = vst [vmem:[#allocation2 + $0x210] sm:$0xff] %v1647
    %1904 = vst [vmem:[#allocation2 + $0x218] sm:$0xff] %v1648
    %1905 = vst [vmem:[#allocation2 + $0x220] sm:$0xff] %v1649
    %1906 = vst [vmem:[#allocation2 + $0x228] sm:$0xff] %v1650
    %1907 = vst [vmem:[#allocation2 + $0x230] sm:$0xff] %v1651
    %1908 = vst [vmem:[#allocation2 + $0x238] sm:$0xff] %v1652
    %1909 = vst [vmem:[#allocation2 + $0x240] sm:$0xff] %v1653
    %1910 = vst [vmem:[#allocation2 + $0x248] sm:$0xff] %v1654
    %1911 = vst [vmem:[#allocation2 + $0x250] sm:$0xff] %v1655
    %1912 = vst [vmem:[#allocation2 + $0x258] sm:$0xff] %v1656
    %1913 = vst [vmem:[#allocation2 + $0x260] sm:$0xff] %v1657
    %1914 = vst [vmem:[#allocation2 + $0x268] sm:$0xff] %v1658
    %1915 = vst [vmem:[#allocation2 + $0x270] sm:$0xff] %v1659
    %1916 = vst [vmem:[#allocation2 + $0x278] sm:$0xff] %v1660
    %1917 = vst [vmem:[#allocation2 + $0x280] sm:$0xff] %v1661
    %1918 = vst [vmem:[#allocation2 + $0x288] sm:$0xff] %v1662
    %1919 = vst [vmem:[#allocation2 + $0x290] sm:$0xff] %v1663
    %1920 = vst [vmem:[#allocation2 + $0x298] sm:$0xff] %v1664
    %1921 = vst [vmem:[#allocation2 + $0x2a0] sm:$0xff] %v1665
    %1922 = vst [vmem:[#allocation2 + $0x2a8] sm:$0xff] %v1666
    %1923 = vst [vmem:[#allocation2 + $0x2b0] sm:$0xff] %v1667
    %1924 = vst [vmem:[#allocation2 + $0x2b8] sm:$0xff] %v1668
    %1925 = vst [vmem:[#allocation2 + $0x2c0] sm:$0xff] %v1669
    %1926 = vst [vmem:[#allocation2 + $0x2c8] sm:$0xff] %v1670
    %1927 = vst [vmem:[#allocation2 + $0x2d0] sm:$0xff] %v1671
    %1928 = vst [vmem:[#allocation2 + $0x2d8] sm:$0xff] %v1672
    %1929 = vst [vmem:[#allocation2 + $0x2e0] sm:$0xff] %v1673
    %1930 = vst [vmem:[#allocation2 + $0x2e8] sm:$0xff] %v1674
    %1931 = vst [vmem:[#allocation2 + $0x2f0] sm:$0xff] %v1675
    %1932 = vst [vmem:[#allocation2 + $0x2f8] sm:$0xff] %v1676
    %1933 = vst [vmem:[#allocation2 + $0x300] sm:$0xff] %v1677
    %1934 = vst [vmem:[#allocation2 + $0x308] sm:$0xff] %v1678
    %1935 = vst [vmem:[#allocation2 + $0x310] sm:$0xff] %v1679
    %1936 = vst [vmem:[#allocation2 + $0x318] sm:$0xff] %v1680
    %1937 = vst [vmem:[#allocation2 + $0x320] sm:$0xff] %v1681
    %1938 = vst [vmem:[#allocation2 + $0x328] sm:$0xff] %v1682
    %1939 = vst [vmem:[#allocation2 + $0x330] sm:$0xff] %v1683
    %1940 = vst [vmem:[#allocation2 + $0x338] sm:$0xff] %v1684
    %1941 = vst [vmem:[#allocation2 + $0x340] sm:$0xff] %v1685
    %1942 = vst [vmem:[#allocation2 + $0x348] sm:$0xff] %v1686
    %1943 = vst [vmem:[#allocation2 + $0x350] sm:$0xff] %v1687
    %1944 = vst [vmem:[#allocation2 + $0x358] sm:$0xff] %v1688
    %1945 = vst [vmem:[#allocation2 + $0x360] sm:$0xff] %v1689
    %1946 = vst [vmem:[#allocation2 + $0x368] sm:$0xff] %v1690
    %1947 = vst [vmem:[#allocation2 + $0x370] sm:$0xff] %v1691
    %1948 = vst [vmem:[#allocation2 + $0x378] sm:$0xff] %v1692
    %1949 = vst [vmem:[#allocation2 + $0x380] sm:$0xff] %v1693
    %1950 = vst [vmem:[#allocation2 + $0x388] sm:$0xff] %v1694
    %1951 = vst [vmem:[#allocation2 + $0x390] sm:$0xff] %v1695
    %1952 = vst [vmem:[#allocation2 + $0x398] sm:$0xff] %v1696
    %1953 = vst [vmem:[#allocation2 + $0x3a0] sm:$0xff] %v1697
    %1954 = vst [vmem:[#allocation2 + $0x3a8] sm:$0xff] %v1698
    %1955 = vst [vmem:[#allocation2 + $0x3b0] sm:$0xff] %v1699
    %1956 = vst [vmem:[#allocation2 + $0x3b8] sm:$0xff] %v1700
    %1957 = vst [vmem:[#allocation2 + $0x3c0] sm:$0xff] %v1701
    %1958 = vst [vmem:[#allocation2 + $0x3c8] sm:$0xff] %v1702
    %1959 = vst [vmem:[#allocation2 + $0x3d0] sm:$0xff] %v1703
    %1960 = vst [vmem:[#allocation2 + $0x3d8] sm:$0xff] %v1704
    %1961 = vst [vmem:[#allocation2 + $0x3e0] sm:$0xff] %v1705
    %1962 = vst [vmem:[#allocation2 + $0x3e8] sm:$0xff] %v1706
    %1963 = vst [vmem:[#allocation2 + $0x3f0] sm:$0xff] %v1707
    %1964 = vst [vmem:[#allocation2 + $0x3f8] sm:$0xff] %v1708
    %v1965 = vld [vmem:[%s2] sm:$0xf]
    %v1967 = vsel %vm116, %v1965, 0
    %1969 = vmatprep.subr.bf16.mxu0 0
    %1970 = vmatpush1.bf16.msra.mxu0 0
    %1971 = vmatprep.subr.bf16.mxu0 0
    %1972 = vmatpush1.bf16.msra.mxu0 0
    %1973 = vmatprep.subr.bf16.mxu0 0
    %1974 = vmatpush1.bf16.msra.mxu0 0
    %1975 = vmatprep.subr.bf16.mxu0 0
    %1976 = vmatpush1.bf16.msra.mxu0 0
    %1977 = vmatprep.subr.bf16.mxu0 0
    %1978 = vmatpush1.bf16.msra.mxu0 0
    %1979 = vmatprep.subr.bf16.mxu0 0
    %1980 = vmatpush1.bf16.msra.mxu0 0
    %1981 = vmatprep.subr.bf16.mxu0 0
    %1982 = vmatpush1.bf16.msra.mxu0 0
    %1983 = vmatprep.subr.bf16.mxu0 0
    %1984 = vmatpush1.bf16.msra.mxu0 %v1967
    %1985 = vmatprep.subr.bf16.mxu0 0
    %1986 = vmatpush2.bf16.msra.mxu0 0
    %1987 = vmatprep.subr.bf16.mxu0 0
    %1988 = vmatpush2.bf16.msra.mxu0 0
    %1989 = vmatprep.subr.bf16.mxu0 0
    %1990 = vmatpush2.bf16.msra.mxu0 0
    %1991 = vmatprep.subr.bf16.mxu0 0
    %1992 = vmatpush2.bf16.msra.mxu0 0
    %1993 = vmatprep.subr.bf16.mxu0 0
    %1994 = vmatpush2.bf16.msra.mxu0 0
    %1995 = vmatprep.subr.bf16.mxu0 0
    %1996 = vmatpush2.bf16.msra.mxu0 0
    %1997 = vmatprep.subr.bf16.mxu0 0
    %1998 = vmatpush2.bf16.msra.mxu0 0
    %1999 = vmatprep.subr.bf16.mxu0 0
    %2000 = vmatpush2.bf16.msra.mxu0 0
    %2001 = vmatprep.mubr.bf16.mxu0 0
    %2002 = vmatmul.mubr.bf16.gmra.mxu0 %v93
    %v2003 = vpop.f32.mrf.mxu0
    %v2004 = vadd.f32 0.0, %v2003
    %v2005 = vpop.f32.mrf.mxu0
    %v2006 = vpop.f32.mrf.mxu0
    %v2007 = vadd.f32 0.0, %v2006
    %v2008 = vpop.f32.mrf.mxu0
    %2009 = vmatprep.mubr.bf16.mxu0 0
    %2010 = vmatmul.mubr.bf16.gmra.mxu0 %v96
    %v2011 = vpop.f32.mrf.mxu0
    %v2012 = vadd.f32 0.0, %v2011
    %v2013 = vpop.f32.mrf.mxu0
    %v2014 = vpop.f32.mrf.mxu0
    %v2015 = vadd.f32 0.0, %v2014
    %v2016 = vpop.f32.mrf.mxu0
    %2017 = vmatprep.mubr.bf16.mxu0 0
    %2018 = vmatmul.mubr.bf16.gmra.mxu0 %v99
    %v2019 = vpop.f32.mrf.mxu0
    %v2020 = vadd.f32 0.0, %v2019
    %v2021 = vpop.f32.mrf.mxu0
    %v2022 = vpop.f32.mrf.mxu0
    %v2023 = vadd.f32 0.0, %v2022
    %v2024 = vpop.f32.mrf.mxu0
    %2025 = vmatprep.mubr.bf16.mxu0 0
    %2026 = vmatmul.mubr.bf16.gmra.mxu0 %v102
    %v2027 = vpop.f32.mrf.mxu0
    %v2028 = vadd.f32 0.0, %v2027
    %v2029 = vpop.f32.mrf.mxu0
    %v2030 = vpop.f32.mrf.mxu0
    %v2031 = vadd.f32 0.0, %v2030
    %v2032 = vpop.f32.mrf.mxu0
    %2033 = vmatprep.mubr.bf16.mxu0 0
    %2034 = vmatmul.mubr.bf16.gmra.mxu0 %v105
    %v2035 = vpop.f32.mrf.mxu0
    %v2036 = vadd.f32 0.0, %v2035
    %v2037 = vpop.f32.mrf.mxu0
    %v2038 = vpop.f32.mrf.mxu0
    %v2039 = vadd.f32 0.0, %v2038
    %v2040 = vpop.f32.mrf.mxu0
    %2041 = vmatprep.mubr.bf16.mxu0 0
    %2042 = vmatmul.mubr.bf16.gmra.mxu0 %v108
    %v2043 = vpop.f32.mrf.mxu0
    %v2044 = vadd.f32 0.0, %v2043
    %v2045 = vpop.f32.mrf.mxu0
    %v2046 = vpop.f32.mrf.mxu0
    %v2047 = vadd.f32 0.0, %v2046
    %v2048 = vpop.f32.mrf.mxu0
    %2049 = vmatprep.mubr.bf16.mxu0 0
    %2050 = vmatmul.mubr.bf16.gmra.mxu0 %v111
    %v2051 = vpop.f32.mrf.mxu0
    %v2052 = vadd.f32 0.0, %v2051
    %v2053 = vpop.f32.mrf.mxu0
    %v2054 = vpop.f32.mrf.mxu0
    %v2055 = vadd.f32 0.0, %v2054
    %v2056 = vpop.f32.mrf.mxu0
    %2057 = vmatprep.mubr.bf16.mxu0 0
    %2058 = vmatmul.mubr.bf16.gmra.mxu0 %v114
    %v2059 = vpop.f32.mrf.mxu0
    %v2060 = vadd.f32 0.0, %v2059
    %v2061 = vpop.f32.mrf.mxu0
    %v2062 = vpop.f32.mrf.mxu0
    %v2063 = vadd.f32 0.0, %v2062
    %v2064 = vpop.f32.mrf.mxu0
    %2065 = vdwg.mxu0
    %2066 = vst [vmem:[#allocation4] sm:$0xff] %v2004
    %2067 = vst [vmem:[#allocation4 + $0x8] sm:$0xff] %v2007
    %2068 = vst [vmem:[#allocation4 + $0x10] sm:$0xff] %v2012
    %2069 = vst [vmem:[#allocation4 + $0x18] sm:$0xff] %v2015
    %2070 = vst [vmem:[#allocation4 + $0x20] sm:$0xff] %v2020
    %2071 = vst [vmem:[#allocation4 + $0x28] sm:$0xff] %v2023
    %2072 = vst [vmem:[#allocation4 + $0x30] sm:$0xff] %v2028
    %2073 = vst [vmem:[#allocation4 + $0x38] sm:$0xff] %v2031
    %2074 = vst [vmem:[#allocation4 + $0x40] sm:$0xff] %v2036
    %2075 = vst [vmem:[#allocation4 + $0x48] sm:$0xff] %v2039
    %2076 = vst [vmem:[#allocation4 + $0x50] sm:$0xff] %v2044
    %2077 = vst [vmem:[#allocation4 + $0x58] sm:$0xff] %v2047
    %2078 = vst [vmem:[#allocation4 + $0x60] sm:$0xff] %v2052
    %2079 = vst [vmem:[#allocation4 + $0x68] sm:$0xff] %v2055
    %2080 = vst [vmem:[#allocation4 + $0x70] sm:$0xff] %v2060
    %2081 = vst [vmem:[#allocation4 + $0x78] sm:$0xff] %v2063
    // Predicated region
    $region14: #{tpu_custom_call.1} parent=1 // pred_check
      _
    $region15: #{tpu_custom_call.1} parent=1 // pred_check_branch
      %2083 = sbr.rel (0) target = $region17
    $region16: #{tpu_custom_call.1} parent=1 // pred_region
      %s2085 = ssub.s32 16384, 16384
      %2086 = vsyncadd [#allocation3], %s2085
      %s2087 = sshll.u32 [#allocation2], 4
      %s2088 = int_to_ptr.vmem [resolvable:$true] %s2087
      %2093 = dma.vmem_to_hbm [thread:$0]  %s2088, 16384, %s3, [#allocation3], 1024, 1024, 64
    $region17: #{tpu_custom_call.1} parent=1 // pred_fallthru
      _
    // Predicated region
    $region18: #{tpu_custom_call.1} parent=1 // pred_check
      _
    $region19: #{tpu_custom_call.1} parent=1 // pred_check_branch
      %2095 = sbr.rel (0) target = $region21
    $region20: #{tpu_custom_call.1} parent=1 // pred_region
      %s2097 = ssub.s32 2048, 2048
      %2098 = vsyncadd [#allocation5], %s2097
      %s2099 = sshll.u32 [#allocation4], 4
      %s2100 = int_to_ptr.vmem [resolvable:$true] %s2099
      %2105 = dma.vmem_to_hbm [thread:$0]  %s2100, 2048, %s4, [#allocation5], 128, 128, 8
    $region21: #{tpu_custom_call.1} parent=1 // pred_fallthru
      _
    // Predicated region
    $region22: #{tpu_custom_call.1} parent=1 // pred_check
      _
    $region23: #{tpu_custom_call.1} parent=1 // pred_check_branch
      %2107 = sbr.rel (0) target = $region25
    $region24: #{tpu_custom_call.1} parent=1 // pred_region
      %2108 = dma.done [#allocation3], 16384
    $region25: #{tpu_custom_call.1} parent=1 // pred_fallthru
      _
    // Predicated region
    $region26: #{tpu_custom_call.1} parent=1 // pred_check
      _
    $region27: #{tpu_custom_call.1} parent=1 // pred_check_branch
      %2110 = sbr.rel (0) target = $region29
    $region28: #{tpu_custom_call.1} parent=1 // pred_region
      %2111 = dma.done [#allocation5], 2048
    $region29: #{tpu_custom_call.1} parent=1 // pred_fallthru
      _
    %2112 = vsyncpa [#allocation3], 1
    %2113 = vsyncpa [#allocation5], 1

// kernel: tpu_custom_call.1
$region0: #{tpu_custom_call.1}
  #allocation0 [shape = 'u32[]', space=smem, size = 0x4, offset = 0x4, fixed_abs, tag = 'smem constant byte address 0x4 - core index']
  #allocation1 [shape = 'u32[144,128]{1,0:T(1,128)}', space=vmem, size = 0x12000, scoped, tag = 'internal scratch']
  %s0 = inlined_call_operand.vmem [shape: f32[128,8], index: 0, kind: input, shape index: {}]
  %s1 = inlined_call_operand.vmem [shape: bf16[8,2048], index: 1, kind: input, shape index: {}]
  %s2 = inlined_call_operand.vmem [shape: bf16[8,128], index: 2, kind: input, shape index: {}]
  %s3 = inlined_call_operand.hbm [shape: bf16[128,2048], index: 3, kind: output, shape index: {0}]
  %s4 = inlined_call_operand.hbm [shape: f32[128,128], index: 4, kind: output, shape index: {1}]
  %5 = xla_tuple %s3, %s4
  %s6 = sld [smem:[#allocation0]]
  $region30: #{tpu_custom_call.1} parent=0
    _
  %s8 = ssub.s32 1, %s6
  %s9 = scalar_select 0, %s8, %s6
  $region1: #{tpu_custom_call.1} parent=0
    #allocation2 [shape = 'u8[524288]{0}', space=vmem, size = 0x80000, scoped, tag = 'output window, operand 0, single buffered']
    #allocation3 [shape = 's32[1]{0}', space=sflag, size = 0x4, scoped, tag = 'scoped memory for tpu_custom_call.1']
    #allocation4 [shape = 'u8[65536]{0}', space=vmem, size = 0x10000, scoped, tag = 'output window, operand 1, single buffered']
    #allocation5 [shape = 's32[1]{0}', space=sflag, size = 0x4, scoped, tag = 'scoped memory for tpu_custom_call.1']
    %10 = vsyncpa [#allocation3], 0
    %11 = vsyncpa [#allocation5], 0
    // Predicated region
    $region2: #{tpu_custom_call.1} parent=1 // pred_check
      _
    $region3: #{tpu_custom_call.1} parent=1 // pred_check_branch
      %13 = sbr.rel (0) target = $region5
    $region4: #{tpu_custom_call.1} parent=1 // pred_region
      _
    $region5: #{tpu_custom_call.1} parent=1 // pred_fallthru
      _
    // Predicated region
    $region6: #{tpu_custom_call.1} parent=1 // pred_check
      _
    $region7: #{tpu_custom_call.1} parent=1 // pred_check_branch
      %15 = sbr.rel (0) target = $region9
    $region8: #{tpu_custom_call.1} parent=1 // pred_region
      _
    $region9: #{tpu_custom_call.1} parent=1 // pred_fallthru
      _
    // Predicated region
    $region10: #{tpu_custom_call.1} parent=1 // pred_check
      _
    $region11: #{tpu_custom_call.1} parent=1 // pred_check_branch
      %17 = sbr.rel (0) target = $region13
    $region12: #{tpu_custom_call.1} parent=1 // pred_region
      _
    $region13: #{tpu_custom_call.1} parent=1 // pred_fallthru
      _
    %v19 = vld [vmem:[%s0] sm:$0xff]
    %v20 = vld [vmem:[%s0 + $0x8] sm:$0xff]
    %v21 = vld [vmem:[%s0 + $0x10] sm:$0xff]
    %v22 = vld [vmem:[%s0 + $0x18] sm:$0xff]
    %v23 = vld [vmem:[%s0 + $0x20] sm:$0xff]
    %v24 = vld [vmem:[%s0 + $0x28] sm:$0xff]
    %v25 = vld [vmem:[%s0 + $0x30] sm:$0xff]
    %v26 = vld [vmem:[%s0 + $0x38] sm:$0xff]
    %v27 = vld [vmem:[%s0 + $0x40] sm:$0xff]
    %v28 = vld [vmem:[%s0 + $0x48] sm:$0xff]
    %v29 = vld [vmem:[%s0 + $0x50] sm:$0xff]
    %v30 = vld [vmem:[%s0 + $0x58] sm:$0xff]
    %v31 = vld [vmem:[%s0 + $0x60] sm:$0xff]
    %v32 = vld [vmem:[%s0 + $0x68] sm:$0xff]
    %v33 = vld [vmem:[%s0 + $0x70] sm:$0xff]
    %v34 = vld [vmem:[%s0 + $0x78] sm:$0xff]
    %v35 = vpack.c.bf16 %v20, %v19
    %v36 = vpack.c.bf16 %v22, %v21
    %v37 = vpack.c.bf16 %v24, %v23
    %v38 = vpack.c.bf16 %v26, %v25
    %v39 = vpack.c.bf16 %v28, %v27
    %v40 = vpack.c.bf16 %v30, %v29
    %v41 = vpack.c.bf16 %v32, %v31
    %v42 = vpack.c.bf16 %v34, %v33
    %v43 = vld [vmem:[%s1] sm:$0xff]
    %v44 = vld [vmem:[%s1 + $0x8] sm:$0xff]
    %v45 = vld [vmem:[%s1 + $0x10] sm:$0xff]
    %v46 = vld [vmem:[%s1 + $0x18] sm:$0xff]
    %v47 = vld [vmem:[%s1 + $0x20] sm:$0xff]
    %v48 = vld [vmem:[%s1 + $0x28] sm:$0xff]
    %v49 = vld [vmem:[%s1 + $0x30] sm:$0xff]
    %v50 = vld [vmem:[%s1 + $0x38] sm:$0xff]
    %v59 = vunpack.c.l.b16 %v43
    %v60 = vunpack.c.h.b16 %v43
    %v61 = vunpack.c.l.b16 %v44
    %v62 = vunpack.c.h.b16 %v44
    %v63 = vunpack.c.l.b16 %v45
    %v64 = vunpack.c.h.b16 %v45
    %v65 = vunpack.c.l.b16 %v46
    %v66 = vunpack.c.h.b16 %v46
    %v67 = vunpack.c.l.b16 %v47
    %v68 = vunpack.c.h.b16 %v47
    %v69 = vunpack.c.l.b16 %v48
    %v70 = vunpack.c.h.b16 %v48
    %v71 = vunpack.c.l.b16 %v49
    %v72 = vunpack.c.h.b16 %v49
    %v73 = vunpack.c.l.b16 %v50
    %v74 = vunpack.c.h.b16 %v50
    %v75 = vpack.c.b16 %v59, %v59
    %v76 = vpack.c.b16 %v60, %v60
    %v77 = vpack.c.b16 %v61, %v61
    %v78 = vpack.c.b16 %v62, %v62
    %v79 = vpack.c.b16 %v63, %v63
    %v80 = vpack.c.b16 %v64, %v64
    %v81 = vpack.c.b16 %v65, %v65
    %v82 = vpack.c.b16 %v66, %v66
    %v83 = vpack.c.b16 %v67, %v67
    %v84 = vpack.c.b16 %v68, %v68
    %v85 = vpack.c.b16 %v69, %v69
    %v86 = vpack.c.b16 %v70, %v70
    %v87 = vpack.c.b16 %v71, %v71
    %v88 = vpack.c.b16 %v72, %v72
    %v89 = vpack.c.b16 %v73, %v73
    %v90 = vpack.c.b16 %v74, %v74
    %vm91 = vcmask 64512
    %v93 = vsel %vm91, %v35, 0
    %v96 = vsel %vm91, %v36, 0
    %v99 = vsel %vm91, %v37, 0
    %v102 = vsel %vm91, %v38, 0
    %v105 = vsel %vm91, %v39, 0
    %v108 = vsel %vm91, %v40, 0
    %v111 = vsel %vm91, %v41, 0
    %v114 = vsel %vm91, %v42, 0
    %vm116 = vcmask 1043456
    %v118 = vsel %vm116, %v75, 0
    %v121 = vsel %vm116, %v76, 0
    %v124 = vsel %vm116, %v77, 0
    %v127 = vsel %vm116, %v78, 0
    %v130 = vsel %vm116, %v79, 0
    %v133 = vsel %vm116, %v80, 0
    %v136 = vsel %vm116, %v81, 0
    %v139 = vsel %vm116, %v82, 0
    %v142 = vsel %vm116, %v83, 0
    %v145 = vsel %vm116, %v84, 0
    %v148 = vsel %vm116, %v85, 0
    %v151 = vsel %vm116, %v86, 0
    %v154 = vsel %vm116, %v87, 0
    %v157 = vsel %vm116, %v88, 0
    %v160 = vsel %vm116, %v89, 0
    %v163 = vsel %vm116, %v90, 0
    %165 = vmatprep.subr.bf16.mxu0 0
    %166 = vmatpush1.bf16.msra.mxu0 0
    %167 = vmatprep.subr.bf16.mxu0 0
    %168 = vmatpush1.bf16.msra.mxu0 0
    %169 = vmatprep.subr.bf16.mxu0 0
    %170 = vmatpush1.bf16.msra.mxu0 0
    %171 = vmatprep.subr.bf16.mxu0 0
    %172 = vmatpush1.bf16.msra.mxu0 0
    %173 = vmatprep.subr.bf16.mxu0 0
    %174 = vmatpush1.bf16.msra.mxu0 0
    %175 = vmatprep.subr.bf16.mxu0 0
    %176 = vmatpush1.bf16.msra.mxu0 0
    %177 = vmatprep.subr.bf16.mxu0 0
    %178 = vmatpush1.bf16.msra.mxu0 0
    %179 = vmatprep.subr.bf16.mxu0 %v121
    %180 = vmatpush1.bf16.msra.mxu0 %v118
    %181 = vmatprep.subr.bf16.mxu0 0
    %182 = vmatpush2.bf16.msra.mxu0 0
    %183 = vmatprep.subr.bf16.mxu0 0
    %184 = vmatpush2.bf16.msra.mxu0 0
    %185 = vmatprep.subr.bf16.mxu0 0
    %186 = vmatpush2.bf16.msra.mxu0 0
    %187 = vmatprep.subr.bf16.mxu0 0
    %188 = vmatpush2.bf16.msra.mxu0 0
    %189 = vmatprep.subr.bf16.mxu0 0
    %190 = vmatpush2.bf16.msra.mxu0 0
    %191 = vmatprep.subr.bf16.mxu0 0
    %192 = vmatpush2.bf16.msra.mxu0 0
    %193 = vmatprep.subr.bf16.mxu0 0
    %194 = vmatpush2.bf16.msra.mxu0 0
    %195 = vmatprep.subr.bf16.mxu0 0
    %196 = vmatpush2.bf16.msra.mxu0 0
    %197 = vmatprep.mubr.bf16.mxu0 0
    %198 = vmatmul.mubr.bf16.gmra.mxu0 %v93
    %v199 = vpop.f32.mrf.mxu0
    %v200 = vadd.f32 0.0, %v199
    %v201 = vpop.f32.mrf.mxu0
    %v202 = vadd.f32 0.0, %v201
    %v203 = vpop.f32.mrf.mxu0
    %v204 = vadd.f32 0.0, %v203
    %v205 = vpop.f32.mrf.mxu0
    %v206 = vadd.f32 0.0, %v205
    %207 = vmatprep.mubr.bf16.mxu0 0
    %208 = vmatmul.mubr.bf16.gmra.mxu0 %v96
    %v209 = vpop.f32.mrf.mxu0
    %v210 = vadd.f32 0.0, %v209
    %v211 = vpop.f32.mrf.mxu0
    %v212 = vadd.f32 0.0, %v211
    %v213 = vpop.f32.mrf.mxu0
    %v214 = vadd.f32 0.0, %v213
    %v215 = vpop.f32.mrf.mxu0
    %v216 = vadd.f32 0.0, %v215
    %217 = vmatprep.mubr.bf16.mxu0 0
    %218 = vmatmul.mubr.bf16.gmra.mxu0 %v99
    %v219 = vpop.f32.mrf.mxu0
    %v220 = vadd.f32 0.0, %v219
    %v221 = vpop.f32.mrf.mxu0
    %v222 = vadd.f32 0.0, %v221
    %v223 = vpop.f32.mrf.mxu0
    %v224 = vadd.f32 0.0, %v223
    %v225 = vpop.f32.mrf.mxu0
    %v226 = vadd.f32 0.0, %v225
    %227 = vmatprep.mubr.bf16.mxu0 0
    %228 = vmatmul.mubr.bf16.gmra.mxu0 %v102
    %v229 = vpop.f32.mrf.mxu0
    %v230 = vadd.f32 0.0, %v229
    %v231 = vpop.f32.mrf.mxu0
    %v232 = vadd.f32 0.0, %v231
    %v233 = vpop.f32.mrf.mxu0
    %v234 = vadd.f32 0.0, %v233
    %v235 = vpop.f32.mrf.mxu0
    %v236 = vadd.f32 0.0, %v235
    %237 = vmatprep.mubr.bf16.mxu0 0
    %238 = vmatmul.mubr.bf16.gmra.mxu0 %v105
    %v239 = vpop.f32.mrf.mxu0
    %v240 = vadd.f32 0.0, %v239
    %v241 = vpop.f32.mrf.mxu0
    %v242 = vadd.f32 0.0, %v241
    %v243 = vpop.f32.mrf.mxu0
    %v244 = vadd.f32 0.0, %v243
    %v245 = vpop.f32.mrf.mxu0
    %v246 = vadd.f32 0.0, %v245
    %247 = vmatprep.mubr.bf16.mxu0 0
    %248 = vmatmul.mubr.bf16.gmra.mxu0 %v108
    %v249 = vpop.f32.mrf.mxu0
    %v250 = vadd.f32 0.0, %v249
    %v251 = vpop.f32.mrf.mxu0
    %v252 = vadd.f32 0.0, %v251
    %v253 = vpop.f32.mrf.mxu0
    %v254 = vadd.f32 0.0, %v253
    %v255 = vpop.f32.mrf.mxu0
    %v256 = vadd.f32 0.0, %v255
    %257 = vmatprep.mubr.bf16.mxu0 0
    %258 = vmatmul.mubr.bf16.gmra.mxu0 %v111
    %v259 = vpop.f32.mrf.mxu0
    %v260 = vadd.f32 0.0, %v259
    %v261 = vpop.f32.mrf.mxu0
    %v262 = vadd.f32 0.0, %v261
    %v263 = vpop.f32.mrf.mxu0
    %v264 = vadd.f32 0.0, %v263
    %v265 = vpop.f32.mrf.mxu0
    %v266 = vadd.f32 0.0, %v265
    %267 = vmatprep.mubr.bf16.mxu0 0
    %268 = vmatmul.mubr.bf16.gmra.mxu0 %v114
    %v269 = vpop.f32.mrf.mxu0
    %v270 = vadd.f32 0.0, %v269
    %v271 = vpop.f32.mrf.mxu0
    %v272 = vadd.f32 0.0, %v271
    %v273 = vpop.f32.mrf.mxu0
    %v274 = vadd.f32 0.0, %v273
    %v275 = vpop.f32.mrf.mxu0
    %v276 = vadd.f32 0.0, %v275
    %277 = vdwg.mxu0
    %278 = vmatprep.subr.bf16.mxu0 0
    %279 = vmatpush1.bf16.msra.mxu0 0
    %280 = vmatprep.subr.bf16.mxu0 0
    %281 = vmatpush1.bf16.msra.mxu0 0
    %282 = vmatprep.subr.bf16.mxu0 0
    %283 = vmatpush1.bf16.msra.mxu0 0
    %284 = vmatprep.subr.bf16.mxu0 0
    %285 = vmatpush1.bf16.msra.mxu0 0
    %286 = vmatprep.subr.bf16.mxu0 0
    %287 = vmatpush1.bf16.msra.mxu0 0
    %288 = vmatprep.subr.bf16.mxu0 0
    %289 = vmatpush1.bf16.msra.mxu0 0
    %290 = vmatprep.subr.bf16.mxu0 0
    %291 = vmatpush1.bf16.msra.mxu0 0
    %292 = vmatprep.subr.bf16.mxu0 %v127
    %293 = vmatpush1.bf16.msra.mxu0 %v124
    %294 = vmatprep.subr.bf16.mxu0 0
    %295 = vmatpush2.bf16.msra.mxu0 0
    %296 = vmatprep.subr.bf16.mxu0 0
    %297 = vmatpush2.bf16.msra.mxu0 0
    %298 = vmatprep.subr.bf16.mxu0 0
    %299 = vmatpush2.bf16.msra.mxu0 0
    %300 = vmatprep.subr.bf16.mxu0 0
    %301 = vmatpush2.bf16.msra.mxu0 0
    %302 = vmatprep.subr.bf16.mxu0 0
    %303 = vmatpush2.bf16.msra.mxu0 0
    %304 = vmatprep.subr.bf16.mxu0 0
    %305 = vmatpush2.bf16.msra.mxu0 0
    %306 = vmatprep.subr.bf16.mxu0 0
    %307 = vmatpush2.bf16.msra.mxu0 0
    %308 = vmatprep.subr.bf16.mxu0 0
    %309 = vmatpush2.bf16.msra.mxu0 0
    %310 = vmatprep.mubr.bf16.mxu0 0
    %311 = vmatmul.mubr.bf16.gmra.mxu0 %v93
    %v312 = vpop.f32.mrf.mxu0
    %v313 = vadd.f32 0.0, %v312
    %v314 = vpop.f32.mrf.mxu0
    %v315 = vadd.f32 0.0, %v314
    %v316 = vpop.f32.mrf.mxu0
    %v317 = vadd.f32 0.0, %v316
    %v318 = vpop.f32.mrf.mxu0
    %v319 = vadd.f32 0.0, %v318
    %320 = vmatprep.mubr.bf16.mxu0 0
    %321 = vmatmul.mubr.bf16.gmra.mxu0 %v96
    %v322 = vpop.f32.mrf.mxu0
    %v323 = vadd.f32 0.0, %v322
    %v324 = vpop.f32.mrf.mxu0
    %v325 = vadd.f32 0.0, %v324
    %v326 = vpop.f32.mrf.mxu0
    %v327 = vadd.f32 0.0, %v326
    %v328 = vpop.f32.mrf.mxu0
    %v329 = vadd.f32 0.0, %v328
    %330 = vmatprep.mubr.bf16.mxu0 0
    %331 = vmatmul.mubr.bf16.gmra.mxu0 %v99
    %v332 = vpop.f32.mrf.mxu0
    %v333 = vadd.f32 0.0, %v332
    %v334 = vpop.f32.mrf.mxu0
    %v335 = vadd.f32 0.0, %v334
    %v336 = vpop.f32.mrf.mxu0
    %v337 = vadd.f32 0.0, %v336
    %v338 = vpop.f32.mrf.mxu0
    %v339 = vadd.f32 0.0, %v338
    %340 = vmatprep.mubr.bf16.mxu0 0
    %341 = vmatmul.mubr.bf16.gmra.mxu0 %v102
    %v342 = vpop.f32.mrf.mxu0
    %v343 = vadd.f32 0.0, %v342
    %v344 = vpop.f32.mrf.mxu0
    %v345 = vadd.f32 0.0, %v344
    %v346 = vpop.f32.mrf.mxu0
    %v347 = vadd.f32 0.0, %v346
    %v348 = vpop.f32.mrf.mxu0
    %v349 = vadd.f32 0.0, %v348
    %350 = vmatprep.mubr.bf16.mxu0 0
    %351 = vmatmul.mubr.bf16.gmra.mxu0 %v105
    %v352 = vpop.f32.mrf.mxu0
    %v353 = vadd.f32 0.0, %v352
    %v354 = vpop.f32.mrf.mxu0
    %v355 = vadd.f32 0.0, %v354
    %v356 = vpop.f32.mrf.mxu0
    %v357 = vadd.f32 0.0, %v356
    %v358 = vpop.f32.mrf.mxu0
    %v359 = vadd.f32 0.0, %v358
    %360 = vmatprep.mubr.bf16.mxu0 0
    %361 = vmatmul.mubr.bf16.gmra.mxu0 %v108
    %v362 = vpop.f32.mrf.mxu0
    %v363 = vadd.f32 0.0, %v362
    %v364 = vpop.f32.mrf.mxu0
    %v365 = vadd.f32 0.0, %v364
    %v366 = vpop.f32.mrf.mxu0
    %v367 = vadd.f32 0.0, %v366
    %v368 = vpop.f32.mrf.mxu0
    %v369 = vadd.f32 0.0, %v368
    %370 = vmatprep.mubr.bf16.mxu0 0
    %371 = vmatmul.mubr.bf16.gmra.mxu0 %v111
    %v372 = vpop.f32.mrf.mxu0
    %v373 = vadd.f32 0.0, %v372
    %v374 = vpop.f32.mrf.mxu0
    %v375 = vadd.f32 0.0, %v374
    %v376 = vpop.f32.mrf.mxu0
    %v377 = vadd.f32 0.0, %v376
    %v378 = vpop.f32.mrf.mxu0
    %v379 = vadd.f32 0.0, %v378
    %380 = vmatprep.mubr.bf16.mxu0 0
    %381 = vmatmul.mubr.bf16.gmra.mxu0 %v114
    %v382 = vpop.f32.mrf.mxu0
    %v383 = vadd.f32 0.0, %v382
    %v384 = vpop.f32.mrf.mxu0
    %v385 = vadd.f32 0.0, %v384
    %v386 = vpop.f32.mrf.mxu0
    %v387 = vadd.f32 0.0, %v386
    %v388 = vpop.f32.mrf.mxu0
    %v389 = vadd.f32 0.0, %v388
    %390 = vdwg.mxu0
    %391 = vmatprep.subr.bf16.mxu0 0
    %392 = vmatpush1.bf16.msra.mxu0 0
    %393 = vmatprep.subr.bf16.mxu0 0
    %394 = vmatpush1.bf16.msra.mxu0 0
    %395 = vmatprep.subr.bf16.mxu0 0
    %396 = vmatpush1.bf16.msra.mxu0 0
    %397 = vmatprep.subr.bf16.mxu0 0
    %398 = vmatpush1.bf16.msra.mxu0 0
    %399 = vmatprep.subr.bf16.mxu0 0
    %400 = vmatpush1.bf16.msra.mxu0 0
    %401 = vmatprep.subr.bf16.mxu0 0
    %402 = vmatpush1.bf16.msra.mxu0 0
    %403 = vmatprep.subr.bf16.mxu0 0
    %404 = vmatpush1.bf16.msra.mxu0 0
    %405 = vmatprep.subr.bf16.mxu0 %v133
    %406 = vmatpush1.bf16.msra.mxu0 %v130
    %407 = vmatprep.subr.bf16.mxu0 0
    %408 = vmatpush2.bf16.msra.mxu0 0
    %409 = vmatprep.subr.bf16.mxu0 0
    %410 = vmatpush2.bf16.msra.mxu0 0
    %411 = vmatprep.subr.bf16.mxu0 0
    %412 = vmatpush2.bf16.msra.mxu0 0
    %413 = vmatprep.subr.bf16.mxu0 0
    %414 = vmatpush2.bf16.msra.mxu0 0
    %415 = vmatprep.subr.bf16.mxu0 0
    %416 = vmatpush2.bf16.msra.mxu0 0
    %417 = vmatprep.subr.bf16.mxu0 0
    %418 = vmatpush2.bf16.msra.mxu0 0
    %419 = vmatprep.subr.bf16.mxu0 0
    %420 = vmatpush2.bf16.msra.mxu0 0
    %421 = vmatprep.subr.bf16.mxu0 0
    %422 = vmatpush2.bf16.msra.mxu0 0
    %423 = vmatprep.mubr.bf16.mxu0 0
    %424 = vmatmul.mubr.bf16.gmra.mxu0 %v93
    %v425 = vpop.f32.mrf.mxu0
    %v426 = vadd.f32 0.0, %v425
    %v427 = vpop.f32.mrf.mxu0
    %v428 = vadd.f32 0.0, %v427
    %v429 = vpop.f32.mrf.mxu0
    %v430 = vadd.f32 0.0, %v429
    %v431 = vpop.f32.mrf.mxu0
    %v432 = vadd.f32 0.0, %v431
    %433 = vmatprep.mubr.bf16.mxu0 0
    %434 = vmatmul.mubr.bf16.gmra.mxu0 %v96
    %v435 = vpop.f32.mrf.mxu0
    %v436 = vadd.f32 0.0, %v435
    %v437 = vpop.f32.mrf.mxu0
    %v438 = vadd.f32 0.0, %v437
    %v439 = vpop.f32.mrf.mxu0
    %v440 = vadd.f32 0.0, %v439
    %v441 = vpop.f32.mrf.mxu0
    %v442 = vadd.f32 0.0, %v441
    %443 = vmatprep.mubr.bf16.mxu0 0
    %444 = vmatmul.mubr.bf16.gmra.mxu0 %v99
    %v445 = vpop.f32.mrf.mxu0
    %v446 = vadd.f32 0.0, %v445
    %v447 = vpop.f32.mrf.mxu0
    %v448 = vadd.f32 0.0, %v447
    %v449 = vpop.f32.mrf.mxu0
    %v450 = vadd.f32 0.0, %v449
    %v451 = vpop.f32.mrf.mxu0
    %v452 = vadd.f32 0.0, %v451
    %453 = vmatprep.mubr.bf16.mxu0 0
    %454 = vmatmul.mubr.bf16.gmra.mxu0 %v102
    %v455 = vpop.f32.mrf.mxu0
    %v456 = vadd.f32 0.0, %v455
    %v457 = vpop.f32.mrf.mxu0
    %v458 = vadd.f32 0.0, %v457
    %v459 = vpop.f32.mrf.mxu0
    %v460 = vadd.f32 0.0, %v459
    %v461 = vpop.f32.mrf.mxu0
    %v462 = vadd.f32 0.0, %v461
    %463 = vmatprep.mubr.bf16.mxu0 0
    %464 = vmatmul.mubr.bf16.gmra.mxu0 %v105
    %v465 = vpop.f32.mrf.mxu0
    %v466 = vadd.f32 0.0, %v465
    %v467 = vpop.f32.mrf.mxu0
    %v468 = vadd.f32 0.0, %v467
    %v469 = vpop.f32.mrf.mxu0
    %v470 = vadd.f32 0.0, %v469
    %v471 = vpop.f32.mrf.mxu0
    %v472 = vadd.f32 0.0, %v471
    %473 = vmatprep.mubr.bf16.mxu0 0
    %474 = vmatmul.mubr.bf16.gmra.mxu0 %v108
    %v475 = vpop.f32.mrf.mxu0
    %v476 = vadd.f32 0.0, %v475
    %v477 = vpop.f32.mrf.mxu0
    %v478 = vadd.f32 0.0, %v477
    %v479 = vpop.f32.mrf.mxu0
    %v480 = vadd.f32 0.0, %v479
    %v481 = vpop.f32.mrf.mxu0
    %v482 = vadd.f32 0.0, %v481
    %483 = vmatprep.mubr.bf16.mxu0 0
    %484 = vmatmul.mubr.bf16.gmra.mxu0 %v111
    %v485 = vpop.f32.mrf.mxu0
    %v486 = vadd.f32 0.0, %v485
    %v487 = vpop.f32.mrf.mxu0
    %v488 = vadd.f32 0.0, %v487
    %v489 = vpop.f32.mrf.mxu0
    %v490 = vadd.f32 0.0, %v489
    %v491 = vpop.f32.mrf.mxu0
    %v492 = vadd.f32 0.0, %v491
    %493 = vmatprep.mubr.bf16.mxu0 0
    %494 = vmatmul.mubr.bf16.gmra.mxu0 %v114
    %v495 = vpop.f32.mrf.mxu0
    %v496 = vadd.f32 0.0, %v495
    %v497 = vpop.f32.mrf.mxu0
    %v498 = vadd.f32 0.0, %v497
    %v499 = vpop.f32.mrf.mxu0
    %v500 = vadd.f32 0.0, %v499
    %v501 = vpop.f32.mrf.mxu0
    %v502 = vadd.f32 0.0, %v501
    %503 = vdwg.mxu0
    %504 = vmatprep.subr.bf16.mxu0 0
    %505 = vmatpush1.bf16.msra.mxu0 0
    %506 = vmatprep.subr.bf16.mxu0 0
    %507 = vmatpush1.bf16.msra.mxu0 0
    %508 = vmatprep.subr.bf16.mxu0 0
    %509 = vmatpush1.bf16.msra.mxu0 0
    %510 = vmatprep.subr.bf16.mxu0 0
    %511 = vmatpush1.bf16.msra.mxu0 0
    %512 = vmatprep.subr.bf16.mxu0 0
    %513 = vmatpush1.bf16.msra.mxu0 0
    %514 = vmatprep.subr.bf16.mxu0 0
    %515 = vmatpush1.bf16.msra.mxu0 0
    %516 = vmatprep.subr.bf16.mxu0 0
    %517 = vmatpush1.bf16.msra.mxu0 0
    %518 = vmatprep.subr.bf16.mxu0 %v139
    %519 = vmatpush1.bf16.msra.mxu0 %v136
    %520 = vmatprep.subr.bf16.mxu0 0
    %521 = vmatpush2.bf16.msra.mxu0 0
    %522 = vmatprep.subr.bf16.mxu0 0
    %523 = vmatpush2.bf16.msra.mxu0 0
    %524 = vmatprep.subr.bf16.mxu0 0
    %525 = vmatpush2.bf16.msra.mxu0 0
    %526 = vmatprep.subr.bf16.mxu0 0
    %527 = vmatpush2.bf16.msra.mxu0 0
    %528 = vmatprep.subr.bf16.mxu0 0
    %529 = vmatpush2.bf16.msra.mxu0 0
    %530 = vmatprep.subr.bf16.mxu0 0
    %531 = vmatpush2.bf16.msra.mxu0 0
    %532 = vmatprep.subr.bf16.mxu0 0
    %533 = vmatpush2.bf16.msra.mxu0 0
    %534 = vmatprep.subr.bf16.mxu0 0
    %535 = vmatpush2.bf16.msra.mxu0 0
    %536 = vmatprep.mubr.bf16.mxu0 0
    %537 = vmatmul.mubr.bf16.gmra.mxu0 %v93
    %v538 = vpop.f32.mrf.mxu0
    %v539 = vadd.f32 0.0, %v538
    %v540 = vpop.f32.mrf.mxu0
    %v541 = vadd.f32 0.0, %v540
    %v542 = vpop.f32.mrf.mxu0
    %v543 = vadd.f32 0.0, %v542
    %v544 = vpop.f32.mrf.mxu0
    %v545 = vadd.f32 0.0, %v544
    %546 = vmatprep.mubr.bf16.mxu0 0
    %547 = vmatmul.mubr.bf16.gmra.mxu0 %v96
    %v548 = vpop.f32.mrf.mxu0
    %v549 = vadd.f32 0.0, %v548
    %v550 = vpop.f32.mrf.mxu0
    %v551 = vadd.f32 0.0, %v550
    %v552 = vpop.f32.mrf.mxu0
    %v553 = vadd.f32 0.0, %v552
    %v554 = vpop.f32.mrf.mxu0
    %v555 = vadd.f32 0.0, %v554
    %556 = vmatprep.mubr.bf16.mxu0 0
    %557 = vmatmul.mubr.bf16.gmra.mxu0 %v99
    %v558 = vpop.f32.mrf.mxu0
    %v559 = vadd.f32 0.0, %v558
    %v560 = vpop.f32.mrf.mxu0
    %v561 = vadd.f32 0.0, %v560
    %v562 = vpop.f32.mrf.mxu0
    %v563 = vadd.f32 0.0, %v562
    %v564 = vpop.f32.mrf.mxu0
    %v565 = vadd.f32 0.0, %v564
    %566 = vmatprep.mubr.bf16.mxu0 0
    %567 = vmatmul.mubr.bf16.gmra.mxu0 %v102
    %v568 = vpop.f32.mrf.mxu0
    %v569 = vadd.f32 0.0, %v568
    %v570 = vpop.f32.mrf.mxu0
    %v571 = vadd.f32 0.0, %v570
    %v572 = vpop.f32.mrf.mxu0
    %v573 = vadd.f32 0.0, %v572
    %v574 = vpop.f32.mrf.mxu0
    %v575 = vadd.f32 0.0, %v574
    %576 = vmatprep.mubr.bf16.mxu0 0
    %577 = vmatmul.mubr.bf16.gmra.mxu0 %v105
    %v578 = vpop.f32.mrf.mxu0
    %v579 = vadd.f32 0.0, %v578
    %v580 = vpop.f32.mrf.mxu0
    %v581 = vadd.f32 0.0, %v580
    %v582 = vpop.f32.mrf.mxu0
    %v583 = vadd.f32 0.0, %v582
    %v584 = vpop.f32.mrf.mxu0
    %v585 = vadd.f32 0.0, %v584
    %586 = vmatprep.mubr.bf16.mxu0 0
    %587 = vmatmul.mubr.bf16.gmra.mxu0 %v108
    %v588 = vpop.f32.mrf.mxu0
    %v589 = vadd.f32 0.0, %v588
    %v590 = vpop.f32.mrf.mxu0
    %v591 = vadd.f32 0.0, %v590
    %v592 = vpop.f32.mrf.mxu0
    %v593 = vadd.f32 0.0, %v592
    %v594 = vpop.f32.mrf.mxu0
    %v595 = vadd.f32 0.0, %v594
    %596 = vmatprep.mubr.bf16.mxu0 0
    %597 = vmatmul.mubr.bf16.gmra.mxu0 %v111
    %v598 = vpop.f32.mrf.mxu0
    %v599 = vadd.f32 0.0, %v598
    %v600 = vpop.f32.mrf.mxu0
    %v601 = vadd.f32 0.0, %v600
    %v602 = vpop.f32.mrf.mxu0
    %v603 = vadd.f32 0.0, %v602
    %v604 = vpop.f32.mrf.mxu0
    %v605 = vadd.f32 0.0, %v604
    %606 = vmatprep.mubr.bf16.mxu0 0
    %607 = vmatmul.mubr.bf16.gmra.mxu0 %v114
    %v608 = vpop.f32.mrf.mxu0
    %v609 = vadd.f32 0.0, %v608
    %v610 = vpop.f32.mrf.mxu0
    %v611 = vadd.f32 0.0, %v610
    %v612 = vpop.f32.mrf.mxu0
    %v613 = vadd.f32 0.0, %v612
    %v614 = vpop.f32.mrf.mxu0
    %v615 = vadd.f32 0.0, %v614
    %616 = vdwg.mxu0
    %617 = vmatprep.subr.bf16.mxu0 0
    %618 = vmatpush1.bf16.msra.mxu0 0
    %619 = vmatprep.subr.bf16.mxu0 0
    %620 = vmatpush1.bf16.msra.mxu0 0
    %621 = vmatprep.subr.bf16.mxu0 0
    %622 = vmatpush1.bf16.msra.mxu0 0
    %623 = vmatprep.subr.bf16.mxu0 0
    %624 = vmatpush1.bf16.msra.mxu0 0
    %625 = vmatprep.subr.bf16.mxu0 0
    %626 = vmatpush1.bf16.msra.mxu0 0
    %627 = vmatprep.subr.bf16.mxu0 0
    %628 = vmatpush1.bf16.msra.mxu0 0
    %629 = vmatprep.subr.bf16.mxu0 0
    %630 = vmatpush1.bf16.msra.mxu0 0
    %631 = vmatprep.subr.bf16.mxu0 %v145
    %632 = vmatpush1.bf16.msra.mxu0 %v142
    %633 = vmatprep.subr.bf16.mxu0 0
    %634 = vmatpush2.bf16.msra.mxu0 0
    %635 = vmatprep.subr.bf16.mxu0 0
    %636 = vmatpush2.bf16.msra.mxu0 0
    %637 = vmatprep.subr.bf16.mxu0 0
    %638 = vmatpush2.bf16.msra.mxu0 0
    %639 = vmatprep.subr.bf16.mxu0 0
    %640 = vmatpush2.bf16.msra.mxu0 0
    %641 = vmatprep.subr.bf16.mxu0 0
    %642 = vmatpush2.bf16.msra.mxu0 0
    %643 = vmatprep.subr.bf16.mxu0 0
    %644 = vmatpush2.bf16.msra.mxu0 0
    %645 = vmatprep.subr.bf16.mxu0 0
    %646 = vmatpush2.bf16.msra.mxu0 0
    %647 = vmatprep.subr.bf16.mxu0 0
    %648 = vmatpush2.bf16.msra.mxu0 0
    %649 = vmatprep.mubr.bf16.mxu0 0
    %650 = vmatmul.mubr.bf16.gmra.mxu0 %v93
    %v651 = vpop.f32.mrf.mxu0
    %v652 = vadd.f32 0.0, %v651
    %v653 = vpop.f32.mrf.mxu0
    %v654 = vadd.f32 0.0, %v653
    %v655 = vpop.f32.mrf.mxu0
    %v656 = vadd.f32 0.0, %v655
    %v657 = vpop.f32.mrf.mxu0
    %v658 = vadd.f32 0.0, %v657
    %659 = vmatprep.mubr.bf16.mxu0 0
    %660 = vmatmul.mubr.bf16.gmra.mxu0 %v96
    %v661 = vpop.f32.mrf.mxu0
    %v662 = vadd.f32 0.0, %v661
    %v663 = vpop.f32.mrf.mxu0
    %v664 = vadd.f32 0.0, %v663
    %v665 = vpop.f32.mrf.mxu0
    %v666 = vadd.f32 0.0, %v665
    %v667 = vpop.f32.mrf.mxu0
    %v668 = vadd.f32 0.0, %v667
    %669 = vmatprep.mubr.bf16.mxu0 0
    %670 = vmatmul.mubr.bf16.gmra.mxu0 %v99
    %v671 = vpop.f32.mrf.mxu0
    %v672 = vadd.f32 0.0, %v671
    %v673 = vpop.f32.mrf.mxu0
    %v674 = vadd.f32 0.0, %v673
    %v675 = vpop.f32.mrf.mxu0
    %v676 = vadd.f32 0.0, %v675
    %v677 = vpop.f32.mrf.mxu0
    %v678 = vadd.f32 0.0, %v677
    %679 = vmatprep.mubr.bf16.mxu0 0
    %680 = vmatmul.mubr.bf16.gmra.mxu0 %v102
    %v681 = vpop.f32.mrf.mxu0
    %v682 = vadd.f32 0.0, %v681
    %v683 = vpop.f32.mrf.mxu0
    %v684 = vadd.f32 0.0, %v683
    %v685 = vpop.f32.mrf.mxu0
    %v686 = vadd.f32 0.0, %v685
    %v687 = vpop.f32.mrf.mxu0
    %v688 = vadd.f32 0.0, %v687
    %689 = vmatprep.mubr.bf16.mxu0 0
    %690 = vmatmul.mubr.bf16.gmra.mxu0 %v105
    %v691 = vpop.f32.mrf.mxu0
    %v692 = vadd.f32 0.0, %v691
    %v693 = vpop.f32.mrf.mxu0
    %v694 = vadd.f32 0.0, %v693
    %v695 = vpop.f32.mrf.mxu0
    %v696 = vadd.f32 0.0, %v695
    %v697 = vpop.f32.mrf.mxu0
    %v698 = vadd.f32 0.0, %v697
    %699 = vmatprep.mubr.bf16.mxu0 0
    %700 = vmatmul.mubr.bf16.gmra.mxu0 %v108
    %v701 = vpop.f32.mrf.mxu0
    %v702 = vadd.f32 0.0, %v701
    %v703 = vpop.f32.mrf.mxu0
    %v704 = vadd.f32 0.0, %v703
    %v705 = vpop.f32.mrf.mxu0
    %v706 = vadd.f32 0.0, %v705
    %v707 = vpop.f32.mrf.mxu0
    %v708 = vadd.f32 0.0, %v707
    %709 = vmatprep.mubr.bf16.mxu0 0
    %710 = vmatmul.mubr.bf16.gmra.mxu0 %v111
    %v711 = vpop.f32.mrf.mxu0
    %v712 = vadd.f32 0.0, %v711
    %v713 = vpop.f32.mrf.mxu0
    %v714 = vadd.f32 0.0, %v713
    %v715 = vpop.f32.mrf.mxu0
    %v716 = vadd.f32 0.0, %v715
    %v717 = vpop.f32.mrf.mxu0
    %v718 = vadd.f32 0.0, %v717
    %719 = vmatprep.mubr.bf16.mxu0 0
    %720 = vmatmul.mubr.bf16.gmra.mxu0 %v114
    %v721 = vpop.f32.mrf.mxu0
    %v722 = vadd.f32 0.0, %v721
    %v723 = vpop.f32.mrf.mxu0
    %v724 = vadd.f32 0.0, %v723
    %v725 = vpop.f32.mrf.mxu0
    %v726 = vadd.f32 0.0, %v725
    %v727 = vpop.f32.mrf.mxu0
    %v728 = vadd.f32 0.0, %v727
    %729 = vdwg.mxu0
    %730 = vmatprep.subr.bf16.mxu0 0
    %731 = vmatpush1.bf16.msra.mxu0 0
    %732 = vmatprep.subr.bf16.mxu0 0
    %733 = vmatpush1.bf16.msra.mxu0 0
    %734 = vmatprep.subr.bf16.mxu0 0
    %735 = vmatpush1.bf16.msra.mxu0 0
    %736 = vmatprep.subr.bf16.mxu0 0
    %737 = vmatpush1.bf16.msra.mxu0 0
    %738 = vmatprep.subr.bf16.mxu0 0
    %739 = vmatpush1.bf16.msra.mxu0 0
    %740 = vmatprep.subr.bf16.mxu0 0
    %741 = vmatpush1.bf16.msra.mxu0 0
    %742 = vmatprep.subr.bf16.mxu0 0
    %743 = vmatpush1.bf16.msra.mxu0 0
    %744 = vmatprep.subr.bf16.mxu0 %v151
    %745 = vmatpush1.bf16.msra.mxu0 %v148
    %746 = vmatprep.subr.bf16.mxu0 0
    %747 = vmatpush2.bf16.msra.mxu0 0
    %748 = vmatprep.subr.bf16.mxu0 0
    %749 = vmatpush2.bf16.msra.mxu0 0
    %750 = vmatprep.subr.bf16.mxu0 0
    %751 = vmatpush2.bf16.msra.mxu0 0
    %752 = vmatprep.subr.bf16.mxu0 0
    %753 = vmatpush2.bf16.msra.mxu0 0
    %754 = vmatprep.subr.bf16.mxu0 0
    %755 = vmatpush2.bf16.msra.mxu0 0
    %756 = vmatprep.subr.bf16.mxu0 0
    %757 = vmatpush2.bf16.msra.mxu0 0
    %758 = vmatprep.subr.bf16.mxu0 0
    %759 = vmatpush2.bf16.msra.mxu0 0
    %760 = vmatprep.subr.bf16.mxu0 0
    %761 = vmatpush2.bf16.msra.mxu0 0
    %762 = vmatprep.mubr.bf16.mxu0 0
    %763 = vmatmul.mubr.bf16.gmra.mxu0 %v93
    %v764 = vpop.f32.mrf.mxu0
    %v765 = vadd.f32 0.0, %v764
    %v766 = vpop.f32.mrf.mxu0
    %v767 = vadd.f32 0.0, %v766
    %v768 = vpop.f32.mrf.mxu0
    %v769 = vadd.f32 0.0, %v768
    %v770 = vpop.f32.mrf.mxu0
    %v771 = vadd.f32 0.0, %v770
    %772 = vmatprep.mubr.bf16.mxu0 0
    %773 = vmatmul.mubr.bf16.gmra.mxu0 %v96
    %v774 = vpop.f32.mrf.mxu0
    %v775 = vadd.f32 0.0, %v774
    %v776 = vpop.f32.mrf.mxu0
    %v777 = vadd.f32 0.0, %v776
    %v778 = vpop.f32.mrf.mxu0
    %v779 = vadd.f32 0.0, %v778
    %v780 = vpop.f32.mrf.mxu0
    %v781 = vadd.f32 0.0, %v780
    %782 = vmatprep.mubr.bf16.mxu0 0
    %783 = vmatmul.mubr.bf16.gmra.mxu0 %v99
    %v784 = vpop.f32.mrf.mxu0
    %v785 = vadd.f32 0.0, %v784
    %v786 = vpop.f32.mrf.mxu0
    %v787 = vadd.f32 0.0, %v786
    %v788 = vpop.f32.mrf.mxu0
    %v789 = vadd.f32 0.0, %v788
    %v790 = vpop.f32.mrf.mxu0
    %v791 = vadd.f32 0.0, %v790
    %792 = vmatprep.mubr.bf16.mxu0 0
    %793 = vmatmul.mubr.bf16.gmra.mxu0 %v102
    %v794 = vpop.f32.mrf.mxu0
    %v795 = vadd.f32 0.0, %v794
    %v796 = vpop.f32.mrf.mxu0
    %v797 = vadd.f32 0.0, %v796
    %v798 = vpop.f32.mrf.mxu0
    %v799 = vadd.f32 0.0, %v798
    %v800 = vpop.f32.mrf.mxu0
    %v801 = vadd.f32 0.0, %v800
    %802 = vmatprep.mubr.bf16.mxu0 0
    %803 = vmatmul.mubr.bf16.gmra.mxu0 %v105
    %v804 = vpop.f32.mrf.mxu0
    %v805 = vadd.f32 0.0, %v804
    %v806 = vpop.f32.mrf.mxu0
    %v807 = vadd.f32 0.0, %v806
    %v808 = vpop.f32.mrf.mxu0
    %v809 = vadd.f32 0.0, %v808
    %v810 = vpop.f32.mrf.mxu0
    %v811 = vadd.f32 0.0, %v810
    %812 = vmatprep.mubr.bf16.mxu0 0
    %813 = vmatmul.mubr.bf16.gmra.mxu0 %v108
    %v814 = vpop.f32.mrf.mxu0
    %v815 = vadd.f32 0.0, %v814
    %v816 = vpop.f32.mrf.mxu0
    %v817 = vadd.f32 0.0, %v816
    %v818 = vpop.f32.mrf.mxu0
    %v819 = vadd.f32 0.0, %v818
    %v820 = vpop.f32.mrf.mxu0
    %v821 = vadd.f32 0.0, %v820
    %822 = vmatprep.mubr.bf16.mxu0 0
    %823 = vmatmul.mubr.bf16.gmra.mxu0 %v111
    %v824 = vpop.f32.mrf.mxu0
    %v825 = vadd.f32 0.0, %v824
    %v826 = vpop.f32.mrf.mxu0
    %v827 = vadd.f32 0.0, %v826
    %v828 = vpop.f32.mrf.mxu0
    %v829 = vadd.f32 0.0, %v828
    %v830 = vpop.f32.mrf.mxu0
    %v831 = vadd.f32 0.0, %v830
    %832 = vmatprep.mubr.bf16.mxu0 0
    %833 = vmatmul.mubr.bf16.gmra.mxu0 %v114
    %v834 = vpop.f32.mrf.mxu0
    %v835 = vadd.f32 0.0, %v834
    %v836 = vpop.f32.mrf.mxu0
    %v837 = vadd.f32 0.0, %v836
    %v838 = vpop.f32.mrf.mxu0
    %v839 = vadd.f32 0.0, %v838
    %v840 = vpop.f32.mrf.mxu0
    %v841 = vadd.f32 0.0, %v840
    %842 = vdwg.mxu0
    %843 = vmatprep.subr.bf16.mxu0 0
    %844 = vmatpush1.bf16.msra.mxu0 0
    %845 = vmatprep.subr.bf16.mxu0 0
    %846 = vmatpush1.bf16.msra.mxu0 0
    %847 = vmatprep.subr.bf16.mxu0 0
    %848 = vmatpush1.bf16.msra.mxu0 0
    %849 = vmatprep.subr.bf16.mxu0 0
    %850 = vmatpush1.bf16.msra.mxu0 0
    %851 = vmatprep.subr.bf16.mxu0 0
    %852 = vmatpush1.bf16.msra.mxu0 0
    %853 = vmatprep.subr.bf16.mxu0 0
    %854 = vmatpush1.bf16.msra.mxu0 0
    %855 = vmatprep.subr.bf16.mxu0 0
    %856 = vmatpush1.bf16.msra.mxu0 0
    %857 = vmatprep.subr.bf16.mxu0 %v157
    %858 = vmatpush1.bf16.msra.mxu0 %v154
    %859 = vmatprep.subr.bf16.mxu0 0
    %860 = vmatpush2.bf16.msra.mxu0 0
    %861 = vmatprep.subr.bf16.mxu0 0
    %862 = vmatpush2.bf16.msra.mxu0 0
    %863 = vmatprep.subr.bf16.mxu0 0
    %864 = vmatpush2.bf16.msra.mxu0 0
    %865 = vmatprep.subr.bf16.mxu0 0
    %866 = vmatpush2.bf16.msra.mxu0 0
    %867 = vmatprep.subr.bf16.mxu0 0
    %868 = vmatpush2.bf16.msra.mxu0 0
    %869 = vmatprep.subr.bf16.mxu0 0
    %870 = vmatpush2.bf16.msra.mxu0 0
    %871 = vmatprep.subr.bf16.mxu0 0
    %872 = vmatpush2.bf16.msra.mxu0 0
    %873 = vmatprep.subr.bf16.mxu0 0
    %874 = vmatpush2.bf16.msra.mxu0 0
    %875 = vmatprep.mubr.bf16.mxu0 0
    %876 = vmatmul.mubr.bf16.gmra.mxu0 %v93
    %v877 = vpop.f32.mrf.mxu0
    %v878 = vadd.f32 0.0, %v877
    %v879 = vpop.f32.mrf.mxu0
    %v880 = vadd.f32 0.0, %v879
    %v881 = vpop.f32.mrf.mxu0
    %v882 = vadd.f32 0.0, %v881
    %v883 = vpop.f32.mrf.mxu0
    %v884 = vadd.f32 0.0, %v883
    %885 = vmatprep.mubr.bf16.mxu0 0
    %886 = vmatmul.mubr.bf16.gmra.mxu0 %v96
    %v887 = vpop.f32.mrf.mxu0
    %v888 = vadd.f32 0.0, %v887
    %v889 = vpop.f32.mrf.mxu0
    %v890 = vadd.f32 0.0, %v889
    %v891 = vpop.f32.mrf.mxu0
    %v892 = vadd.f32 0.0, %v891
    %v893 = vpop.f32.mrf.mxu0
    %v894 = vadd.f32 0.0, %v893
    %895 = vmatprep.mubr.bf16.mxu0 0
    %896 = vmatmul.mubr.bf16.gmra.mxu0 %v99
    %v897 = vpop.f32.mrf.mxu0
    %v898 = vadd.f32 0.0, %v897
    %v899 = vpop.f32.mrf.mxu0
    %v900 = vadd.f32 0.0, %v899
    %v901 = vpop.f32.mrf.mxu0
    %v902 = vadd.f32 0.0, %v901
    %v903 = vpop.f32.mrf.mxu0
    %v904 = vadd.f32 0.0, %v903
    %905 = vmatprep.mubr.bf16.mxu0 0
    %906 = vmatmul.mubr.bf16.gmra.mxu0 %v102
    %v907 = vpop.f32.mrf.mxu0
    %v908 = vadd.f32 0.0, %v907
    %v909 = vpop.f32.mrf.mxu0
    %v910 = vadd.f32 0.0, %v909
    %v911 = vpop.f32.mrf.mxu0
    %v912 = vadd.f32 0.0, %v911
    %v913 = vpop.f32.mrf.mxu0
    %v914 = vadd.f32 0.0, %v913
    %915 = vmatprep.mubr.bf16.mxu0 0
    %916 = vmatmul.mubr.bf16.gmra.mxu0 %v105
    %v917 = vpop.f32.mrf.mxu0
    %v918 = vadd.f32 0.0, %v917
    %v919 = vpop.f32.mrf.mxu0
    %v920 = vadd.f32 0.0, %v919
    %v921 = vpop.f32.mrf.mxu0
    %v922 = vadd.f32 0.0, %v921
    %v923 = vpop.f32.mrf.mxu0
    %v924 = vadd.f32 0.0, %v923
    %925 = vmatprep.mubr.bf16.mxu0 0
    %926 = vmatmul.mubr.bf16.gmra.mxu0 %v108
    %v927 = vpop.f32.mrf.mxu0
    %v928 = vadd.f32 0.0, %v927
    %v929 = vpop.f32.mrf.mxu0
    %v930 = vadd.f32 0.0, %v929
    %v931 = vpop.f32.mrf.mxu0
    %v932 = vadd.f32 0.0, %v931
    %v933 = vpop.f32.mrf.mxu0
    %v934 = vadd.f32 0.0, %v933
    %935 = vmatprep.mubr.bf16.mxu0 0
    %936 = vmatmul.mubr.bf16.gmra.mxu0 %v111
    %v937 = vpop.f32.mrf.mxu0
    %v938 = vadd.f32 0.0, %v937
    %v939 = vpop.f32.mrf.mxu0
    %v940 = vadd.f32 0.0, %v939
    %v941 = vpop.f32.mrf.mxu0
    %v942 = vadd.f32 0.0, %v941
    %v943 = vpop.f32.mrf.mxu0
    %v944 = vadd.f32 0.0, %v943
    %945 = vmatprep.mubr.bf16.mxu0 0
    %946 = vmatmul.mubr.bf16.gmra.mxu0 %v114
    %v947 = vpop.f32.mrf.mxu0
    %v948 = vadd.f32 0.0, %v947
    %v949 = vpop.f32.mrf.mxu0
    %v950 = vadd.f32 0.0, %v949
    %v951 = vpop.f32.mrf.mxu0
    %v952 = vadd.f32 0.0, %v951
    %v953 = vpop.f32.mrf.mxu0
    %v954 = vadd.f32 0.0, %v953
    %955 = vdwg.mxu0
    %956 = vmatprep.subr.bf16.mxu0 0
    %957 = vmatpush1.bf16.msra.mxu0 0
    %958 = vmatprep.subr.bf16.mxu0 0
    %959 = vmatpush1.bf16.msra.mxu0 0
    %960 = vmatprep.subr.bf16.mxu0 0
    %961 = vmatpush1.bf16.msra.mxu0 0
    %962 = vmatprep.subr.bf16.mxu0 0
    %963 = vmatpush1.bf16.msra.mxu0 0
    %964 = vmatprep.subr.bf16.mxu0 0
    %965 = vmatpush1.bf16.msra.mxu0 0
    %966 = vmatprep.subr.bf16.mxu0 0
    %967 = vmatpush1.bf16.msra.mxu0 0
    %968 = vmatprep.subr.bf16.mxu0 0
    %969 = vmatpush1.bf16.msra.mxu0 0
    %970 = vmatprep.subr.bf16.mxu0 %v163
    %971 = vmatpush1.bf16.msra.mxu0 %v160
    %972 = vmatprep.subr.bf16.mxu0 0
    %973 = vmatpush2.bf16.msra.mxu0 0
    %974 = vmatprep.subr.bf16.mxu0 0
    %975 = vmatpush2.bf16.msra.mxu0 0
    %976 = vmatprep.subr.bf16.mxu0 0
    %977 = vmatpush2.bf16.msra.mxu0 0
    %978 = vmatprep.subr.bf16.mxu0 0
    %979 = vmatpush2.bf16.msra.mxu0 0
    %980 = vmatprep.subr.bf16.mxu0 0
    %981 = vmatpush2.bf16.msra.mxu0 0
    %982 = vmatprep.subr.bf16.mxu0 0
    %983 = vmatpush2.bf16.msra.mxu0 0
    %984 = vmatprep.subr.bf16.mxu0 0
    %985 = vmatpush2.bf16.msra.mxu0 0
    %986 = vmatprep.subr.bf16.mxu0 0
    %987 = vmatpush2.bf16.msra.mxu0 0
    %988 = vmatprep.mubr.bf16.mxu0 0
    %989 = vmatmul.mubr.bf16.gmra.mxu0 %v93
    %v990 = vpop.f32.mrf.mxu0
    %v991 = vadd.f32 0.0, %v990
    %v992 = vpop.f32.mrf.mxu0
    %v993 = vadd.f32 0.0, %v992
    %v994 = vpop.f32.mrf.mxu0
    %v995 = vadd.f32 0.0, %v994
    %v996 = vpop.f32.mrf.mxu0
    %v997 = vadd.f32 0.0, %v996
    %998 = vmatprep.mubr.bf16.mxu0 0
    %999 = vmatmul.mubr.bf16.gmra.mxu0 %v96
    %v1000 = vpop.f32.mrf.mxu0
    %v1001 = vadd.f32 0.0, %v1000
    %v1002 = vpop.f32.mrf.mxu0
    %v1003 = vadd.f32 0.0, %v1002
    %v1004 = vpop.f32.mrf.mxu0
    %v1005 = vadd.f32 0.0, %v1004
    %v1006 = vpop.f32.mrf.mxu0
    %v1007 = vadd.f32 0.0, %v1006
    %1008 = vmatprep.mubr.bf16.mxu0 0
    %1009 = vmatmul.mubr.bf16.gmra.mxu0 %v99
    %v1010 = vpop.f32.mrf.mxu0
    %v1011 = vadd.f32 0.0, %v1010
    %v1012 = vpop.f32.mrf.mxu0
    %v1013 = vadd.f32 0.0, %v1012
    %v1014 = vpop.f32.mrf.mxu0
    %v1015 = vadd.f32 0.0, %v1014
    %v1016 = vpop.f32.mrf.mxu0
    %v1017 = vadd.f32 0.0, %v1016
    %1018 = vmatprep.mubr.bf16.mxu0 0
    %1019 = vmatmul.mubr.bf16.gmra.mxu0 %v102
    %v1020 = vpop.f32.mrf.mxu0
    %v1021 = vadd.f32 0.0, %v1020
    %v1022 = vpop.f32.mrf.mxu0
    %v1023 = vadd.f32 0.0, %v1022
    %v1024 = vpop.f32.mrf.mxu0
    %v1025 = vadd.f32 0.0, %v1024
    %v1026 = vpop.f32.mrf.mxu0
    %v1027 = vadd.f32 0.0, %v1026
    %1028 = vmatprep.mubr.bf16.mxu0 0
    %1029 = vmatmul.mubr.bf16.gmra.mxu0 %v105
    %v1030 = vpop.f32.mrf.mxu0
    %v1031 = vadd.f32 0.0, %v1030
    %v1032 = vpop.f32.mrf.mxu0
    %v1033 = vadd.f32 0.0, %v1032
    %v1034 = vpop.f32.mrf.mxu0
    %v1035 = vadd.f32 0.0, %v1034
    %v1036 = vpop.f32.mrf.mxu0
    %v1037 = vadd.f32 0.0, %v1036
    %1038 = vmatprep.mubr.bf16.mxu0 0
    %1039 = vmatmul.mubr.bf16.gmra.mxu0 %v108
    %v1040 = vpop.f32.mrf.mxu0
    %v1041 = vadd.f32 0.0, %v1040
    %v1042 = vpop.f32.mrf.mxu0
    %v1043 = vadd.f32 0.0, %v1042
    %v1044 = vpop.f32.mrf.mxu0
    %v1045 = vadd.f32 0.0, %v1044
    %v1046 = vpop.f32.mrf.mxu0
    %v1047 = vadd.f32 0.0, %v1046
    %1048 = vmatprep.mubr.bf16.mxu0 0
    %1049 = vmatmul.mubr.bf16.gmra.mxu0 %v111
    %v1050 = vpop.f32.mrf.mxu0
    %v1051 = vadd.f32 0.0, %v1050
    %v1052 = vpop.f32.mrf.mxu0
    %v1053 = vadd.f32 0.0, %v1052
    %v1054 = vpop.f32.mrf.mxu0
    %v1055 = vadd.f32 0.0, %v1054
    %v1056 = vpop.f32.mrf.mxu0
    %v1057 = vadd.f32 0.0, %v1056
    %1058 = vmatprep.mubr.bf16.mxu0 0
    %1059 = vmatmul.mubr.bf16.gmra.mxu0 %v114
    %v1060 = vpop.f32.mrf.mxu0
    %v1061 = vadd.f32 0.0, %v1060
    %v1062 = vpop.f32.mrf.mxu0
    %v1063 = vadd.f32 0.0, %v1062
    %v1064 = vpop.f32.mrf.mxu0
    %v1065 = vadd.f32 0.0, %v1064
    %v1066 = vpop.f32.mrf.mxu0
    %v1067 = vadd.f32 0.0, %v1066
    %1068 = vdwg.mxu0
    %v1069 = vpack.c.bf16 %v204, %v200
    %v1070 = vpack.c.bf16 %v206, %v202
    %v1071 = vpack.c.bf16 %v317, %v313
    %v1072 = vpack.c.bf16 %v319, %v315
    %v1073 = vpack.c.bf16 %v430, %v426
    %v1074 = vpack.c.bf16 %v432, %v428
    %v1075 = vpack.c.bf16 %v543, %v539
    %v1076 = vpack.c.bf16 %v545, %v541
    %v1077 = vpack.c.bf16 %v656, %v652
    %v1078 = vpack.c.bf16 %v658, %v654
    %v1079 = vpack.c.bf16 %v769, %v765
    %v1080 = vpack.c.bf16 %v771, %v767
    %v1081 = vpack.c.bf16 %v882, %v878
    %v1082 = vpack.c.bf16 %v884, %v880
    %v1083 = vpack.c.bf16 %v995, %v991
    %v1084 = vpack.c.bf16 %v997, %v993
    %v1085 = vpack.c.bf16 %v214, %v210
    %v1086 = vpack.c.bf16 %v216, %v212
    %v1087 = vpack.c.bf16 %v327, %v323
    %v1088 = vpack.c.bf16 %v329, %v325
    %v1089 = vpack.c.bf16 %v440, %v436
    %v1090 = vpack.c.bf16 %v442, %v438
    %v1091 = vpack.c.bf16 %v553, %v549
    %v1092 = vpack.c.bf16 %v555, %v551
    %v1093 = vpack.c.bf16 %v666, %v662
    %v1094 = vpack.c.bf16 %v668, %v664
    %v1095 = vpack.c.bf16 %v779, %v775
    %v1096 = vpack.c.bf16 %v781, %v777
    %v1097 = vpack.c.bf16 %v892, %v888
    %v1098 = vpack.c.bf16 %v894, %v890
    %v1099 = vpack.c.bf16 %v1005, %v1001
    %v1100 = vpack.c.bf16 %v1007, %v1003
    %v1101 = vpack.c.bf16 %v224, %v220
    %v1102 = vpack.c.bf16 %v226, %v222
    %v1103 = vpack.c.bf16 %v337, %v333
    %v1104 = vpack.c.bf16 %v339, %v335
    %v1105 = vpack.c.bf16 %v450, %v446
    %v1106 = vpack.c.bf16 %v452, %v448
    %v1107 = vpack.c.bf16 %v563, %v559
    %v1108 = vpack.c.bf16 %v565, %v561
    %v1109 = vpack.c.bf16 %v676, %v672
    %v1110 = vpack.c.bf16 %v678, %v674
    %v1111 = vpack.c.bf16 %v789, %v785
    %v1112 = vpack.c.bf16 %v791, %v787
    %v1113 = vpack.c.bf16 %v902, %v898
    %v1114 = vpack.c.bf16 %v904, %v900
    %v1115 = vpack.c.bf16 %v1015, %v1011
    %v1116 = vpack.c.bf16 %v1017, %v1013
    %v1117 = vpack.c.bf16 %v234, %v230
    %v1118 = vpack.c.bf16 %v236, %v232
    %v1119 = vpack.c.bf16 %v347, %v343
    %v1120 = vpack.c.bf16 %v349, %v345
    %v1121 = vpack.c.bf16 %v460, %v456
    %v1122 = vpack.c.bf16 %v462, %v458
    %v1123 = vpack.c.bf16 %v573, %v569
    %v1124 = vpack.c.bf16 %v575, %v571
    %v1125 = vpack.c.bf16 %v686, %v682
    %v1126 = vpack.c.bf16 %v688, %v684
    %v1127 = vpack.c.bf16 %v799, %v795
    %v1128 = vpack.c.bf16 %v801, %v797
    %v1129 = vpack.c.bf16 %v912, %v908
    %v1130 = vpack.c.bf16 %v914, %v910
    %v1131 = vpack.c.bf16 %v1025, %v1021
    %v1132 = vpack.c.bf16 %v1027, %v1023
    %v1133 = vpack.c.bf16 %v244, %v240
    %v1134 = vpack.c.bf16 %v246, %v242
    %v1135 = vpack.c.bf16 %v357, %v353
    %v1136 = vpack.c.bf16 %v359, %v355
    %v1137 = vpack.c.bf16 %v470, %v466
    %v1138 = vpack.c.bf16 %v472, %v468
    %v1139 = vpack.c.bf16 %v583, %v579
    %v1140 = vpack.c.bf16 %v585, %v581
    %v1141 = vpack.c.bf16 %v696, %v692
    %v1142 = vpack.c.bf16 %v698, %v694
    %v1143 = vpack.c.bf16 %v809, %v805
    %v1144 = vpack.c.bf16 %v811, %v807
    %v1145 = vpack.c.bf16 %v922, %v918
    %v1146 = vpack.c.bf16 %v924, %v920
    %v1147 = vpack.c.bf16 %v1035, %v1031
    %v1148 = vpack.c.bf16 %v1037, %v1033
    %v1149 = vpack.c.bf16 %v254, %v250
    %v1150 = vpack.c.bf16 %v256, %v252
    %v1151 = vpack.c.bf16 %v367, %v363
    %v1152 = vpack.c.bf16 %v369, %v365
    %v1153 = vpack.c.bf16 %v480, %v476
    %v1154 = vpack.c.bf16 %v482, %v478
    %v1155 = vpack.c.bf16 %v593, %v589
    %v1156 = vpack.c.bf16 %v595, %v591
    %v1157 = vpack.c.bf16 %v706, %v702
    %v1158 = vpack.c.bf16 %v708, %v704
    %v1159 = vpack.c.bf16 %v819, %v815
    %v1160 = vpack.c.bf16 %v821, %v817
    %v1161 = vpack.c.bf16 %v932, %v928
    %v1162 = vpack.c.bf16 %v934, %v930
    %v1163 = vpack.c.bf16 %v1045, %v1041
    %v1164 = vpack.c.bf16 %v1047, %v1043
    %v1165 = vpack.c.bf16 %v264, %v260
    %v1166 = vpack.c.bf16 %v266, %v262
    %v1167 = vpack.c.bf16 %v377, %v373
    %v1168 = vpack.c.bf16 %v379, %v375
    %v1169 = vpack.c.bf16 %v490, %v486
    %v1170 = vpack.c.bf16 %v492, %v488
    %v1171 = vpack.c.bf16 %v603, %v599
    %v1172 = vpack.c.bf16 %v605, %v601
    %v1173 = vpack.c.bf16 %v716, %v712
    %v1174 = vpack.c.bf16 %v718, %v714
    %v1175 = vpack.c.bf16 %v829, %v825
    %v1176 = vpack.c.bf16 %v831, %v827
    %v1177 = vpack.c.bf16 %v942, %v938
    %v1178 = vpack.c.bf16 %v944, %v940
    %v1179 = vpack.c.bf16 %v1055, %v1051
    %v1180 = vpack.c.bf16 %v1057, %v1053
    %v1181 = vpack.c.bf16 %v274, %v270
    %v1182 = vpack.c.bf16 %v276, %v272
    %v1183 = vpack.c.bf16 %v387, %v383
    %v1184 = vpack.c.bf16 %v389, %v385
    %v1185 = vpack.c.bf16 %v500, %v496
    %v1186 = vpack.c.bf16 %v502, %v498
    %v1187 = vpack.c.bf16 %v613, %v609
    %v1188 = vpack.c.bf16 %v615, %v611
    %v1189 = vpack.c.bf16 %v726, %v722
    %v1190 = vpack.c.bf16 %v728, %v724
    %v1191 = vpack.c.bf16 %v839, %v835
    %v1192 = vpack.c.bf16 %v841, %v837
    %v1193 = vpack.c.bf16 %v952, %v948
    %v1194 = vpack.c.bf16 %v954, %v950
    %v1195 = vpack.c.bf16 %v1065, %v1061
    %v1196 = vpack.c.bf16 %v1067, %v1063
    %v1325 = vunpack.c.l.b16 %v1069
    %v1326 = vunpack.c.l.b16 %v1070
    %v1327 = vunpack.c.l.b16 %v1071
    %v1328 = vunpack.c.l.b16 %v1072
    %v1329 = vunpack.c.l.b16 %v1073
    %v1330 = vunpack.c.l.b16 %v1074
    %v1331 = vunpack.c.l.b16 %v1075
    %v1332 = vunpack.c.l.b16 %v1076
    %v1333 = vunpack.c.l.b16 %v1077
    %v1334 = vunpack.c.l.b16 %v1078
    %v1335 = vunpack.c.l.b16 %v1079
    %v1336 = vunpack.c.l.b16 %v1080
    %v1337 = vunpack.c.l.b16 %v1081
    %v1338 = vunpack.c.l.b16 %v1082
    %v1339 = vunpack.c.l.b16 %v1083
    %v1340 = vunpack.c.l.b16 %v1084
    %v1341 = vunpack.c.h.b16 %v1069
    %v1342 = vunpack.c.h.b16 %v1070
    %v1343 = vunpack.c.h.b16 %v1071
    %v1344 = vunpack.c.h.b16 %v1072
    %v1345 = vunpack.c.h.b16 %v1073
    %v1346 = vunpack.c.h.b16 %v1074
    %v1347 = vunpack.c.h.b16 %v1075
    %v1348 = vunpack.c.h.b16 %v1076
    %v1349 = vunpack.c.h.b16 %v1077
    %v1350 = vunpack.c.h.b16 %v1078
    %v1351 = vunpack.c.h.b16 %v1079
    %v1352 = vunpack.c.h.b16 %v1080
    %v1353 = vunpack.c.h.b16 %v1081
    %v1354 = vunpack.c.h.b16 %v1082
    %v1355 = vunpack.c.h.b16 %v1083
    %v1356 = vunpack.c.h.b16 %v1084
    %v1357 = vunpack.c.l.b16 %v1085
    %v1358 = vunpack.c.l.b16 %v1086
    %v1359 = vunpack.c.l.b16 %v1087
    %v1360 = vunpack.c.l.b16 %v1088
    %v1361 = vunpack.c.l.b16 %v1089
    %v1362 = vunpack.c.l.b16 %v1090
    %v1363 = vunpack.c.l.b16 %v1091
    %v1364 = vunpack.c.l.b16 %v1092
    %v1365 = vunpack.c.l.b16 %v1093
    %v1366 = vunpack.c.l.b16 %v1094
    %v1367 = vunpack.c.l.b16 %v1095
    %v1368 = vunpack.c.l.b16 %v1096
    %v1369 = vunpack.c.l.b16 %v1097
    %v1370 = vunpack.c.l.b16 %v1098
    %v1371 = vunpack.c.l.b16 %v1099
    %v1372 = vunpack.c.l.b16 %v1100
    %v1373 = vunpack.c.h.b16 %v1085
    %v1374 = vunpack.c.h.b16 %v1086
    %v1375 = vunpack.c.h.b16 %v1087
    %v1376 = vunpack.c.h.b16 %v1088
    %v1377 = vunpack.c.h.b16 %v1089
    %v1378 = vunpack.c.h.b16 %v1090
    %v1379 = vunpack.c.h.b16 %v1091
    %v1380 = vunpack.c.h.b16 %v1092
    %v1381 = vunpack.c.h.b16 %v1093
    %v1382 = vunpack.c.h.b16 %v1094
    %v1383 = vunpack.c.h.b16 %v1095
    %v1384 = vunpack.c.h.b16 %v1096
    %v1385 = vunpack.c.h.b16 %v1097
    %v1386 = vunpack.c.h.b16 %v1098
    %v1387 = vunpack.c.h.b16 %v1099
    %v1388 = vunpack.c.h.b16 %v1100
    %v1389 = vunpack.c.l.b16 %v1101
    %v1390 = vunpack.c.l.b16 %v1102
    %v1391 = vunpack.c.l.b16 %v1103
    %v1392 = vunpack.c.l.b16 %v1104
    %v1393 = vunpack.c.l.b16 %v1105
    %v1394 = vunpack.c.l.b16 %v1106
    %v1395 = vunpack.c.l.b16 %v1107
    %v1396 = vunpack.c.l.b16 %v1108
    %v1397 = vunpack.c.l.b16 %v1109
    %v1398 = vunpack.c.l.b16 %v1110
    %v1399 = vunpack.c.l.b16 %v1111
    %v1400 = vunpack.c.l.b16 %v1112
    %v1401 = vunpack.c.l.b16 %v1113
    %v1402 = vunpack.c.l.b16 %v1114
    %v1403 = vunpack.c.l.b16 %v1115
    %v1404 = vunpack.c.l.b16 %v1116
    %v1405 = vunpack.c.h.b16 %v1101
    %v1406 = vunpack.c.h.b16 %v1102
    %v1407 = vunpack.c.h.b16 %v1103
    %v1408 = vunpack.c.h.b16 %v1104
    %v1409 = vunpack.c.h.b16 %v1105
    %v1410 = vunpack.c.h.b16 %v1106
    %v1411 = vunpack.c.h.b16 %v1107
    %v1412 = vunpack.c.h.b16 %v1108
    %v1413 = vunpack.c.h.b16 %v1109
    %v1414 = vunpack.c.h.b16 %v1110
    %v1415 = vunpack.c.h.b16 %v1111
    %v1416 = vunpack.c.h.b16 %v1112
    %v1417 = vunpack.c.h.b16 %v1113
    %v1418 = vunpack.c.h.b16 %v1114
    %v1419 = vunpack.c.h.b16 %v1115
    %v1420 = vunpack.c.h.b16 %v1116
    %v1421 = vunpack.c.l.b16 %v1117
    %v1422 = vunpack.c.l.b16 %v1118
    %v1423 = vunpack.c.l.b16 %v1119
    %v1424 = vunpack.c.l.b16 %v1120
    %v1425 = vunpack.c.l.b16 %v1121
    %v1426 = vunpack.c.l.b16 %v1122
    %v1427 = vunpack.c.l.b16 %v1123
    %v1428 = vunpack.c.l.b16 %v1124
    %v1429 = vunpack.c.l.b16 %v1125
    %v1430 = vunpack.c.l.b16 %v1126
    %v1431 = vunpack.c.l.b16 %v1127
    %v1432 = vunpack.c.l.b16 %v1128
    %v1433 = vunpack.c.l.b16 %v1129
    %v1434 = vunpack.c.l.b16 %v1130
    %v1435 = vunpack.c.l.b16 %v1131
    %v1436 = vunpack.c.l.b16 %v1132
    %v1437 = vunpack.c.h.b16 %v1117
    %v1438 = vunpack.c.h.b16 %v1118
    %v1439 = vunpack.c.h.b16 %v1119
    %v1440 = vunpack.c.h.b16 %v1120
    %v1441 = vunpack.c.h.b16 %v1121
    %v1442 = vunpack.c.h.b16 %v1122
    %v1443 = vunpack.c.h.b16 %v1123
    %v1444 = vunpack.c.h.b16 %v1124
    %v1445 = vunpack.c.h.b16 %v1125
    %v1446 = vunpack.c.h.b16 %v1126
    %v1447 = vunpack.c.h.b16 %v1127
    %v1448 = vunpack.c.h.b16 %v1128
    %v1449 = vunpack.c.h.b16 %v1129
    %v1450 = vunpack.c.h.b16 %v1130
    %v1451 = vunpack.c.h.b16 %v1131
    %v1452 = vunpack.c.h.b16 %v1132
    %v1453 = vunpack.c.l.b16 %v1133
    %v1454 = vunpack.c.l.b16 %v1134
    %v1455 = vunpack.c.l.b16 %v1135
    %v1456 = vunpack.c.l.b16 %v1136
    %v1457 = vunpack.c.l.b16 %v1137
    %v1458 = vunpack.c.l.b16 %v1138
    %v1459 = vunpack.c.l.b16 %v1139
    %v1460 = vunpack.c.l.b16 %v1140
    %v1461 = vunpack.c.l.b16 %v1141
    %v1462 = vunpack.c.l.b16 %v1142
    %v1463 = vunpack.c.l.b16 %v1143
    %v1464 = vunpack.c.l.b16 %v1144
    %v1465 = vunpack.c.l.b16 %v1145
    %v1466 = vunpack.c.l.b16 %v1146
    %v1467 = vunpack.c.l.b16 %v1147
    %v1468 = vunpack.c.l.b16 %v1148
    %v1469 = vunpack.c.h.b16 %v1133
    %v1470 = vunpack.c.h.b16 %v1134
    %v1471 = vunpack.c.h.b16 %v1135
    %v1472 = vunpack.c.h.b16 %v1136
    %v1473 = vunpack.c.h.b16 %v1137
    %v1474 = vunpack.c.h.b16 %v1138
    %v1475 = vunpack.c.h.b16 %v1139
    %v1476 = vunpack.c.h.b16 %v1140
    %v1477 = vunpack.c.h.b16 %v1141
    %v1478 = vunpack.c.h.b16 %v1142
    %v1479 = vunpack.c.h.b16 %v1143
    %v1480 = vunpack.c.h.b16 %v1144
    %v1481 = vunpack.c.h.b16 %v1145
    %v1482 = vunpack.c.h.b16 %v1146
    %v1483 = vunpack.c.h.b16 %v1147
    %v1484 = vunpack.c.h.b16 %v1148
    %v1485 = vunpack.c.l.b16 %v1149
    %v1486 = vunpack.c.l.b16 %v1150
    %v1487 = vunpack.c.l.b16 %v1151
    %v1488 = vunpack.c.l.b16 %v1152
    %v1489 = vunpack.c.l.b16 %v1153
    %v1490 = vunpack.c.l.b16 %v1154
    %v1491 = vunpack.c.l.b16 %v1155
    %v1492 = vunpack.c.l.b16 %v1156
    %v1493 = vunpack.c.l.b16 %v1157
    %v1494 = vunpack.c.l.b16 %v1158
    %v1495 = vunpack.c.l.b16 %v1159
    %v1496 = vunpack.c.l.b16 %v1160
    %v1497 = vunpack.c.l.b16 %v1161
    %v1498 = vunpack.c.l.b16 %v1162
    %v1499 = vunpack.c.l.b16 %v1163
    %v1500 = vunpack.c.l.b16 %v1164
    %v1501 = vunpack.c.h.b16 %v1149
    %v1502 = vunpack.c.h.b16 %v1150
    %v1503 = vunpack.c.h.b16 %v1151
    %v1504 = vunpack.c.h.b16 %v1152
    %v1505 = vunpack.c.h.b16 %v1153
    %v1506 = vunpack.c.h.b16 %v1154
    %v1507 = vunpack.c.h.b16 %v1155
    %v1508 = vunpack.c.h.b16 %v1156
    %v1509 = vunpack.c.h.b16 %v1157
    %v1510 = vunpack.c.h.b16 %v1158
    %v1511 = vunpack.c.h.b16 %v1159
    %v1512 = vunpack.c.h.b16 %v1160
    %v1513 = vunpack.c.h.b16 %v1161
    %v1514 = vunpack.c.h.b16 %v1162
    %v1515 = vunpack.c.h.b16 %v1163
    %v1516 = vunpack.c.h.b16 %v1164
    %v1517 = vunpack.c.l.b16 %v1165
    %v1518 = vunpack.c.l.b16 %v1166
    %v1519 = vunpack.c.l.b16 %v1167
    %v1520 = vunpack.c.l.b16 %v1168
    %v1521 = vunpack.c.l.b16 %v1169
    %v1522 = vunpack.c.l.b16 %v1170
    %v1523 = vunpack.c.l.b16 %v1171
    %v1524 = vunpack.c.l.b16 %v1172
    %v1525 = vunpack.c.l.b16 %v1173
    %v1526 = vunpack.c.l.b16 %v1174
    %v1527 = vunpack.c.l.b16 %v1175
    %v1528 = vunpack.c.l.b16 %v1176
    %v1529 = vunpack.c.l.b16 %v1177
    %v1530 = vunpack.c.l.b16 %v1178
    %v1531 = vunpack.c.l.b16 %v1179
    %v1532 = vunpack.c.l.b16 %v1180
    %v1533 = vunpack.c.h.b16 %v1165
    %v1534 = vunpack.c.h.b16 %v1166
    %v1535 = vunpack.c.h.b16 %v1167
    %v1536 = vunpack.c.h.b16 %v1168
    %v1537 = vunpack.c.h.b16 %v1169
    %v1538 = vunpack.c.h.b16 %v1170
    %v1539 = vunpack.c.h.b16 %v1171
    %v1540 = vunpack.c.h.b16 %v1172
    %v1541 = vunpack.c.h.b16 %v1173
    %v1542 = vunpack.c.h.b16 %v1174
    %v1543 = vunpack.c.h.b16 %v1175
    %v1544 = vunpack.c.h.b16 %v1176
    %v1545 = vunpack.c.h.b16 %v1177
    %v1546 = vunpack.c.h.b16 %v1178
    %v1547 = vunpack.c.h.b16 %v1179
    %v1548 = vunpack.c.h.b16 %v1180
    %v1549 = vunpack.c.l.b16 %v1181
    %v1550 = vunpack.c.l.b16 %v1182
    %v1551 = vunpack.c.l.b16 %v1183
    %v1552 = vunpack.c.l.b16 %v1184
    %v1553 = vunpack.c.l.b16 %v1185
    %v1554 = vunpack.c.l.b16 %v1186
    %v1555 = vunpack.c.l.b16 %v1187
    %v1556 = vunpack.c.l.b16 %v1188
    %v1557 = vunpack.c.l.b16 %v1189
    %v1558 = vunpack.c.l.b16 %v1190
    %v1559 = vunpack.c.l.b16 %v1191
    %v1560 = vunpack.c.l.b16 %v1192
    %v1561 = vunpack.c.l.b16 %v1193
    %v1562 = vunpack.c.l.b16 %v1194
    %v1563 = vunpack.c.l.b16 %v1195
    %v1564 = vunpack.c.l.b16 %v1196
    %v1565 = vunpack.c.h.b16 %v1181
    %v1566 = vunpack.c.h.b16 %v1182
    %v1567 = vunpack.c.h.b16 %v1183
    %v1568 = vunpack.c.h.b16 %v1184
    %v1569 = vunpack.c.h.b16 %v1185
    %v1570 = vunpack.c.h.b16 %v1186
    %v1571 = vunpack.c.h.b16 %v1187
    %v1572 = vunpack.c.h.b16 %v1188
    %v1573 = vunpack.c.h.b16 %v1189
    %v1574 = vunpack.c.h.b16 %v1190
    %v1575 = vunpack.c.h.b16 %v1191
    %v1576 = vunpack.c.h.b16 %v1192
    %v1577 = vunpack.c.h.b16 %v1193
    %v1578 = vunpack.c.h.b16 %v1194
    %v1579 = vunpack.c.h.b16 %v1195
    %v1580 = vunpack.c.h.b16 %v1196
    %v1581 = vpack.c.b16 %v1326, %v1325
    %v1582 = vpack.c.b16 %v1328, %v1327
    %v1583 = vpack.c.b16 %v1330, %v1329
    %v1584 = vpack.c.b16 %v1332, %v1331
    %v1585 = vpack.c.b16 %v1334, %v1333
    %v1586 = vpack.c.b16 %v1336, %v1335
    %v1587 = vpack.c.b16 %v1338, %v1337
    %v1588 = vpack.c.b16 %v1340, %v1339
    %v1589 = vpack.c.b16 %v1342, %v1341
    %v1590 = vpack.c.b16 %v1344, %v1343
    %v1591 = vpack.c.b16 %v1346, %v1345
    %v1592 = vpack.c.b16 %v1348, %v1347
    %v1593 = vpack.c.b16 %v1350, %v1349
    %v1594 = vpack.c.b16 %v1352, %v1351
    %v1595 = vpack.c.b16 %v1354, %v1353
    %v1596 = vpack.c.b16 %v1356, %v1355
    %v1597 = vpack.c.b16 %v1358, %v1357
    %v1598 = vpack.c.b16 %v1360, %v1359
    %v1599 = vpack.c.b16 %v1362, %v1361
    %v1600 = vpack.c.b16 %v1364, %v1363
    %v1601 = vpack.c.b16 %v1366, %v1365
    %v1602 = vpack.c.b16 %v1368, %v1367
    %v1603 = vpack.c.b16 %v1370, %v1369
    %v1604 = vpack.c.b16 %v1372, %v1371
    %v1605 = vpack.c.b16 %v1374, %v1373
    %v1606 = vpack.c.b16 %v1376, %v1375
    %v1607 = vpack.c.b16 %v1378, %v1377
    %v1608 = vpack.c.b16 %v1380, %v1379
    %v1609 = vpack.c.b16 %v1382, %v1381
    %v1610 = vpack.c.b16 %v1384, %v1383
    %v1611 = vpack.c.b16 %v1386, %v1385
    %v1612 = vpack.c.b16 %v1388, %v1387
    %v1613 = vpack.c.b16 %v1390, %v1389
    %v1614 = vpack.c.b16 %v1392, %v1391
    %v1615 = vpack.c.b16 %v1394, %v1393
    %v1616 = vpack.c.b16 %v1396, %v1395
    %v1617 = vpack.c.b16 %v1398, %v1397
    %v1618 = vpack.c.b16 %v1400, %v1399
    %v1619 = vpack.c.b16 %v1402, %v1401
    %v1620 = vpack.c.b16 %v1404, %v1403
    %v1621 = vpack.c.b16 %v1406, %v1405
    %v1622 = vpack.c.b16 %v1408, %v1407
    %v1623 = vpack.c.b16 %v1410, %v1409
    %v1624 = vpack.c.b16 %v1412, %v1411
    %v1625 = vpack.c.b16 %v1414, %v1413
    %v1626 = vpack.c.b16 %v1416, %v1415
    %v1627 = vpack.c.b16 %v1418, %v1417
    %v1628 = vpack.c.b16 %v1420, %v1419
    %v1629 = vpack.c.b16 %v1422, %v1421
    %v1630 = vpack.c.b16 %v1424, %v1423
    %v1631 = vpack.c.b16 %v1426, %v1425
    %v1632 = vpack.c.b16 %v1428, %v1427
    %v1633 = vpack.c.b16 %v1430, %v1429
    %v1634 = vpack.c.b16 %v1432, %v1431
    %v1635 = vpack.c.b16 %v1434, %v1433
    %v1636 = vpack.c.b16 %v1436, %v1435
    %v1637 = vpack.c.b16 %v1438, %v1437
    %v1638 = vpack.c.b16 %v1440, %v1439
    %v1639 = vpack.c.b16 %v1442, %v1441
    %v1640 = vpack.c.b16 %v1444, %v1443
    %v1641 = vpack.c.b16 %v1446, %v1445
    %v1642 = vpack.c.b16 %v1448, %v1447
    %v1643 = vpack.c.b16 %v1450, %v1449
    %v1644 = vpack.c.b16 %v1452, %v1451
    %v1645 = vpack.c.b16 %v1454, %v1453
    %v1646 = vpack.c.b16 %v1456, %v1455
    %v1647 = vpack.c.b16 %v1458, %v1457
    %v1648 = vpack.c.b16 %v1460, %v1459
    %v1649 = vpack.c.b16 %v1462, %v1461
    %v1650 = vpack.c.b16 %v1464, %v1463
    %v1651 = vpack.c.b16 %v1466, %v1465
    %v1652 = vpack.c.b16 %v1468, %v1467
    %v1653 = vpack.c.b16 %v1470, %v1469
    %v1654 = vpack.c.b16 %v1472, %v1471
    %v1655 = vpack.c.b16 %v1474, %v1473
    %v1656 = vpack.c.b16 %v1476, %v1475
    %v1657 = vpack.c.b16 %v1478, %v1477
    %v1658 = vpack.c.b16 %v1480, %v1479
    %v1659 = vpack.c.b16 %v1482, %v1481
    %v1660 = vpack.c.b16 %v1484, %v1483
    %v1661 = vpack.c.b16 %v1486, %v1485
    %v1662 = vpack.c.b16 %v1488, %v1487
    %v1663 = vpack.c.b16 %v1490, %v1489
    %v1664 = vpack.c.b16 %v1492, %v1491
    %v1665 = vpack.c.b16 %v1494, %v1493
    %v1666 = vpack.c.b16 %v1496, %v1495
    %v1667 = vpack.c.b16 %v1498, %v1497
    %v1668 = vpack.c.b16 %v1500, %v1499
    %v1669 = vpack.c.b16 %v1502, %v1501
    %v1670 = vpack.c.b16 %v1504, %v1503
    %v1671 = vpack.c.b16 %v1506, %v1505
    %v1672 = vpack.c.b16 %v1508, %v1507
    %v1673 = vpack.c.b16 %v1510, %v1509
    %v1674 = vpack.c.b16 %v1512, %v1511
    %v1675 = vpack.c.b16 %v1514, %v1513
    %v1676 = vpack.c.b16 %v1516, %v1515
    %v1677 = vpack.c.b16 %v1518, %v1517
    %v1678 = vpack.c.b16 %v1520, %v1519
    %v1679 = vpack.c.b16 %v1522, %v1521
    %v1680 = vpack.c.b16 %v1524, %v1523
    %v1681 = vpack.c.b16 %v1526, %v1525
    %v1682 = vpack.c.b16 %v1528, %v1527
    %v1683 = vpack.c.b16 %v1530, %v1529
    %v1684 = vpack.c.b16 %v1532, %v1531
    %v1685 = vpack.c.b16 %v1534, %v1533
    %v1686 = vpack.c.b16 %v1536, %v1535
    %v1687 = vpack.c.b16 %v1538, %v1537
    %v1688 = vpack.c.b16 %v1540, %v1539
    %v1689 = vpack.c.b16 %v1542, %v1541
    %v1690 = vpack.c.b16 %v1544, %v1543
    %v1691 = vpack.c.b16 %v1546, %v1545
    %v1692 = vpack.c.b16 %v1548, %v1547
    %v1693 = vpack.c.b16 %v1550, %v1549
    %v1694 = vpack.c.b16 %v1552, %v1551
    %v1695 = vpack.c.b16 %v1554, %v1553
    %v1696 = vpack.c.b16 %v1556, %v1555
    %v1697 = vpack.c.b16 %v1558, %v1557
    %v1698 = vpack.c.b16 %v1560, %v1559
    %v1699 = vpack.c.b16 %v1562, %v1561
    %v1700 = vpack.c.b16 %v1564, %v1563
    %v1701 = vpack.c.b16 %v1566, %v1565
    %v1702 = vpack.c.b16 %v1568, %v1567
    %v1703 = vpack.c.b16 %v1570, %v1569
    %v1704 = vpack.c.b16 %v1572, %v1571
    %v1705 = vpack.c.b16 %v1574, %v1573
    %v1706 = vpack.c.b16 %v1576, %v1575
    %v1707 = vpack.c.b16 %v1578, %v1577
    %v1708 = vpack.c.b16 %v1580, %v1579
    %1837 = vst [vmem:[#allocation2] sm:$0xff] %v1581
    %1838 = vst [vmem:[#allocation2 + $0x8] sm:$0xff] %v1582
    %1839 = vst [vmem:[#allocation2 + $0x10] sm:$0xff] %v1583
    %1840 = vst [vmem:[#allocation2 + $0x18] sm:$0xff] %v1584
    %1841 = vst [vmem:[#allocation2 + $0x20] sm:$0xff] %v1585
    %1842 = vst [vmem:[#allocation2 + $0x28] sm:$0xff] %v1586
    %1843 = vst [vmem:[#allocation2 + $0x30] sm:$0xff] %v1587
    %1844 = vst [vmem:[#allocation2 + $0x38] sm:$0xff] %v1588
    %1845 = vst [vmem:[#allocation2 + $0x40] sm:$0xff] %v1589
    %1846 = vst [vmem:[#allocation2 + $0x48] sm:$0xff] %v1590
    %1847 = vst [vmem:[#allocation2 + $0x50] sm:$0xff] %v1591
    %1848 = vst [vmem:[#allocation2 + $0x58] sm:$0xff] %v1592
    %1849 = vst [vmem:[#allocation2 + $0x60] sm:$0xff] %v1593
    %1850 = vst [vmem:[#allocation2 + $0x68] sm:$0xff] %v1594
    %1851 = vst [vmem:[#allocation2 + $0x70] sm:$0xff] %v1595
    %1852 = vst [vmem:[#allocation2 + $0x78] sm:$0xff] %v1596
    %1853 = vst [vmem:[#allocation2 + $0x80] sm:$0xff] %v1597
    %1854 = vst [vmem:[#allocation2 + $0x88] sm:$0xff] %v1598
    %1855 = vst [vmem:[#allocation2 + $0x90] sm:$0xff] %v1599
    %1856 = vst [vmem:[#allocation2 + $0x98] sm:$0xff] %v1600
    %1857 = vst [vmem:[#allocation2 + $0xa0] sm:$0xff] %v1601
    %1858 = vst [vmem:[#allocation2 + $0xa8] sm:$0xff] %v1602
    %1859 = vst [vmem:[#allocation2 + $0xb0] sm:$0xff] %v1603
    %1860 = vst [vmem:[#allocation2 + $0xb8] sm:$0xff] %v1604
    %1861 = vst [vmem:[#allocation2 + $0xc0] sm:$0xff] %v1605
    %1862 = vst [vmem:[#allocation2 + $0xc8] sm:$0xff] %v1606
    %1863 = vst [vmem:[#allocation2 + $0xd0] sm:$0xff] %v1607
    %1864 = vst [vmem:[#allocation2 + $0xd8] sm:$0xff] %v1608
    %1865 = vst [vmem:[#allocation2 + $0xe0] sm:$0xff] %v1609
    %1866 = vst [vmem:[#allocation2 + $0xe8] sm:$0xff] %v1610
    %1867 = vst [vmem:[#allocation2 + $0xf0] sm:$0xff] %v1611
    %1868 = vst [vmem:[#allocation2 + $0xf8] sm:$0xff] %v1612
    %1869 = vst [vmem:[#allocation2 + $0x100] sm:$0xff] %v1613
    %1870 = vst [vmem:[#allocation2 + $0x108] sm:$0xff] %v1614
    %1871 = vst [vmem:[#allocation2 + $0x110] sm:$0xff] %v1615
    %1872 = vst [vmem:[#allocation2 + $0x118] sm:$0xff] %v1616
    %1873 = vst [vmem:[#allocation2 + $0x120] sm:$0xff] %v1617
    %1874 = vst [vmem:[#allocation2 + $0x128] sm:$0xff] %v1618
    %1875 = vst [vmem:[#allocation2 + $0x130] sm:$0xff] %v1619
    %1876 = vst [vmem:[#allocation2 + $0x138] sm:$0xff] %v1620
    %1877 = vst [vmem:[#allocation2 + $0x140] sm:$0xff] %v1621
    %1878 = vst [vmem:[#allocation2 + $0x148] sm:$0xff] %v1622
    %1879 = vst [vmem:[#allocation2 + $0x150] sm:$0xff] %v1623
    %1880 = vst [vmem:[#allocation2 + $0x158] sm:$0xff] %v1624
    %1881 = vst [vmem:[#allocation2 + $0x160] sm:$0xff] %v1625
    %1882 = vst [vmem:[#allocation2 + $0x168] sm:$0xff] %v1626
    %1883 = vst [vmem:[#allocation2 + $0x170] sm:$0xff] %v1627
    %1884 = vst [vmem:[#allocation2 + $0x178] sm:$0xff] %v1628
    %1885 = vst [vmem:[#allocation2 + $0x180] sm:$0xff] %v1629
    %1886 = vst [vmem:[#allocation2 + $0x188] sm:$0xff] %v1630
    %1887 = vst [vmem:[#allocation2 + $0x190] sm:$0xff] %v1631
    %1888 = vst [vmem:[#allocation2 + $0x198] sm:$0xff] %v1632
    %1889 = vst [vmem:[#allocation2 + $0x1a0] sm:$0xff] %v1633
    %1890 = vst [vmem:[#allocation2 + $0x1a8] sm:$0xff] %v1634
    %1891 = vst [vmem:[#allocation2 + $0x1b0] sm:$0xff] %v1635
    %1892 = vst [vmem:[#allocation2 + $0x1b8] sm:$0xff] %v1636
    %1893 = vst [vmem:[#allocation2 + $0x1c0] sm:$0xff] %v1637
    %1894 = vst [vmem:[#allocation2 + $0x1c8] sm:$0xff] %v1638
    %1895 = vst [vmem:[#allocation2 + $0x1d0] sm:$0xff] %v1639
    %1896 = vst [vmem:[#allocation2 + $0x1d8] sm:$0xff] %v1640
    %1897 = vst [vmem:[#allocation2 + $0x1e0] sm:$0xff] %v1641
    %1898 = vst [vmem:[#allocation2 + $0x1e8] sm:$0xff] %v1642
    %1899 = vst [vmem:[#allocation2 + $0x1f0] sm:$0xff] %v1643
    %1900 = vst [vmem:[#allocation2 + $0x1f8] sm:$0xff] %v1644
    %1901 = vst [vmem:[#allocation2 + $0x200] sm:$0xff] %v1645
    %1902 = vst [vmem:[#allocation2 + $0x208] sm:$0xff] %v1646
    %1903 = vst [vmem:[#allocation2 + $0x210] sm:$0xff] %v1647
    %1904 = vst [vmem:[#allocation2 + $0x218] sm:$0xff] %v1648
    %1905 = vst [vmem:[#allocation2 + $0x220] sm:$0xff] %v1649
    %1906 = vst [vmem:[#allocation2 + $0x228] sm:$0xff] %v1650
    %1907 = vst [vmem:[#allocation2 + $0x230] sm:$0xff] %v1651
    %1908 = vst [vmem:[#allocation2 + $0x238] sm:$0xff] %v1652
    %1909 = vst [vmem:[#allocation2 + $0x240] sm:$0xff] %v1653
    %1910 = vst [vmem:[#allocation2 + $0x248] sm:$0xff] %v1654
    %1911 = vst [vmem:[#allocation2 + $0x250] sm:$0xff] %v1655
    %1912 = vst [vmem:[#allocation2 + $0x258] sm:$0xff] %v1656
    %1913 = vst [vmem:[#allocation2 + $0x260] sm:$0xff] %v1657
    %1914 = vst [vmem:[#allocation2 + $0x268] sm:$0xff] %v1658
    %1915 = vst [vmem:[#allocation2 + $0x270] sm:$0xff] %v1659
    %1916 = vst [vmem:[#allocation2 + $0x278] sm:$0xff] %v1660
    %1917 = vst [vmem:[#allocation2 + $0x280] sm:$0xff] %v1661
    %1918 = vst [vmem:[#allocation2 + $0x288] sm:$0xff] %v1662
    %1919 = vst [vmem:[#allocation2 + $0x290] sm:$0xff] %v1663
    %1920 = vst [vmem:[#allocation2 + $0x298] sm:$0xff] %v1664
    %1921 = vst [vmem:[#allocation2 + $0x2a0] sm:$0xff] %v1665
    %1922 = vst [vmem:[#allocation2 + $0x2a8] sm:$0xff] %v1666
    %1923 = vst [vmem:[#allocation2 + $0x2b0] sm:$0xff] %v1667
    %1924 = vst [vmem:[#allocation2 + $0x2b8] sm:$0xff] %v1668
    %1925 = vst [vmem:[#allocation2 + $0x2c0] sm:$0xff] %v1669
    %1926 = vst [vmem:[#allocation2 + $0x2c8] sm:$0xff] %v1670
    %1927 = vst [vmem:[#allocation2 + $0x2d0] sm:$0xff] %v1671
    %1928 = vst [vmem:[#allocation2 + $0x2d8] sm:$0xff] %v1672
    %1929 = vst [vmem:[#allocation2 + $0x2e0] sm:$0xff] %v1673
    %1930 = vst [vmem:[#allocation2 + $0x2e8] sm:$0xff] %v1674
    %1931 = vst [vmem:[#allocation2 + $0x2f0] sm:$0xff] %v1675
    %1932 = vst [vmem:[#allocation2 + $0x2f8] sm:$0xff] %v1676
    %1933 = vst [vmem:[#allocation2 + $0x300] sm:$0xff] %v1677
    %1934 = vst [vmem:[#allocation2 + $0x308] sm:$0xff] %v1678
    %1935 = vst [vmem:[#allocation2 + $0x310] sm:$0xff] %v1679
    %1936 = vst [vmem:[#allocation2 + $0x318] sm:$0xff] %v1680
    %1937 = vst [vmem:[#allocation2 + $0x320] sm:$0xff] %v1681
    %1938 = vst [vmem:[#allocation2 + $0x328] sm:$0xff] %v1682
    %1939 = vst [vmem:[#allocation2 + $0x330] sm:$0xff] %v1683
    %1940 = vst [vmem:[#allocation2 + $0x338] sm:$0xff] %v1684
    %1941 = vst [vmem:[#allocation2 + $0x340] sm:$0xff] %v1685
    %1942 = vst [vmem:[#allocation2 + $0x348] sm:$0xff] %v1686
    %1943 = vst [vmem:[#allocation2 + $0x350] sm:$0xff] %v1687
    %1944 = vst [vmem:[#allocation2 + $0x358] sm:$0xff] %v1688
    %1945 = vst [vmem:[#allocation2 + $0x360] sm:$0xff] %v1689
    %1946 = vst [vmem:[#allocation2 + $0x368] sm:$0xff] %v1690
    %1947 = vst [vmem:[#allocation2 + $0x370] sm:$0xff] %v1691
    %1948 = vst [vmem:[#allocation2 + $0x378] sm:$0xff] %v1692
    %1949 = vst [vmem:[#allocation2 + $0x380] sm:$0xff] %v1693
    %1950 = vst [vmem:[#allocation2 + $0x388] sm:$0xff] %v1694
    %1951 = vst [vmem:[#allocation2 + $0x390] sm:$0xff] %v1695
    %1952 = vst [vmem:[#allocation2 + $0x398] sm:$0xff] %v1696
    %1953 = vst [vmem:[#allocation2 + $0x3a0] sm:$0xff] %v1697
    %1954 = vst [vmem:[#allocation2 + $0x3a8] sm:$0xff] %v1698
    %1955 = vst [vmem:[#allocation2 + $0x3b0] sm:$0xff] %v1699
    %1956 = vst [vmem:[#allocation2 + $0x3b8] sm:$0xff] %v1700
    %1957 = vst [vmem:[#allocation2 + $0x3c0] sm:$0xff] %v1701
    %1958 = vst [vmem:[#allocation2 + $0x3c8] sm:$0xff] %v1702
    %1959 = vst [vmem:[#allocation2 + $0x3d0] sm:$0xff] %v1703
    %1960 = vst [vmem:[#allocation2 + $0x3d8] sm:$0xff] %v1704
    %1961 = vst [vmem:[#allocation2 + $0x3e0] sm:$0xff] %v1705
    %1962 = vst [vmem:[#allocation2 + $0x3e8] sm:$0xff] %v1706
    %1963 = vst [vmem:[#allocation2 + $0x3f0] sm:$0xff] %v1707
    %1964 = vst [vmem:[#allocation2 + $0x3f8] sm:$0xff] %v1708
    %v1965 = vld [vmem:[%s2] sm:$0xf]
    %v1967 = vsel %vm116, %v1965, 0
    %1969 = vmatprep.subr.bf16.mxu0 0
    %1970 = vmatpush1.bf16.msra.mxu0 0
    %1971 = vmatprep.subr.bf16.mxu0 0
    %1972 = vmatpush1.bf16.msra.mxu0 0
    %1973 = vmatprep.subr.bf16.mxu0 0
    %1974 = vmatpush1.bf16.msra.mxu0 0
    %1975 = vmatprep.subr.bf16.mxu0 0
    %1976 = vmatpush1.bf16.msra.mxu0 0
    %1977 = vmatprep.subr.bf16.mxu0 0
    %1978 = vmatpush1.bf16.msra.mxu0 0
    %1979 = vmatprep.subr.bf16.mxu0 0
    %1980 = vmatpush1.bf16.msra.mxu0 0
    %1981 = vmatprep.subr.bf16.mxu0 0
    %1982 = vmatpush1.bf16.msra.mxu0 0
    %1983 = vmatprep.subr.bf16.mxu0 0
    %1984 = vmatpush1.bf16.msra.mxu0 %v1967
    %1985 = vmatprep.subr.bf16.mxu0 0
    %1986 = vmatpush2.bf16.msra.mxu0 0
    %1987 = vmatprep.subr.bf16.mxu0 0
    %1988 = vmatpush2.bf16.msra.mxu0 0
    %1989 = vmatprep.subr.bf16.mxu0 0
    %1990 = vmatpush2.bf16.msra.mxu0 0
    %1991 = vmatprep.subr.bf16.mxu0 0
    %1992 = vmatpush2.bf16.msra.mxu0 0
    %1993 = vmatprep.subr.bf16.mxu0 0
    %1994 = vmatpush2.bf16.msra.mxu0 0
    %1995 = vmatprep.subr.bf16.mxu0 0
    %1996 = vmatpush2.bf16.msra.mxu0 0
    %1997 = vmatprep.subr.bf16.mxu0 0
    %1998 = vmatpush2.bf16.msra.mxu0 0
    %1999 = vmatprep.subr.bf16.mxu0 0
    %2000 = vmatpush2.bf16.msra.mxu0 0
    %2001 = vmatprep.mubr.bf16.mxu0 0
    %2002 = vmatmul.mubr.bf16.gmra.mxu0 %v93
    %v2003 = vpop.f32.mrf.mxu0
    %v2004 = vadd.f32 0.0, %v2003
    %v2005 = vpop.f32.mrf.mxu0
    %v2006 = vpop.f32.mrf.mxu0
    %v2007 = vadd.f32 0.0, %v2006
    %v2008 = vpop.f32.mrf.mxu0
    %2009 = vmatprep.mubr.bf16.mxu0 0
    %2010 = vmatmul.mubr.bf16.gmra.mxu0 %v96
    %v2011 = vpop.f32.mrf.mxu0
    %v2012 = vadd.f32 0.0, %v2011
    %v2013 = vpop.f32.mrf.mxu0
    %v2014 = vpop.f32.mrf.mxu0
    %v2015 = vadd.f32 0.0, %v2014
    %v2016 = vpop.f32.mrf.mxu0
    %2017 = vmatprep.mubr.bf16.mxu0 0
    %2018 = vmatmul.mubr.bf16.gmra.mxu0 %v99
    %v2019 = vpop.f32.mrf.mxu0
    %v2020 = vadd.f32 0.0, %v2019
    %v2021 = vpop.f32.mrf.mxu0
    %v2022 = vpop.f32.mrf.mxu0
    %v2023 = vadd.f32 0.0, %v2022
    %v2024 = vpop.f32.mrf.mxu0
    %2025 = vmatprep.mubr.bf16.mxu0 0
    %2026 = vmatmul.mubr.bf16.gmra.mxu0 %v102
    %v2027 = vpop.f32.mrf.mxu0
    %v2028 = vadd.f32 0.0, %v2027
    %v2029 = vpop.f32.mrf.mxu0
    %v2030 = vpop.f32.mrf.mxu0
    %v2031 = vadd.f32 0.0, %v2030
    %v2032 = vpop.f32.mrf.mxu0
    %2033 = vmatprep.mubr.bf16.mxu0 0
    %2034 = vmatmul.mubr.bf16.gmra.mxu0 %v105
    %v2035 = vpop.f32.mrf.mxu0
    %v2036 = vadd.f32 0.0, %v2035
    %v2037 = vpop.f32.mrf.mxu0
    %v2038 = vpop.f32.mrf.mxu0
    %v2039 = vadd.f32 0.0, %v2038
    %v2040 = vpop.f32.mrf.mxu0
    %2041 = vmatprep.mubr.bf16.mxu0 0
    %2042 = vmatmul.mubr.bf16.gmra.mxu0 %v108
    %v2043 = vpop.f32.mrf.mxu0
    %v2044 = vadd.f32 0.0, %v2043
    %v2045 = vpop.f32.mrf.mxu0
    %v2046 = vpop.f32.mrf.mxu0
    %v2047 = vadd.f32 0.0, %v2046
    %v2048 = vpop.f32.mrf.mxu0
    %2049 = vmatprep.mubr.bf16.mxu0 0
    %2050 = vmatmul.mubr.bf16.gmra.mxu0 %v111
    %v2051 = vpop.f32.mrf.mxu0
    %v2052 = vadd.f32 0.0, %v2051
    %v2053 = vpop.f32.mrf.mxu0
    %v2054 = vpop.f32.mrf.mxu0
    %v2055 = vadd.f32 0.0, %v2054
    %v2056 = vpop.f32.mrf.mxu0
    %2057 = vmatprep.mubr.bf16.mxu0 0
    %2058 = vmatmul.mubr.bf16.gmra.mxu0 %v114
    %v2059 = vpop.f32.mrf.mxu0
    %v2060 = vadd.f32 0.0, %v2059
    %v2061 = vpop.f32.mrf.mxu0
    %v2062 = vpop.f32.mrf.mxu0
    %v2063 = vadd.f32 0.0, %v2062
    %v2064 = vpop.f32.mrf.mxu0
    %2065 = vdwg.mxu0
    %2066 = vst [vmem:[#allocation4] sm:$0xff] %v2004
    %2067 = vst [vmem:[#allocation4 + $0x8] sm:$0xff] %v2007
    %2068 = vst [vmem:[#allocation4 + $0x10] sm:$0xff] %v2012
    %2069 = vst [vmem:[#allocation4 + $0x18] sm:$0xff] %v2015
    %2070 = vst [vmem:[#allocation4 + $0x20] sm:$0xff] %v2020
    %2071 = vst [vmem:[#allocation4 + $0x28] sm:$0xff] %v2023
    %2072 = vst [vmem:[#allocation4 + $0x30] sm:$0xff] %v2028
    %2073 = vst [vmem:[#allocation4 + $0x38] sm:$0xff] %v2031
    %2074 = vst [vmem:[#allocation4 + $0x40] sm:$0xff] %v2036
    %2075 = vst [vmem:[#allocation4 + $0x48] sm:$0xff] %v2039
    %2076 = vst [vmem:[#allocation4 + $0x50] sm:$0xff] %v2044
    %2077 = vst [vmem:[#allocation4 + $0x58] sm:$0xff] %v2047
    %2078 = vst [vmem:[#allocation4 + $0x60] sm:$0xff] %v2052
    %2079 = vst [vmem:[#allocation4 + $0x68] sm:$0xff] %v2055
    %2080 = vst [vmem:[#allocation4 + $0x70] sm:$0xff] %v2060
    %2081 = vst [vmem:[#allocation4 + $0x78] sm:$0xff] %v2063
    // Predicated region
    $region14: #{tpu_custom_call.1} parent=1 // pred_check
      _
    $region15: #{tpu_custom_call.1} parent=1 // pred_check_branch
      %2083 = sbr.rel (0) target = $region17
    $region16: #{tpu_custom_call.1} parent=1 // pred_region
      %s2085 = ssub.s32 16384, 16384
      %2086 = vsyncadd [#allocation3], %s2085
      %s2087 = sshll.u32 [#allocation2], 4
      %s2088 = int_to_ptr.vmem [resolvable:$true] %s2087
      %2093 = dma.vmem_to_hbm [thread:$0]  %s2088, 16384, %s3, [#allocation3], 1024, 1024, 64
    $region17: #{tpu_custom_call.1} parent=1 // pred_fallthru
      _
    // Predicated region
    $region18: #{tpu_custom_call.1} parent=1 // pred_check
      _
    $region19: #{tpu_custom_call.1} parent=1 // pred_check_branch
      %2095 = sbr.rel (0) target = $region21
    $region20: #{tpu_custom_call.1} parent=1 // pred_region
      %s2097 = ssub.s32 2048, 2048
      %2098 = vsyncadd [#allocation5], %s2097
      %s2099 = sshll.u32 [#allocation4], 4
      %s2100 = int_to_ptr.vmem [resolvable:$true] %s2099
      %2105 = dma.vmem_to_hbm [thread:$0]  %s2100, 2048, %s4, [#allocation5], 128, 128, 8
    $region21: #{tpu_custom_call.1} parent=1 // pred_fallthru
      _
    // Predicated region
    $region22: #{tpu_custom_call.1} parent=1 // pred_check
      _
    $region23: #{tpu_custom_call.1} parent=1 // pred_check_branch
      %2107 = sbr.rel (0) target = $region25
    $region24: #{tpu_custom_call.1} parent=1 // pred_region
      %2108 = dma.done [#allocation3], 16384
    $region25: #{tpu_custom_call.1} parent=1 // pred_fallthru
      _
    // Predicated region
    $region26: #{tpu_custom_call.1} parent=1 // pred_check
      _
    $region27: #{tpu_custom_call.1} parent=1 // pred_check_branch
      %2110 = sbr.rel (0) target = $region29
    $region28: #{tpu_custom_call.1} parent=1 // pred_region
      %2111 = dma.done [#allocation5], 2048
    $region29: #{tpu_custom_call.1} parent=1 // pred_fallthru
      _
    %2112 = vsyncpa [#allocation3], 1
    %2113 = vsyncpa [#allocation5], 1

</llo_original>
